<compile_context>
chip_gen: v7x
topology: tpu7x:2x2x1
jax: 0.10.0
libtpu: 0.0.40
codegen_flags: <defaults>
</compile_context>

<pallas_src>
import jax
import jax.numpy as jnp
from jax import lax
from jax.experimental import pallas as pl
from jax.experimental.pallas import tpu as pltpu

_LANE = 128
_BATCH_ALIGN = 16      # bf16 sublane tile height -> full, unmasked stores
_T_CHUNK = 16          # timesteps per recurrence grid step (static unroll)


def _round_up(x, m):
    return (x + m - 1) // m * m


def _pick_tile(total, candidates):
    for c in candidates:
        if total % c == 0:
            return c
    return total


def _pick_batch_tile(b_pad):
    """Batch rows per recurrence block: a multiple of 16 (full bf16 sublane
    tiles) and, when the batch is large enough, >= 2 blocks so the 'parallel'
    batch axis can be split across v7x's two TensorCores."""
    if b_pad <= 16:
        return b_pad
    start = (b_pad // 2) // 16 * 16
    for cand in range(start, 15, -16):
        if b_pad % cand == 0:
            return cand
    return b_pad


def _vmem_limit(block_bytes, scratch_bytes):
    """Scoped-VMEM budget: double-buffered pipeline blocks + scratch and
    intermediates, with margin. Floor 32 MiB (>= every generation's default,
    fixes v5e's 16 MiB default), capped at 128 MiB."""
    need = 2 * sum(block_bytes) + scratch_bytes
    need = int(need * 1.5) + (4 << 20)
    return int(min(128 * 1024 * 1024, max(need, 32 * 1024 * 1024)))


# ----------------------------------------------------------------------------
# Kernel 1: GRU recurrence (batch blocks parallel, time sequential)
# ----------------------------------------------------------------------------
def _gru_recurrence_kernel(emb_ref, w_ih_ref, w_hh_ref, b_gi_ref, b_hn_ref,
                           h_all_ref, h_state_ref):
    """
    emb_ref     : (T_CHUNK, B_tile, Ep)  bf16, time-major
    w_ih_ref    : (Ep, 3*Hp)             bf16  (r|z|n, per-gate lane padding)
    w_hh_ref    : (Hp, 3*Hp)             bf16
    b_gi_ref    : (1, 3*Hp)              f32   (b_ih with b_hr/b_hz folded in)
    b_hn_ref    : (1, Hp)                f32   (b_hn only, added inside r*)
    h_all_ref   : (T_CHUNK, B_tile, Hp)  bf16 out
    h_state_ref : (B_tile, Hp)           f32 scratch, carried across time steps
    """
    t_chunk, b_tile, hp = h_all_ref.shape
    ep = emb_ref.shape[-1]

    @pl.when(pl.program_id(1) == 0)          # time axis start -> reset carry
    def _():
        h_state_ref[...] = jnp.zeros_like(h_state_ref)

    # Hoisted input->gates matmul for the whole chunk (one big MXU matmul,
    # folded bias added once); only the h-dependent matmul stays in the loop.
    emb2 = emb_ref[...].reshape(t_chunk * b_tile, ep)
    gi = jnp.dot(emb2, w_ih_ref[...],
                 preferred_element_type=jnp.float32) + b_gi_ref[...]
    b_hn = b_hn_ref[...]

    h = h_state_ref[...]                      # f32 carry
    h_bf = h.astype(jnp.bfloat16)             # single bf16 cast per step,
    for k in range(t_chunk):                  # reused for matmul and store
        gh = jnp.dot(h_bf, w_hh_ref[...], preferred_element_type=jnp.float32)
        gi_k = gi[k * b_tile:(k + 1) * b_tile, :]          # (B_tile, 3Hp) f32
        r = jax.nn.sigmoid(gi_k[:, :hp] + gh[:, :hp])
        z = jax.nn.sigmoid(gi_k[:, hp:2 * hp] + gh[:, hp:2 * hp])
        n = jnp.tanh(gi_k[:, 2 * hp:] + r * (gh[:, 2 * hp:] + b_hn))
        h = n + z * (h - n)                   # == (1-z)*n + z*h, one less op
        h_bf = h.astype(jnp.bfloat16)
        h_all_ref[k] = h_bf
    h_state_ref[...] = h


# ----------------------------------------------------------------------------
# Kernel 2: output projection (tiled matmul + bias, fully parallel)
# ----------------------------------------------------------------------------
def _logits_projection_kernel(h_ref, w_ref, b_ref, out_ref):
    """
    h_ref   : (tm, Hp)  bf16
    w_ref   : (Hp, tn)  bf16
    b_ref   : (1, tn)   f32
    out_ref : (tm, tn)  f32
    """
    out_ref[...] = (jnp.dot(h_ref[...], w_ref[...],
                            preferred_element_type=jnp.float32)
                    + b_ref[...]).astype(out_ref.dtype)


# ----------------------------------------------------------------------------
# One-time parameter preparation (pad / transpose / cast / fold biases)
# ----------------------------------------------------------------------------
def prepare_params(params):
    emb = params["embedding"]                       # (V, E), pad row already 0
    V, E = emb.shape
    H = params["w_hh"].shape[1]
    Ep = _round_up(E, _LANE)
    Hp = _round_up(H, _LANE)
    Vp = _round_up(V, _LANE)

    emb_p = jnp.pad(emb, ((0, 0), (0, Ep - E))).astype(jnp.bfloat16)

    def prep_gate_weight(w, in_dim, in_pad):        # w: (3H, in_dim), r|z|n rows
        gates = []
        for g in range(3):
            blk = w[g * H:(g + 1) * H]              # (H, in_dim)
            blk = jnp.pad(blk, ((0, Hp - H), (0, in_pad - in_dim)))
            gates.append(blk.T)                     # (in_pad, Hp)
        return jnp.concatenate(gates, axis=1)       # (in_pad, 3*Hp)

    w_ih_p = prep_gate_weight(params["w_ih"], E, Ep).astype(jnp.bfloat16)
    w_hh_p = prep_gate_weight(params["w_hh"], H, Hp).astype(jnp.bfloat16)

    b_ih, b_hh = params["b_ih"], params["b_hh"]
    # Fold b_hr / b_hz into the input-side bias (they sit outside any product
    # with r); only b_hn must remain inside the r* multiply (PyTorch GRU).
    folded = [b_ih[0:H] + b_hh[0:H],
              b_ih[H:2 * H] + b_hh[H:2 * H],
              b_ih[2 * H:3 * H]]
    b_gi_p = jnp.concatenate([jnp.pad(g, (0, Hp - H)) for g in folded]) \
                .reshape(1, 3 * Hp).astype(jnp.float32)
    b_hn_p = jnp.pad(b_hh[2 * H:3 * H], (0, Hp - H)) \
                .reshape(1, Hp).astype(jnp.float32)

    w_out_p = jnp.pad(params["w_out"].T,
                      ((0, Hp - H), (0, Vp - V))).astype(jnp.bfloat16)
    b_out_p = jnp.pad(params["b_out"], (0, Vp - V)).reshape(1, Vp) \
                 .astype(jnp.float32)

    return {
        "embedding": emb_p, "w_ih": w_ih_p, "w_hh": w_hh_p,
        "b_gi": b_gi_p, "b_hn": b_hn_p, "w_out": w_out_p, "b_out": b_out_p,
        "meta": {"voc_size": V, "emb_size": E, "hid_size": H,
                 "Ep": Ep, "Hp": Hp, "Vp": Vp},
    }


# ----------------------------------------------------------------------------
# Forward wrapper
# ----------------------------------------------------------------------------
def decoder_forward(batch, h, prepared):
    """batch: (B, T) int32 token ids; h: accepted but unused (matches PyTorch:
    nn.GRU is called without an initial hidden state)."""
    del h
    meta = prepared["meta"]
    Ep, Hp, Vp = meta["Ep"], meta["Hp"], meta["Vp"]
    V = meta["voc_size"]

    B, T = batch.shape
    B_pad = _round_up(B, _BATCH_ALIGN)               # multiple of 16 (bf16 tiles)
    T_pad = _round_up(T, _T_CHUNK)
    B_tile = _pick_batch_tile(B_pad)
    n_bblk = B_pad // B_tile
    n_chunks = T_pad // _T_CHUNK

    # Pad tokens; padded rows/steps are appended, so they never influence the
    # real outputs and are sliced away at the end.
    batch_p = jnp.pad(batch.astype(jnp.int32), ((0, B_pad - B), (0, T_pad - T)))

    # TODO(synk): embedding gather stays in plain XLA (data-dependent gather is
    # glue, not the hot path). Gathering via batch_p.T yields the time-major
    # (T, B, E) layout directly, so no separate transpose pass is needed.
    emb_tbe = prepared["embedding"][batch_p.T]       # (T_pad, B_pad, Ep) bf16

    # ---- GRU recurrence -----------------------------------------------------
    rec_blocks = [
        _T_CHUNK * B_tile * Ep * 2,                  # emb chunk (bf16)
        Ep * 3 * Hp * 2,                             # w_ih
        Hp * 3 * Hp * 2,                             # w_hh
        3 * Hp * 4,                                  # b_gi
        Hp * 4,                                      # b_hn
        _T_CHUNK * B_tile * Hp * 2,                  # h_all chunk out
    ]
    rec_scratch = B_tile * Hp * 4 + _T_CHUNK * B_tile * 3 * Hp * 4  # carry + gi
    gru_flops = (2 * T_pad * B_pad * (Ep + Hp) * 3 * Hp
                 + 12 * T_pad * B_pad * Hp)
    gru_trans = 3 * T_pad * B_pad * Hp
    gru_bytes = (T_pad * B_pad * (Ep + Hp) * 2
                 + n_bblk * (Ep + Hp) * 3 * Hp * 2 + n_bblk * 4 * Hp * 4)

    h_all = pl.pallas_call(
        _gru_recurrence_kernel,
        out_shape=jax.ShapeDtypeStruct((T_pad, B_pad, Hp), jnp.bfloat16),
        grid_spec=pltpu.PrefetchScalarGridSpec(
            num_scalar_prefetch=0,
            grid=(n_bblk, n_chunks),                 # batch parallel, time serial
            in_specs=[
                pl.BlockSpec((_T_CHUNK, B_tile, Ep), lambda b, t: (t, b, 0)),
                pl.BlockSpec((Ep, 3 * Hp), lambda b, t: (0, 0)),
                pl.BlockSpec((Hp, 3 * Hp), lambda b, t: (0, 0)),
                pl.BlockSpec((1, 3 * Hp), lambda b, t: (0, 0)),
                pl.BlockSpec((1, Hp), lambda b, t: (0, 0)),
            ],
            out_specs=pl.BlockSpec((_T_CHUNK, B_tile, Hp),
                                   lambda b, t: (t, b, 0)),
            scratch_shapes=[pltpu.VMEM((B_tile, Hp), jnp.float32)],
        ),
        compiler_params=pltpu.CompilerParams(
            dimension_semantics=("parallel", "arbitrary"),
            vmem_limit_bytes=_vmem_limit(rec_blocks, rec_scratch)),
        cost_estimate=pl.CostEstimate(
            flops=int(gru_flops), transcendentals=int(gru_trans),
            bytes_accessed=int(gru_bytes)),
    )(emb_tbe, prepared["w_ih"], prepared["w_hh"],
      prepared["b_gi"], prepared["b_hn"])

    # Re-layout h (T,B,H) -> (B,T,H) once on the *small* H-wide tensor so the
    # projection writes logits directly in (B,T,V) order.
    # TODO(synk): could be folded into kernel 2 via a 3-D BlockSpec; kept in
    # XLA since it is ~V/H cheaper than any logits-sized pass.
    h_bt = jnp.transpose(h_all, (1, 0, 2)).reshape(B_pad * T_pad, Hp)

    # ---- Output projection: tiled, fully parallel matmul --------------------
    # M_pad is always a multiple of 256 (B_pad, T_pad multiples of 16), so
    # tm >= 256 and w_out is re-streamed at most M_pad/tm times (once when
    # M_pad <= tm) — this is the dominant HBM stream on v5e/v6e.
    M_pad = B_pad * T_pad
    tm = _pick_tile(M_pad, (512, 256, 128, 64, 32, 16))
    tn = _pick_tile(Vp, (512, 256, 128))
    proj_blocks = [tm * Hp * 2, Hp * tn * 2, tn * 4, tm * tn * 4]
    proj_flops = 2 * M_pad * Hp * Vp
    proj_bytes = (M_pad * Hp * 2 + (M_pad // tm) * Hp * Vp * 2
                  + M_pad * Vp * 4 + Vp * 4)

    logits_2d = pl.pallas_call(
        _logits_projection_kernel,
        out_shape=jax.ShapeDtypeStruct((M_pad, Vp), jnp.float32),
        grid_spec=pltpu.PrefetchScalarGridSpec(
            num_scalar_prefetch=0,
            grid=(M_pad // tm, Vp // tn),
            in_specs=[
                pl.BlockSpec((tm, Hp), lambda i, j: (i, 0)),
                pl.BlockSpec((Hp, tn), lambda i, j: (0, j)),
                pl.BlockSpec((1, tn), lambda i, j: (0, j)),
            ],
            out_specs=pl.BlockSpec((tm, tn), lambda i, j: (i, j)),
        ),
        compiler_params=pltpu.CompilerParams(
            dimension_semantics=("parallel", "parallel"),
            vmem_limit_bytes=_vmem_limit(proj_blocks, 0)),
        cost_estimate=pl.CostEstimate(
            flops=int(proj_flops), transcendentals=0,
            bytes_accessed=int(proj_bytes)),
    )(h_bt, prepared["w_out"], prepared["b_out"])

    logits = logits_2d.reshape(B_pad, T_pad, Vp)
    return logits[:B, :T, :V]                        # (B, T, V)


# ----------------------------------------------------------------------------
# Pure-JAX f32 reference (PyTorch GRU semantics) and init
# ----------------------------------------------------------------------------
def decoder_forward_ref(batch, h, params):
    del h
    emb = params["embedding"][batch]                 # (B, T, E)
    w_ih, w_hh = params["w_ih"], params["w_hh"]
    b_ih, b_hh = params["b_ih"], params["b_hh"]
    H = w_hh.shape[1]
    B = batch.shape[0]

    def step(h_prev, x_t):
        gi = x_t @ w_ih.T + b_ih
        gh = h_prev @ w_hh.T + b_hh
        r = jax.nn.sigmoid(gi[:, :H] + gh[:, :H])
        z = jax.nn.sigmoid(gi[:, H:2 * H] + gh[:, H:2 * H])
        n = jnp.tanh(gi[:, 2 * H:] + r * gh[:, 2 * H:])
        h_new = (1.0 - z) * n + z * h_prev
        return h_new, h_new

    h0 = jnp.zeros((B, H), jnp.float32)
    _, outs = lax.scan(step, h0, jnp.transpose(emb, (1, 0, 2)))
    outs = jnp.transpose(outs, (1, 0, 2))            # (B, T, H)
    return outs @ params["w_out"].T + params["b_out"]


def init_params(key, voc_size, emb_size, hid_size, padding_idx):
    ks = jax.random.split(key, 7)
    s_ih = 1.0 / jnp.sqrt(hid_size)
    emb = jax.random.normal(ks[0], (voc_size, emb_size), jnp.float32) * 0.1
    emb = emb.at[padding_idx].set(0.0)               # padding_idx row = 0
    return {
        "embedding": emb,
        "w_ih": jax.random.uniform(ks[1], (3 * hid_size, emb_size),
                                   jnp.float32, -s_ih, s_ih),
        "w_hh": jax.random.uniform(ks[2], (3 * hid_size, hid_size),
                                   jnp.float32, -s_ih, s_ih),
        "b_ih": jax.random.uniform(ks[3], (3 * hid_size,),
                                   jnp.float32, -s_ih, s_ih),
        "b_hh": jax.random.uniform(ks[4], (3 * hid_size,),
                                   jnp.float32, -s_ih, s_ih),
        "w_out": jax.random.uniform(ks[5], (voc_size, hid_size),
                                    jnp.float32, -s_ih, s_ih),
        "b_out": jax.random.uniform(ks[6], (voc_size,),
                                    jnp.float32, -s_ih, s_ih),
    }


if __name__ == "__main__":
    VOC, EMB, HID, PAD = 64, 32, 32, 0
    B, T = 2, 8

    key = jax.random.PRNGKey(0)
    k_par, k_tok, k_h = jax.random.split(key, 3)

    params = init_params(k_par, VOC, EMB, HID, PAD)
    prepared = prepare_params(params)                # one-time weight prep
    tokens = jax.random.randint(k_tok, (B, T), 0, VOC, dtype=jnp.int32)
    h_unused = jax.random.normal(k_h, (1, B, HID), jnp.float32)

    logits = decoder_forward(tokens, h_unused, prepared)
    jax.block_until_ready(logits)

    ref = decoder_forward_ref(tokens, h_unused, params)
    assert logits.shape == (B, T, VOC)
    max_err = float(jnp.max(jnp.abs(logits - ref)))
    # bf16 MXU operands -> relaxed tolerance vs. the f32 reference.
    assert jnp.allclose(logits, ref, atol=2e-2, rtol=2e-2), \
        f"max abs err {max_err}"

    print("KERNEL_OK")
</pallas_src>

<mosaic_0001>
module attributes {stable_mosaic.version = 11 : i64} {
  func.func @_gru_recurrence_kernel(%arg0: i32, %arg1: i32, %arg2: memref<16x16x128xbf16, #tpu.memory_space<vmem>>, %arg3: memref<128x384xbf16, #tpu.memory_space<vmem>>, %arg4: memref<128x384xbf16, #tpu.memory_space<vmem>>, %arg5: memref<1x384xf32, #tpu.memory_space<vmem>>, %arg6: memref<1x128xf32, #tpu.memory_space<vmem>>, %arg7: memref<16x16x128xbf16, #tpu.memory_space<vmem>>, %arg8: memref<16x128xf32, #tpu.memory_space<vmem>>) attributes {dimension_semantics = [#tpu.dimension_semantics<parallel>, #tpu.dimension_semantics<arbitrary>], iteration_bounds = array<i64: 1, 1>, scalar_prefetch = 0 : i64, scratch_operands = 1 : i64, tpu.core_type = #tpu.core_type<tc>, window_params = [{transform_indices = @transform_0, window_bounds = array<i64: 16, 16, 128>}, {pipeline_mode = #tpu.pipeline_mode<synchronous>, transform_indices = @transform_1, window_bounds = array<i64: 128, 384>}, {pipeline_mode = #tpu.pipeline_mode<synchronous>, transform_indices = @transform_2, window_bounds = array<i64: 128, 384>}, {pipeline_mode = #tpu.pipeline_mode<synchronous>, transform_indices = @transform_3, window_bounds = array<i64: 1, 384>}, {pipeline_mode = #tpu.pipeline_mode<synchronous>, transform_indices = @transform_4, window_bounds = array<i64: 1, 128>}, {transform_indices = @transform_5, window_bounds = array<i64: 16, 16, 128>}]} {
    %c0_i32 = arith.constant 0 : i32
    %0 = arith.cmpi eq, %arg1, %c0_i32 : i32
    %1 = arith.extui %0 : i1 to i32
    %c0_i32_0 = arith.constant 0 : i32
    %2 = arith.cmpi ne, %1, %c0_i32_0 : i32
    scf.if %2 {
      %cst_126 = arith.constant 0.000000e+00 : f32
      %542 = vector.broadcast %cst_126 : f32 to vector<16x128xf32>
      %c0_127 = arith.constant 0 : index
      %c0_128 = arith.constant 0 : index
      %543 = vector.load %arg8[%c0_127, %c0_128] : memref<16x128xf32, #tpu.memory_space<vmem>>, vector<16x128xf32>
      tpu.vector_store %arg8[%c0_127, %c0_128], %542 {strides = array<i32>} : memref<16x128xf32, #tpu.memory_space<vmem>>, vector<16x128xf32>,
    } else {
    }
    %c0 = arith.constant 0 : index
    %c0_1 = arith.constant 0 : index
    %c0_2 = arith.constant 0 : index
    %3 = vector.load %arg2[%c0, %c0_1, %c0_2] : memref<16x16x128xbf16, #tpu.memory_space<vmem>>, vector<16x16x128xbf16>
    %4 = vector.shape_cast %3 : vector<16x16x128xbf16> to vector<256x128xbf16>
    %c0_3 = arith.constant 0 : index
    %c0_4 = arith.constant 0 : index
    %5 = vector.load %arg3[%c0_3, %c0_4] : memref<128x384xbf16, #tpu.memory_space<vmem>>, vector<128x384xbf16>
    %cst = arith.constant dense<0.000000e+00> : vector<256x384xf32>
    %6 = tpu.matmul %4, %5, %cst {dimension_numbers = #tpu.dot_dimension_numbers<[1], [0], [0], [1], [0, 0, 1, 1], [], []>} : vector<256x128xbf16>, vector<128x384xbf16>, vector<256x384xf32> -> vector<256x384xf32>
    %c0_5 = arith.constant 0 : index
    %c0_6 = arith.constant 0 : index
    %7 = vector.load %arg5[%c0_5, %c0_6] : memref<1x384xf32, #tpu.memory_space<vmem>>, vector<1x384xf32>
    %8 = vector.broadcast %7 : vector<1x384xf32> to vector<256x384xf32>
    %9 = arith.addf %6, %8 : vector<256x384xf32>
    %c0_7 = arith.constant 0 : index
    %c0_8 = arith.constant 0 : index
    %10 = vector.load %arg6[%c0_7, %c0_8] : memref<1x128xf32, #tpu.memory_space<vmem>>, vector<1x128xf32>
    %c0_9 = arith.constant 0 : index
    %c0_10 = arith.constant 0 : index
    %11 = vector.load %arg8[%c0_9, %c0_10] : memref<16x128xf32, #tpu.memory_space<vmem>>, vector<16x128xf32>
    %12 = arith.truncf %11 : vector<16x128xf32> to vector<16x128xbf16>
    %c0_11 = arith.constant 0 : index
    %c0_12 = arith.constant 0 : index
    %13 = vector.load %arg4[%c0_11, %c0_12] : memref<128x384xbf16, #tpu.memory_space<vmem>>, vector<128x384xbf16>
    %cst_13 = arith.constant dense<0.000000e+00> : vector<16x384xf32>
    %14 = tpu.matmul %12, %13, %cst_13 {dimension_numbers = #tpu.dot_dimension_numbers<[1], [0], [0], [1], [0, 0, 1, 1], [], []>} : vector<16x128xbf16>, vector<128x384xbf16>, vector<16x384xf32> -> vector<16x384xf32>
    %15 = vector.extract_strided_slice %9 {offsets = [0, 0], sizes = [16, 384], strides = [1, 1]} : vector<256x384xf32> to vector<16x384xf32>
    %16 = vector.extract_strided_slice %15 {offsets = [0, 0], sizes = [16, 128], strides = [1, 1]} : vector<16x384xf32> to vector<16x128xf32>
    %17 = vector.extract_strided_slice %14 {offsets = [0, 0], sizes = [16, 128], strides = [1, 1]} : vector<16x384xf32> to vector<16x128xf32>
    %18 = arith.addf %16, %17 : vector<16x128xf32>
    %19 = arith.negf %18 : vector<16x128xf32>
    %20 = math.exp %19 : vector<16x128xf32>
    %cst_14 = arith.constant 1.000000e+00 : f32
    %21 = vector.broadcast %cst_14 : f32 to vector<16x128xf32>
    %22 = arith.addf %21, %20 : vector<16x128xf32>
    %23 = arith.divf %21, %22 : vector<16x128xf32>
    %24 = vector.extract_strided_slice %15 {offsets = [0, 128], sizes = [16, 128], strides = [1, 1]} : vector<16x384xf32> to vector<16x128xf32>
    %25 = vector.extract_strided_slice %14 {offsets = [0, 128], sizes = [16, 128], strides = [1, 1]} : vector<16x384xf32> to vector<16x128xf32>
    %26 = arith.addf %24, %25 : vector<16x128xf32>
    %27 = arith.negf %26 : vector<16x128xf32>
    %28 = math.exp %27 : vector<16x128xf32>
    %cst_15 = arith.constant 1.000000e+00 : f32
    %29 = vector.broadcast %cst_15 : f32 to vector<16x128xf32>
    %30 = arith.addf %29, %28 : vector<16x128xf32>
    %31 = arith.divf %29, %30 : vector<16x128xf32>
    %32 = vector.extract_strided_slice %15 {offsets = [0, 256], sizes = [16, 128], strides = [1, 1]} : vector<16x384xf32> to vector<16x128xf32>
    %33 = vector.extract_strided_slice %14 {offsets = [0, 256], sizes = [16, 128], strides = [1, 1]} : vector<16x384xf32> to vector<16x128xf32>
    %34 = vector.broadcast %10 : vector<1x128xf32> to vector<16x128xf32>
    %35 = arith.addf %33, %34 : vector<16x128xf32>
    %36 = arith.mulf %23, %35 : vector<16x128xf32>
    %37 = arith.addf %32, %36 : vector<16x128xf32>
    %38 = math.tanh %37 : vector<16x128xf32>
    %39 = arith.subf %11, %38 : vector<16x128xf32>
    %40 = arith.mulf %31, %39 : vector<16x128xf32>
    %41 = arith.addf %38, %40 : vector<16x128xf32>
    %42 = arith.truncf %41 : vector<16x128xf32> to vector<16x128xbf16>
    %c0_16 = arith.constant 0 : index
    %c0_17 = arith.constant 0 : index
    %c0_18 = arith.constant 0 : index
    %43 = vector.load %arg7[%c0_16, %c0_17, %c0_18] : memref<16x16x128xbf16, #tpu.memory_space<vmem>>, vector<1x16x128xbf16>
    %44 = vector.shape_cast %43 : vector<1x16x128xbf16> to vector<16x128xbf16>
    %45 = vector.shape_cast %42 : vector<16x128xbf16> to vector<1x16x128xbf16>
    tpu.vector_store %arg7[%c0_16, %c0_17, %c0_18], %45 {strides = array<i32>} : memref<16x16x128xbf16, #tpu.memory_space<vmem>>, vector<1x16x128xbf16>,
    %c0_19 = arith.constant 0 : index
    %c0_20 = arith.constant 0 : index
    %46 = vector.load %arg4[%c0_19, %c0_20] : memref<128x384xbf16, #tpu.memory_space<vmem>>, vector<128x384xbf16>
    %cst_21 = arith.constant dense<0.000000e+00> : vector<16x384xf32>
    %47 = tpu.matmul %42, %46, %cst_21 {dimension_numbers = #tpu.dot_dimension_numbers<[1], [0], [0], [1], [0, 0, 1, 1], [], []>} : vector<16x128xbf16>, vector<128x384xbf16>, vector<16x384xf32> -> vector<16x384xf32>
    %48 = vector.extract_strided_slice %9 {offsets = [16, 0], sizes = [16, 384], strides = [1, 1]} : vector<256x384xf32> to vector<16x384xf32>
    %49 = vector.extract_strided_slice %48 {offsets = [0, 0], sizes = [16, 128], strides = [1, 1]} : vector<16x384xf32> to vector<16x128xf32>
    %50 = vector.extract_strided_slice %47 {offsets = [0, 0], sizes = [16, 128], strides = [1, 1]} : vector<16x384xf32> to vector<16x128xf32>
    %51 = arith.addf %49, %50 : vector<16x128xf32>
    %52 = arith.negf %51 : vector<16x128xf32>
    %53 = math.exp %52 : vector<16x128xf32>
    %cst_22 = arith.constant 1.000000e+00 : f32
    %54 = vector.broadcast %cst_22 : f32 to vector<16x128xf32>
    %55 = arith.addf %54, %53 : vector<16x128xf32>
    %56 = arith.divf %54, %55 : vector<16x128xf32>
    %57 = vector.extract_strided_slice %48 {offsets = [0, 128], sizes = [16, 128], strides = [1, 1]} : vector<16x384xf32> to vector<16x128xf32>
    %58 = vector.extract_strided_slice %47 {offsets = [0, 128], sizes = [16, 128], strides = [1, 1]} : vector<16x384xf32> to vector<16x128xf32>
    %59 = arith.addf %57, %58 : vector<16x128xf32>
    %60 = arith.negf %59 : vector<16x128xf32>
    %61 = math.exp %60 : vector<16x128xf32>
    %cst_23 = arith.constant 1.000000e+00 : f32
    %62 = vector.broadcast %cst_23 : f32 to vector<16x128xf32>
    %63 = arith.addf %62, %61 : vector<16x128xf32>
    %64 = arith.divf %62, %63 : vector<16x128xf32>
    %65 = vector.extract_strided_slice %48 {offsets = [0, 256], sizes = [16, 128], strides = [1, 1]} : vector<16x384xf32> to vector<16x128xf32>
    %66 = vector.extract_strided_slice %47 {offsets = [0, 256], sizes = [16, 128], strides = [1, 1]} : vector<16x384xf32> to vector<16x128xf32>
    %67 = vector.broadcast %10 : vector<1x128xf32> to vector<16x128xf32>
    %68 = arith.addf %66, %67 : vector<16x128xf32>
    %69 = arith.mulf %56, %68 : vector<16x128xf32>
    %70 = arith.addf %65, %69 : vector<16x128xf32>
    %71 = math.tanh %70 : vector<16x128xf32>
    %72 = arith.subf %41, %71 : vector<16x128xf32>
    %73 = arith.mulf %64, %72 : vector<16x128xf32>
    %74 = arith.addf %71, %73 : vector<16x128xf32>
    %75 = arith.truncf %74 : vector<16x128xf32> to vector<16x128xbf16>
    %c1 = arith.constant 1 : index
    %c0_24 = arith.constant 0 : index
    %c0_25 = arith.constant 0 : index
    %76 = vector.load %arg7[%c1, %c0_24, %c0_25] : memref<16x16x128xbf16, #tpu.memory_space<vmem>>, vector<1x16x128xbf16>
    %77 = vector.shape_cast %76 : vector<1x16x128xbf16> to vector<16x128xbf16>
    %78 = vector.shape_cast %75 : vector<16x128xbf16> to vector<1x16x128xbf16>
    tpu.vector_store %arg7[%c1, %c0_24, %c0_25], %78 {strides = array<i32>} : memref<16x16x128xbf16, #tpu.memory_space<vmem>>, vector<1x16x128xbf16>,
    %c0_26 = arith.constant 0 : index
    %c0_27 = arith.constant 0 : index
    %79 = vector.load %arg4[%c0_26, %c0_27] : memref<128x384xbf16, #tpu.memory_space<vmem>>, vector<128x384xbf16>
    %cst_28 = arith.constant dense<0.000000e+00> : vector<16x384xf32>
    %80 = tpu.matmul %75, %79, %cst_28 {dimension_numbers = #tpu.dot_dimension_numbers<[1], [0], [0], [1], [0, 0, 1, 1], [], []>} : vector<16x128xbf16>, vector<128x384xbf16>, vector<16x384xf32> -> vector<16x384xf32>
    %81 = vector.extract_strided_slice %9 {offsets = [32, 0], sizes = [16, 384], strides = [1, 1]} : vector<256x384xf32> to vector<16x384xf32>
    %82 = vector.extract_strided_slice %81 {offsets = [0, 0], sizes = [16, 128], strides = [1, 1]} : vector<16x384xf32> to vector<16x128xf32>
    %83 = vector.extract_strided_slice %80 {offsets = [0, 0], sizes = [16, 128], strides = [1, 1]} : vector<16x384xf32> to vector<16x128xf32>
    %84 = arith.addf %82, %83 : vector<16x128xf32>
    %85 = arith.negf %84 : vector<16x128xf32>
    %86 = math.exp %85 : vector<16x128xf32>
    %cst_29 = arith.constant 1.000000e+00 : f32
    %87 = vector.broadcast %cst_29 : f32 to vector<16x128xf32>
    %88 = arith.addf %87, %86 : vector<16x128xf32>
    %89 = arith.divf %87, %88 : vector<16x128xf32>
    %90 = vector.extract_strided_slice %81 {offsets = [0, 128], sizes = [16, 128], strides = [1, 1]} : vector<16x384xf32> to vector<16x128xf32>
    %91 = vector.extract_strided_slice %80 {offsets = [0, 128], sizes = [16, 128], strides = [1, 1]} : vector<16x384xf32> to vector<16x128xf32>
    %92 = arith.addf %90, %91 : vector<16x128xf32>
    %93 = arith.negf %92 : vector<16x128xf32>
    %94 = math.exp %93 : vector<16x128xf32>
    %cst_30 = arith.constant 1.000000e+00 : f32
    %95 = vector.broadcast %cst_30 : f32 to vector<16x128xf32>
    %96 = arith.addf %95, %94 : vector<16x128xf32>
    %97 = arith.divf %95, %96 : vector<16x128xf32>
    %98 = vector.extract_strided_slice %81 {offsets = [0, 256], sizes = [16, 128], strides = [1, 1]} : vector<16x384xf32> to vector<16x128xf32>
    %99 = vector.extract_strided_slice %80 {offsets = [0, 256], sizes = [16, 128], strides = [1, 1]} : vector<16x384xf32> to vector<16x128xf32>
    %100 = vector.broadcast %10 : vector<1x128xf32> to vector<16x128xf32>
    %101 = arith.addf %99, %100 : vector<16x128xf32>
    %102 = arith.mulf %89, %101 : vector<16x128xf32>
    %103 = arith.addf %98, %102 : vector<16x128xf32>
    %104 = math.tanh %103 : vector<16x128xf32>
    %105 = arith.subf %74, %104 : vector<16x128xf32>
    %106 = arith.mulf %97, %105 : vector<16x128xf32>
    %107 = arith.addf %104, %106 : vector<16x128xf32>
    %108 = arith.truncf %107 : vector<16x128xf32> to vector<16x128xbf16>
    %c2 = arith.constant 2 : index
    %c0_31 = arith.constant 0 : index
    %c0_32 = arith.constant 0 : index
    %109 = vector.load %arg7[%c2, %c0_31, %c0_32] : memref<16x16x128xbf16, #tpu.memory_space<vmem>>, vector<1x16x128xbf16>
    %110 = vector.shape_cast %109 : vector<1x16x128xbf16> to vector<16x128xbf16>
    %111 = vector.shape_cast %108 : vector<16x128xbf16> to vector<1x16x128xbf16>
    tpu.vector_store %arg7[%c2, %c0_31, %c0_32], %111 {strides = array<i32>} : memref<16x16x128xbf16, #tpu.memory_space<vmem>>, vector<1x16x128xbf16>,
    %c0_33 = arith.constant 0 : index
    %c0_34 = arith.constant 0 : index
    %112 = vector.load %arg4[%c0_33, %c0_34] : memref<128x384xbf16, #tpu.memory_space<vmem>>, vector<128x384xbf16>
    %cst_35 = arith.constant dense<0.000000e+00> : vector<16x384xf32>
    %113 = tpu.matmul %108, %112, %cst_35 {dimension_numbers = #tpu.dot_dimension_numbers<[1], [0], [0], [1], [0, 0, 1, 1], [], []>} : vector<16x128xbf16>, vector<128x384xbf16>, vector<16x384xf32> -> vector<16x384xf32>
    %114 = vector.extract_strided_slice %9 {offsets = [48, 0], sizes = [16, 384], strides = [1, 1]} : vector<256x384xf32> to vector<16x384xf32>
    %115 = vector.extract_strided_slice %114 {offsets = [0, 0], sizes = [16, 128], strides = [1, 1]} : vector<16x384xf32> to vector<16x128xf32>
    %116 = vector.extract_strided_slice %113 {offsets = [0, 0], sizes = [16, 128], strides = [1, 1]} : vector<16x384xf32> to vector<16x128xf32>
    %117 = arith.addf %115, %116 : vector<16x128xf32>
    %118 = arith.negf %117 : vector<16x128xf32>
    %119 = math.exp %118 : vector<16x128xf32>
    %cst_36 = arith.constant 1.000000e+00 : f32
    %120 = vector.broadcast %cst_36 : f32 to vector<16x128xf32>
    %121 = arith.addf %120, %119 : vector<16x128xf32>
    %122 = arith.divf %120, %121 : vector<16x128xf32>
    %123 = vector.extract_strided_slice %114 {offsets = [0, 128], sizes = [16, 128], strides = [1, 1]} : vector<16x384xf32> to vector<16x128xf32>
    %124 = vector.extract_strided_slice %113 {offsets = [0, 128], sizes = [16, 128], strides = [1, 1]} : vector<16x384xf32> to vector<16x128xf32>
    %125 = arith.addf %123, %124 : vector<16x128xf32>
    %126 = arith.negf %125 : vector<16x128xf32>
    %127 = math.exp %126 : vector<16x128xf32>
    %cst_37 = arith.constant 1.000000e+00 : f32
    %128 = vector.broadcast %cst_37 : f32 to vector<16x128xf32>
    %129 = arith.addf %128, %127 : vector<16x128xf32>
    %130 = arith.divf %128, %129 : vector<16x128xf32>
    %131 = vector.extract_strided_slice %114 {offsets = [0, 256], sizes = [16, 128], strides = [1, 1]} : vector<16x384xf32> to vector<16x128xf32>
    %132 = vector.extract_strided_slice %113 {offsets = [0, 256], sizes = [16, 128], strides = [1, 1]} : vector<16x384xf32> to vector<16x128xf32>
    %133 = vector.broadcast %10 : vector<1x128xf32> to vector<16x128xf32>
    %134 = arith.addf %132, %133 : vector<16x128xf32>
    %135 = arith.mulf %122, %134 : vector<16x128xf32>
    %136 = arith.addf %131, %135 : vector<16x128xf32>
    %137 = math.tanh %136 : vector<16x128xf32>
    %138 = arith.subf %107, %137 : vector<16x128xf32>
    %139 = arith.mulf %130, %138 : vector<16x128xf32>
    %140 = arith.addf %137, %139 : vector<16x128xf32>
    %141 = arith.truncf %140 : vector<16x128xf32> to vector<16x128xbf16>
    %c3 = arith.constant 3 : index
    %c0_38 = arith.constant 0 : index
    %c0_39 = arith.constant 0 : index
    %142 = vector.load %arg7[%c3, %c0_38, %c0_39] : memref<16x16x128xbf16, #tpu.memory_space<vmem>>, vector<1x16x128xbf16>
    %143 = vector.shape_cast %142 : vector<1x16x128xbf16> to vector<16x128xbf16>
    %144 = vector.shape_cast %141 : vector<16x128xbf16> to vector<1x16x128xbf16>
    tpu.vector_store %arg7[%c3, %c0_38, %c0_39], %144 {strides = array<i32>} : memref<16x16x128xbf16, #tpu.memory_space<vmem>>, vector<1x16x128xbf16>,
    %c0_40 = arith.constant 0 : index
    %c0_41 = arith.constant 0 : index
    %145 = vector.load %arg4[%c0_40, %c0_41] : memref<128x384xbf16, #tpu.memory_space<vmem>>, vector<128x384xbf16>
    %cst_42 = arith.constant dense<0.000000e+00> : vector<16x384xf32>
    %146 = tpu.matmul %141, %145, %cst_42 {dimension_numbers = #tpu.dot_dimension_numbers<[1], [0], [0], [1], [0, 0, 1, 1], [], []>} : vector<16x128xbf16>, vector<128x384xbf16>, vector<16x384xf32> -> vector<16x384xf32>
    %147 = vector.extract_strided_slice %9 {offsets = [64, 0], sizes = [16, 384], strides = [1, 1]} : vector<256x384xf32> to vector<16x384xf32>
    %148 = vector.extract_strided_slice %147 {offsets = [0, 0], sizes = [16, 128], strides = [1, 1]} : vector<16x384xf32> to vector<16x128xf32>
    %149 = vector.extract_strided_slice %146 {offsets = [0, 0], sizes = [16, 128], strides = [1, 1]} : vector<16x384xf32> to vector<16x128xf32>
    %150 = arith.addf %148, %149 : vector<16x128xf32>
    %151 = arith.negf %150 : vector<16x128xf32>
    %152 = math.exp %151 : vector<16x128xf32>
    %cst_43 = arith.constant 1.000000e+00 : f32
    %153 = vector.broadcast %cst_43 : f32 to vector<16x128xf32>
    %154 = arith.addf %153, %152 : vector<16x128xf32>
    %155 = arith.divf %153, %154 : vector<16x128xf32>
    %156 = vector.extract_strided_slice %147 {offsets = [0, 128], sizes = [16, 128], strides = [1, 1]} : vector<16x384xf32> to vector<16x128xf32>
    %157 = vector.extract_strided_slice %146 {offsets = [0, 128], sizes = [16, 128], strides = [1, 1]} : vector<16x384xf32> to vector<16x128xf32>
    %158 = arith.addf %156, %157 : vector<16x128xf32>
    %159 = arith.negf %158 : vector<16x128xf32>
    %160 = math.exp %159 : vector<16x128xf32>
    %cst_44 = arith.constant 1.000000e+00 : f32
    %161 = vector.broadcast %cst_44 : f32 to vector<16x128xf32>
    %162 = arith.addf %161, %160 : vector<16x128xf32>
    %163 = arith.divf %161, %162 : vector<16x128xf32>
    %164 = vector.extract_strided_slice %147 {offsets = [0, 256], sizes = [16, 128], strides = [1, 1]} : vector<16x384xf32> to vector<16x128xf32>
    %165 = vector.extract_strided_slice %146 {offsets = [0, 256], sizes = [16, 128], strides = [1, 1]} : vector<16x384xf32> to vector<16x128xf32>
    %166 = vector.broadcast %10 : vector<1x128xf32> to vector<16x128xf32>
    %167 = arith.addf %165, %166 : vector<16x128xf32>
    %168 = arith.mulf %155, %167 : vector<16x128xf32>
    %169 = arith.addf %164, %168 : vector<16x128xf32>
    %170 = math.tanh %169 : vector<16x128xf32>
    %171 = arith.subf %140, %170 : vector<16x128xf32>
    %172 = arith.mulf %163, %171 : vector<16x128xf32>
    %173 = arith.addf %170, %172 : vector<16x128xf32>
    %174 = arith.truncf %173 : vector<16x128xf32> to vector<16x128xbf16>
    %c4 = arith.constant 4 : index
    %c0_45 = arith.constant 0 : index
    %c0_46 = arith.constant 0 : index
    %175 = vector.load %arg7[%c4, %c0_45, %c0_46] : memref<16x16x128xbf16, #tpu.memory_space<vmem>>, vector<1x16x128xbf16>
    %176 = vector.shape_cast %175 : vector<1x16x128xbf16> to vector<16x128xbf16>
    %177 = vector.shape_cast %174 : vector<16x128xbf16> to vector<1x16x128xbf16>
    tpu.vector_store %arg7[%c4, %c0_45, %c0_46], %177 {strides = array<i32>} : memref<16x16x128xbf16, #tpu.memory_space<vmem>>, vector<1x16x128xbf16>,
    %c0_47 = arith.constant 0 : index
    %c0_48 = arith.constant 0 : index
    %178 = vector.load %arg4[%c0_47, %c0_48] : memref<128x384xbf16, #tpu.memory_space<vmem>>, vector<128x384xbf16>
    %cst_49 = arith.constant dense<0.000000e+00> : vector<16x384xf32>
    %179 = tpu.matmul %174, %178, %cst_49 {dimension_numbers = #tpu.dot_dimension_numbers<[1], [0], [0], [1], [0, 0, 1, 1], [], []>} : vector<16x128xbf16>, vector<128x384xbf16>, vector<16x384xf32> -> vector<16x384xf32>
    %180 = vector.extract_strided_slice %9 {offsets = [80, 0], sizes = [16, 384], strides = [1, 1]} : vector<256x384xf32> to vector<16x384xf32>
    %181 = vector.extract_strided_slice %180 {offsets = [0, 0], sizes = [16, 128], strides = [1, 1]} : vector<16x384xf32> to vector<16x128xf32>
    %182 = vector.extract_strided_slice %179 {offsets = [0, 0], sizes = [16, 128], strides = [1, 1]} : vector<16x384xf32> to vector<16x128xf32>
    %183 = arith.addf %181, %182 : vector<16x128xf32>
    %184 = arith.negf %183 : vector<16x128xf32>
    %185 = math.exp %184 : vector<16x128xf32>
    %cst_50 = arith.constant 1.000000e+00 : f32
    %186 = vector.broadcast %cst_50 : f32 to vector<16x128xf32>
    %187 = arith.addf %186, %185 : vector<16x128xf32>
    %188 = arith.divf %186, %187 : vector<16x128xf32>
    %189 = vector.extract_strided_slice %180 {offsets = [0, 128], sizes = [16, 128], strides = [1, 1]} : vector<16x384xf32> to vector<16x128xf32>
    %190 = vector.extract_strided_slice %179 {offsets = [0, 128], sizes = [16, 128], strides = [1, 1]} : vector<16x384xf32> to vector<16x128xf32>
    %191 = arith.addf %189, %190 : vector<16x128xf32>
    %192 = arith.negf %191 : vector<16x128xf32>
    %193 = math.exp %192 : vector<16x128xf32>
    %cst_51 = arith.constant 1.000000e+00 : f32
    %194 = vector.broadcast %cst_51 : f32 to vector<16x128xf32>
    %195 = arith.addf %194, %193 : vector<16x128xf32>
    %196 = arith.divf %194, %195 : vector<16x128xf32>
    %197 = vector.extract_strided_slice %180 {offsets = [0, 256], sizes = [16, 128], strides = [1, 1]} : vector<16x384xf32> to vector<16x128xf32>
    %198 = vector.extract_strided_slice %179 {offsets = [0, 256], sizes = [16, 128], strides = [1, 1]} : vector<16x384xf32> to vector<16x128xf32>
    %199 = vector.broadcast %10 : vector<1x128xf32> to vector<16x128xf32>
    %200 = arith.addf %198, %199 : vector<16x128xf32>
    %201 = arith.mulf %188, %200 : vector<16x128xf32>
    %202 = arith.addf %197, %201 : vector<16x128xf32>
    %203 = math.tanh %202 : vector<16x128xf32>
    %204 = arith.subf %173, %203 : vector<16x128xf32>
    %205 = arith.mulf %196, %204 : vector<16x128xf32>
    %206 = arith.addf %203, %205 : vector<16x128xf32>
    %207 = arith.truncf %206 : vector<16x128xf32> to vector<16x128xbf16>
    %c5 = arith.constant 5 : index
    %c0_52 = arith.constant 0 : index
    %c0_53 = arith.constant 0 : index
    %208 = vector.load %arg7[%c5, %c0_52, %c0_53] : memref<16x16x128xbf16, #tpu.memory_space<vmem>>, vector<1x16x128xbf16>
    %209 = vector.shape_cast %208 : vector<1x16x128xbf16> to vector<16x128xbf16>
    %210 = vector.shape_cast %207 : vector<16x128xbf16> to vector<1x16x128xbf16>
    tpu.vector_store %arg7[%c5, %c0_52, %c0_53], %210 {strides = array<i32>} : memref<16x16x128xbf16, #tpu.memory_space<vmem>>, vector<1x16x128xbf16>,
    %c0_54 = arith.constant 0 : index
    %c0_55 = arith.constant 0 : index
    %211 = vector.load %arg4[%c0_54, %c0_55] : memref<128x384xbf16, #tpu.memory_space<vmem>>, vector<128x384xbf16>
    %cst_56 = arith.constant dense<0.000000e+00> : vector<16x384xf32>
    %212 = tpu.matmul %207, %211, %cst_56 {dimension_numbers = #tpu.dot_dimension_numbers<[1], [0], [0], [1], [0, 0, 1, 1], [], []>} : vector<16x128xbf16>, vector<128x384xbf16>, vector<16x384xf32> -> vector<16x384xf32>
    %213 = vector.extract_strided_slice %9 {offsets = [96, 0], sizes = [16, 384], strides = [1, 1]} : vector<256x384xf32> to vector<16x384xf32>
    %214 = vector.extract_strided_slice %213 {offsets = [0, 0], sizes = [16, 128], strides = [1, 1]} : vector<16x384xf32> to vector<16x128xf32>
    %215 = vector.extract_strided_slice %212 {offsets = [0, 0], sizes = [16, 128], strides = [1, 1]} : vector<16x384xf32> to vector<16x128xf32>
    %216 = arith.addf %214, %215 : vector<16x128xf32>
    %217 = arith.negf %216 : vector<16x128xf32>
    %218 = math.exp %217 : vector<16x128xf32>
    %cst_57 = arith.constant 1.000000e+00 : f32
    %219 = vector.broadcast %cst_57 : f32 to vector<16x128xf32>
    %220 = arith.addf %219, %218 : vector<16x128xf32>
    %221 = arith.divf %219, %220 : vector<16x128xf32>
    %222 = vector.extract_strided_slice %213 {offsets = [0, 128], sizes = [16, 128], strides = [1, 1]} : vector<16x384xf32> to vector<16x128xf32>
    %223 = vector.extract_strided_slice %212 {offsets = [0, 128], sizes = [16, 128], strides = [1, 1]} : vector<16x384xf32> to vector<16x128xf32>
    %224 = arith.addf %222, %223 : vector<16x128xf32>
    %225 = arith.negf %224 : vector<16x128xf32>
    %226 = math.exp %225 : vector<16x128xf32>
    %cst_58 = arith.constant 1.000000e+00 : f32
    %227 = vector.broadcast %cst_58 : f32 to vector<16x128xf32>
    %228 = arith.addf %227, %226 : vector<16x128xf32>
    %229 = arith.divf %227, %228 : vector<16x128xf32>
    %230 = vector.extract_strided_slice %213 {offsets = [0, 256], sizes = [16, 128], strides = [1, 1]} : vector<16x384xf32> to vector<16x128xf32>
    %231 = vector.extract_strided_slice %212 {offsets = [0, 256], sizes = [16, 128], strides = [1, 1]} : vector<16x384xf32> to vector<16x128xf32>
    %232 = vector.broadcast %10 : vector<1x128xf32> to vector<16x128xf32>
    %233 = arith.addf %231, %232 : vector<16x128xf32>
    %234 = arith.mulf %221, %233 : vector<16x128xf32>
    %235 = arith.addf %230, %234 : vector<16x128xf32>
    %236 = math.tanh %235 : vector<16x128xf32>
    %237 = arith.subf %206, %236 : vector<16x128xf32>
    %238 = arith.mulf %229, %237 : vector<16x128xf32>
    %239 = arith.addf %236, %238 : vector<16x128xf32>
    %240 = arith.truncf %239 : vector<16x128xf32> to vector<16x128xbf16>
    %c6 = arith.constant 6 : index
    %c0_59 = arith.constant 0 : index
    %c0_60 = arith.constant 0 : index
    %241 = vector.load %arg7[%c6, %c0_59, %c0_60] : memref<16x16x128xbf16, #tpu.memory_space<vmem>>, vector<1x16x128xbf16>
    %242 = vector.shape_cast %241 : vector<1x16x128xbf16> to vector<16x128xbf16>
    %243 = vector.shape_cast %240 : vector<16x128xbf16> to vector<1x16x128xbf16>
    tpu.vector_store %arg7[%c6, %c0_59, %c0_60], %243 {strides = array<i32>} : memref<16x16x128xbf16, #tpu.memory_space<vmem>>, vector<1x16x128xbf16>,
    %c0_61 = arith.constant 0 : index
    %c0_62 = arith.constant 0 : index
    %244 = vector.load %arg4[%c0_61, %c0_62] : memref<128x384xbf16, #tpu.memory_space<vmem>>, vector<128x384xbf16>
    %cst_63 = arith.constant dense<0.000000e+00> : vector<16x384xf32>
    %245 = tpu.matmul %240, %244, %cst_63 {dimension_numbers = #tpu.dot_dimension_numbers<[1], [0], [0], [1], [0, 0, 1, 1], [], []>} : vector<16x128xbf16>, vector<128x384xbf16>, vector<16x384xf32> -> vector<16x384xf32>
    %246 = vector.extract_strided_slice %9 {offsets = [112, 0], sizes = [16, 384], strides = [1, 1]} : vector<256x384xf32> to vector<16x384xf32>
    %247 = vector.extract_strided_slice %246 {offsets = [0, 0], sizes = [16, 128], strides = [1, 1]} : vector<16x384xf32> to vector<16x128xf32>
    %248 = vector.extract_strided_slice %245 {offsets = [0, 0], sizes = [16, 128], strides = [1, 1]} : vector<16x384xf32> to vector<16x128xf32>
    %249 = arith.addf %247, %248 : vector<16x128xf32>
    %250 = arith.negf %249 : vector<16x128xf32>
    %251 = math.exp %250 : vector<16x128xf32>
    %cst_64 = arith.constant 1.000000e+00 : f32
    %252 = vector.broadcast %cst_64 : f32 to vector<16x128xf32>
    %253 = arith.addf %252, %251 : vector<16x128xf32>
    %254 = arith.divf %252, %253 : vector<16x128xf32>
    %255 = vector.extract_strided_slice %246 {offsets = [0, 128], sizes = [16, 128], strides = [1, 1]} : vector<16x384xf32> to vector<16x128xf32>
    %256 = vector.extract_strided_slice %245 {offsets = [0, 128], sizes = [16, 128], strides = [1, 1]} : vector<16x384xf32> to vector<16x128xf32>
    %257 = arith.addf %255, %256 : vector<16x128xf32>
    %258 = arith.negf %257 : vector<16x128xf32>
    %259 = math.exp %258 : vector<16x128xf32>
    %cst_65 = arith.constant 1.000000e+00 : f32
    %260 = vector.broadcast %cst_65 : f32 to vector<16x128xf32>
    %261 = arith.addf %260, %259 : vector<16x128xf32>
    %262 = arith.divf %260, %261 : vector<16x128xf32>
    %263 = vector.extract_strided_slice %246 {offsets = [0, 256], sizes = [16, 128], strides = [1, 1]} : vector<16x384xf32> to vector<16x128xf32>
    %264 = vector.extract_strided_slice %245 {offsets = [0, 256], sizes = [16, 128], strides = [1, 1]} : vector<16x384xf32> to vector<16x128xf32>
    %265 = vector.broadcast %10 : vector<1x128xf32> to vector<16x128xf32>
    %266 = arith.addf %264, %265 : vector<16x128xf32>
    %267 = arith.mulf %254, %266 : vector<16x128xf32>
    %268 = arith.addf %263, %267 : vector<16x128xf32>
    %269 = math.tanh %268 : vector<16x128xf32>
    %270 = arith.subf %239, %269 : vector<16x128xf32>
    %271 = arith.mulf %262, %270 : vector<16x128xf32>
    %272 = arith.addf %269, %271 : vector<16x128xf32>
    %273 = arith.truncf %272 : vector<16x128xf32> to vector<16x128xbf16>
    %c7 = arith.constant 7 : index
    %c0_66 = arith.constant 0 : index
    %c0_67 = arith.constant 0 : index
    %274 = vector.load %arg7[%c7, %c0_66, %c0_67] : memref<16x16x128xbf16, #tpu.memory_space<vmem>>, vector<1x16x128xbf16>
    %275 = vector.shape_cast %274 : vector<1x16x128xbf16> to vector<16x128xbf16>
    %276 = vector.shape_cast %273 : vector<16x128xbf16> to vector<1x16x128xbf16>
    tpu.vector_store %arg7[%c7, %c0_66, %c0_67], %276 {strides = array<i32>} : memref<16x16x128xbf16, #tpu.memory_space<vmem>>, vector<1x16x128xbf16>,
    %c0_68 = arith.constant 0 : index
    %c0_69 = arith.constant 0 : index
    %277 = vector.load %arg4[%c0_68, %c0_69] : memref<128x384xbf16, #tpu.memory_space<vmem>>, vector<128x384xbf16>
    %cst_70 = arith.constant dense<0.000000e+00> : vector<16x384xf32>
    %278 = tpu.matmul %273, %277, %cst_70 {dimension_numbers = #tpu.dot_dimension_numbers<[1], [0], [0], [1], [0, 0, 1, 1], [], []>} : vector<16x128xbf16>, vector<128x384xbf16>, vector<16x384xf32> -> vector<16x384xf32>
    %279 = vector.extract_strided_slice %9 {offsets = [128, 0], sizes = [16, 384], strides = [1, 1]} : vector<256x384xf32> to vector<16x384xf32>
    %280 = vector.extract_strided_slice %279 {offsets = [0, 0], sizes = [16, 128], strides = [1, 1]} : vector<16x384xf32> to vector<16x128xf32>
    %281 = vector.extract_strided_slice %278 {offsets = [0, 0], sizes = [16, 128], strides = [1, 1]} : vector<16x384xf32> to vector<16x128xf32>
    %282 = arith.addf %280, %281 : vector<16x128xf32>
    %283 = arith.negf %282 : vector<16x128xf32>
    %284 = math.exp %283 : vector<16x128xf32>
    %cst_71 = arith.constant 1.000000e+00 : f32
    %285 = vector.broadcast %cst_71 : f32 to vector<16x128xf32>
    %286 = arith.addf %285, %284 : vector<16x128xf32>
    %287 = arith.divf %285, %286 : vector<16x128xf32>
    %288 = vector.extract_strided_slice %279 {offsets = [0, 128], sizes = [16, 128], strides = [1, 1]} : vector<16x384xf32> to vector<16x128xf32>
    %289 = vector.extract_strided_slice %278 {offsets = [0, 128], sizes = [16, 128], strides = [1, 1]} : vector<16x384xf32> to vector<16x128xf32>
    %290 = arith.addf %288, %289 : vector<16x128xf32>
    %291 = arith.negf %290 : vector<16x128xf32>
    %292 = math.exp %291 : vector<16x128xf32>
    %cst_72 = arith.constant 1.000000e+00 : f32
    %293 = vector.broadcast %cst_72 : f32 to vector<16x128xf32>
    %294 = arith.addf %293, %292 : vector<16x128xf32>
    %295 = arith.divf %293, %294 : vector<16x128xf32>
    %296 = vector.extract_strided_slice %279 {offsets = [0, 256], sizes = [16, 128], strides = [1, 1]} : vector<16x384xf32> to vector<16x128xf32>
    %297 = vector.extract_strided_slice %278 {offsets = [0, 256], sizes = [16, 128], strides = [1, 1]} : vector<16x384xf32> to vector<16x128xf32>
    %298 = vector.broadcast %10 : vector<1x128xf32> to vector<16x128xf32>
    %299 = arith.addf %297, %298 : vector<16x128xf32>
    %300 = arith.mulf %287, %299 : vector<16x128xf32>
    %301 = arith.addf %296, %300 : vector<16x128xf32>
    %302 = math.tanh %301 : vector<16x128xf32>
    %303 = arith.subf %272, %302 : vector<16x128xf32>
    %304 = arith.mulf %295, %303 : vector<16x128xf32>
    %305 = arith.addf %302, %304 : vector<16x128xf32>
    %306 = arith.truncf %305 : vector<16x128xf32> to vector<16x128xbf16>
    %c8 = arith.constant 8 : index
    %c0_73 = arith.constant 0 : index
    %c0_74 = arith.constant 0 : index
    %307 = vector.load %arg7[%c8, %c0_73, %c0_74] : memref<16x16x128xbf16, #tpu.memory_space<vmem>>, vector<1x16x128xbf16>
    %308 = vector.shape_cast %307 : vector<1x16x128xbf16> to vector<16x128xbf16>
    %309 = vector.shape_cast %306 : vector<16x128xbf16> to vector<1x16x128xbf16>
    tpu.vector_store %arg7[%c8, %c0_73, %c0_74], %309 {strides = array<i32>} : memref<16x16x128xbf16, #tpu.memory_space<vmem>>, vector<1x16x128xbf16>,
    %c0_75 = arith.constant 0 : index
    %c0_76 = arith.constant 0 : index
    %310 = vector.load %arg4[%c0_75, %c0_76] : memref<128x384xbf16, #tpu.memory_space<vmem>>, vector<128x384xbf16>
    %cst_77 = arith.constant dense<0.000000e+00> : vector<16x384xf32>
    %311 = tpu.matmul %306, %310, %cst_77 {dimension_numbers = #tpu.dot_dimension_numbers<[1], [0], [0], [1], [0, 0, 1, 1], [], []>} : vector<16x128xbf16>, vector<128x384xbf16>, vector<16x384xf32> -> vector<16x384xf32>
    %312 = vector.extract_strided_slice %9 {offsets = [144, 0], sizes = [16, 384], strides = [1, 1]} : vector<256x384xf32> to vector<16x384xf32>
    %313 = vector.extract_strided_slice %312 {offsets = [0, 0], sizes = [16, 128], strides = [1, 1]} : vector<16x384xf32> to vector<16x128xf32>
    %314 = vector.extract_strided_slice %311 {offsets = [0, 0], sizes = [16, 128], strides = [1, 1]} : vector<16x384xf32> to vector<16x128xf32>
    %315 = arith.addf %313, %314 : vector<16x128xf32>
    %316 = arith.negf %315 : vector<16x128xf32>
    %317 = math.exp %316 : vector<16x128xf32>
    %cst_78 = arith.constant 1.000000e+00 : f32
    %318 = vector.broadcast %cst_78 : f32 to vector<16x128xf32>
    %319 = arith.addf %318, %317 : vector<16x128xf32>
    %320 = arith.divf %318, %319 : vector<16x128xf32>
    %321 = vector.extract_strided_slice %312 {offsets = [0, 128], sizes = [16, 128], strides = [1, 1]} : vector<16x384xf32> to vector<16x128xf32>
    %322 = vector.extract_strided_slice %311 {offsets = [0, 128], sizes = [16, 128], strides = [1, 1]} : vector<16x384xf32> to vector<16x128xf32>
    %323 = arith.addf %321, %322 : vector<16x128xf32>
    %324 = arith.negf %323 : vector<16x128xf32>
    %325 = math.exp %324 : vector<16x128xf32>
    %cst_79 = arith.constant 1.000000e+00 : f32
    %326 = vector.broadcast %cst_79 : f32 to vector<16x128xf32>
    %327 = arith.addf %326, %325 : vector<16x128xf32>
    %328 = arith.divf %326, %327 : vector<16x128xf32>
    %329 = vector.extract_strided_slice %312 {offsets = [0, 256], sizes = [16, 128], strides = [1, 1]} : vector<16x384xf32> to vector<16x128xf32>
    %330 = vector.extract_strided_slice %311 {offsets = [0, 256], sizes = [16, 128], strides = [1, 1]} : vector<16x384xf32> to vector<16x128xf32>
    %331 = vector.broadcast %10 : vector<1x128xf32> to vector<16x128xf32>
    %332 = arith.addf %330, %331 : vector<16x128xf32>
    %333 = arith.mulf %320, %332 : vector<16x128xf32>
    %334 = arith.addf %329, %333 : vector<16x128xf32>
    %335 = math.tanh %334 : vector<16x128xf32>
    %336 = arith.subf %305, %335 : vector<16x128xf32>
    %337 = arith.mulf %328, %336 : vector<16x128xf32>
    %338 = arith.addf %335, %337 : vector<16x128xf32>
    %339 = arith.truncf %338 : vector<16x128xf32> to vector<16x128xbf16>
    %c9 = arith.constant 9 : index
    %c0_80 = arith.constant 0 : index
    %c0_81 = arith.constant 0 : index
    %340 = vector.load %arg7[%c9, %c0_80, %c0_81] : memref<16x16x128xbf16, #tpu.memory_space<vmem>>, vector<1x16x128xbf16>
    %341 = vector.shape_cast %340 : vector<1x16x128xbf16> to vector<16x128xbf16>
    %342 = vector.shape_cast %339 : vector<16x128xbf16> to vector<1x16x128xbf16>
    tpu.vector_store %arg7[%c9, %c0_80, %c0_81], %342 {strides = array<i32>} : memref<16x16x128xbf16, #tpu.memory_space<vmem>>, vector<1x16x128xbf16>,
    %c0_82 = arith.constant 0 : index
    %c0_83 = arith.constant 0 : index
    %343 = vector.load %arg4[%c0_82, %c0_83] : memref<128x384xbf16, #tpu.memory_space<vmem>>, vector<128x384xbf16>
    %cst_84 = arith.constant dense<0.000000e+00> : vector<16x384xf32>
    %344 = tpu.matmul %339, %343, %cst_84 {dimension_numbers = #tpu.dot_dimension_numbers<[1], [0], [0], [1], [0, 0, 1, 1], [], []>} : vector<16x128xbf16>, vector<128x384xbf16>, vector<16x384xf32> -> vector<16x384xf32>
    %345 = vector.extract_strided_slice %9 {offsets = [160, 0], sizes = [16, 384], strides = [1, 1]} : vector<256x384xf32> to vector<16x384xf32>
    %346 = vector.extract_strided_slice %345 {offsets = [0, 0], sizes = [16, 128], strides = [1, 1]} : vector<16x384xf32> to vector<16x128xf32>
    %347 = vector.extract_strided_slice %344 {offsets = [0, 0], sizes = [16, 128], strides = [1, 1]} : vector<16x384xf32> to vector<16x128xf32>
    %348 = arith.addf %346, %347 : vector<16x128xf32>
    %349 = arith.negf %348 : vector<16x128xf32>
    %350 = math.exp %349 : vector<16x128xf32>
    %cst_85 = arith.constant 1.000000e+00 : f32
    %351 = vector.broadcast %cst_85 : f32 to vector<16x128xf32>
    %352 = arith.addf %351, %350 : vector<16x128xf32>
    %353 = arith.divf %351, %352 : vector<16x128xf32>
    %354 = vector.extract_strided_slice %345 {offsets = [0, 128], sizes = [16, 128], strides = [1, 1]} : vector<16x384xf32> to vector<16x128xf32>
    %355 = vector.extract_strided_slice %344 {offsets = [0, 128], sizes = [16, 128], strides = [1, 1]} : vector<16x384xf32> to vector<16x128xf32>
    %356 = arith.addf %354, %355 : vector<16x128xf32>
    %357 = arith.negf %356 : vector<16x128xf32>
    %358 = math.exp %357 : vector<16x128xf32>
    %cst_86 = arith.constant 1.000000e+00 : f32
    %359 = vector.broadcast %cst_86 : f32 to vector<16x128xf32>
    %360 = arith.addf %359, %358 : vector<16x128xf32>
    %361 = arith.divf %359, %360 : vector<16x128xf32>
    %362 = vector.extract_strided_slice %345 {offsets = [0, 256], sizes = [16, 128], strides = [1, 1]} : vector<16x384xf32> to vector<16x128xf32>
    %363 = vector.extract_strided_slice %344 {offsets = [0, 256], sizes = [16, 128], strides = [1, 1]} : vector<16x384xf32> to vector<16x128xf32>
    %364 = vector.broadcast %10 : vector<1x128xf32> to vector<16x128xf32>
    %365 = arith.addf %363, %364 : vector<16x128xf32>
    %366 = arith.mulf %353, %365 : vector<16x128xf32>
    %367 = arith.addf %362, %366 : vector<16x128xf32>
    %368 = math.tanh %367 : vector<16x128xf32>
    %369 = arith.subf %338, %368 : vector<16x128xf32>
    %370 = arith.mulf %361, %369 : vector<16x128xf32>
    %371 = arith.addf %368, %370 : vector<16x128xf32>
    %372 = arith.truncf %371 : vector<16x128xf32> to vector<16x128xbf16>
    %c10 = arith.constant 10 : index
    %c0_87 = arith.constant 0 : index
    %c0_88 = arith.constant 0 : index
    %373 = vector.load %arg7[%c10, %c0_87, %c0_88] : memref<16x16x128xbf16, #tpu.memory_space<vmem>>, vector<1x16x128xbf16>
    %374 = vector.shape_cast %373 : vector<1x16x128xbf16> to vector<16x128xbf16>
    %375 = vector.shape_cast %372 : vector<16x128xbf16> to vector<1x16x128xbf16>
    tpu.vector_store %arg7[%c10, %c0_87, %c0_88], %375 {strides = array<i32>} : memref<16x16x128xbf16, #tpu.memory_space<vmem>>, vector<1x16x128xbf16>,
    %c0_89 = arith.constant 0 : index
    %c0_90 = arith.constant 0 : index
    %376 = vector.load %arg4[%c0_89, %c0_90] : memref<128x384xbf16, #tpu.memory_space<vmem>>, vector<128x384xbf16>
    %cst_91 = arith.constant dense<0.000000e+00> : vector<16x384xf32>
    %377 = tpu.matmul %372, %376, %cst_91 {dimension_numbers = #tpu.dot_dimension_numbers<[1], [0], [0], [1], [0, 0, 1, 1], [], []>} : vector<16x128xbf16>, vector<128x384xbf16>, vector<16x384xf32> -> vector<16x384xf32>
    %378 = vector.extract_strided_slice %9 {offsets = [176, 0], sizes = [16, 384], strides = [1, 1]} : vector<256x384xf32> to vector<16x384xf32>
    %379 = vector.extract_strided_slice %378 {offsets = [0, 0], sizes = [16, 128], strides = [1, 1]} : vector<16x384xf32> to vector<16x128xf32>
    %380 = vector.extract_strided_slice %377 {offsets = [0, 0], sizes = [16, 128], strides = [1, 1]} : vector<16x384xf32> to vector<16x128xf32>
    %381 = arith.addf %379, %380 : vector<16x128xf32>
    %382 = arith.negf %381 : vector<16x128xf32>
    %383 = math.exp %382 : vector<16x128xf32>
    %cst_92 = arith.constant 1.000000e+00 : f32
    %384 = vector.broadcast %cst_92 : f32 to vector<16x128xf32>
    %385 = arith.addf %384, %383 : vector<16x128xf32>
    %386 = arith.divf %384, %385 : vector<16x128xf32>
    %387 = vector.extract_strided_slice %378 {offsets = [0, 128], sizes = [16, 128], strides = [1, 1]} : vector<16x384xf32> to vector<16x128xf32>
    %388 = vector.extract_strided_slice %377 {offsets = [0, 128], sizes = [16, 128], strides = [1, 1]} : vector<16x384xf32> to vector<16x128xf32>
    %389 = arith.addf %387, %388 : vector<16x128xf32>
    %390 = arith.negf %389 : vector<16x128xf32>
    %391 = math.exp %390 : vector<16x128xf32>
    %cst_93 = arith.constant 1.000000e+00 : f32
    %392 = vector.broadcast %cst_93 : f32 to vector<16x128xf32>
    %393 = arith.addf %392, %391 : vector<16x128xf32>
    %394 = arith.divf %392, %393 : vector<16x128xf32>
    %395 = vector.extract_strided_slice %378 {offsets = [0, 256], sizes = [16, 128], strides = [1, 1]} : vector<16x384xf32> to vector<16x128xf32>
    %396 = vector.extract_strided_slice %377 {offsets = [0, 256], sizes = [16, 128], strides = [1, 1]} : vector<16x384xf32> to vector<16x128xf32>
    %397 = vector.broadcast %10 : vector<1x128xf32> to vector<16x128xf32>
    %398 = arith.addf %396, %397 : vector<16x128xf32>
    %399 = arith.mulf %386, %398 : vector<16x128xf32>
    %400 = arith.addf %395, %399 : vector<16x128xf32>
    %401 = math.tanh %400 : vector<16x128xf32>
    %402 = arith.subf %371, %401 : vector<16x128xf32>
    %403 = arith.mulf %394, %402 : vector<16x128xf32>
    %404 = arith.addf %401, %403 : vector<16x128xf32>
    %405 = arith.truncf %404 : vector<16x128xf32> to vector<16x128xbf16>
    %c11 = arith.constant 11 : index
    %c0_94 = arith.constant 0 : index
    %c0_95 = arith.constant 0 : index
    %406 = vector.load %arg7[%c11, %c0_94, %c0_95] : memref<16x16x128xbf16, #tpu.memory_space<vmem>>, vector<1x16x128xbf16>
    %407 = vector.shape_cast %406 : vector<1x16x128xbf16> to vector<16x128xbf16>
    %408 = vector.shape_cast %405 : vector<16x128xbf16> to vector<1x16x128xbf16>
    tpu.vector_store %arg7[%c11, %c0_94, %c0_95], %408 {strides = array<i32>} : memref<16x16x128xbf16, #tpu.memory_space<vmem>>, vector<1x16x128xbf16>,
    %c0_96 = arith.constant 0 : index
    %c0_97 = arith.constant 0 : index
    %409 = vector.load %arg4[%c0_96, %c0_97] : memref<128x384xbf16, #tpu.memory_space<vmem>>, vector<128x384xbf16>
    %cst_98 = arith.constant dense<0.000000e+00> : vector<16x384xf32>
    %410 = tpu.matmul %405, %409, %cst_98 {dimension_numbers = #tpu.dot_dimension_numbers<[1], [0], [0], [1], [0, 0, 1, 1], [], []>} : vector<16x128xbf16>, vector<128x384xbf16>, vector<16x384xf32> -> vector<16x384xf32>
    %411 = vector.extract_strided_slice %9 {offsets = [192, 0], sizes = [16, 384], strides = [1, 1]} : vector<256x384xf32> to vector<16x384xf32>
    %412 = vector.extract_strided_slice %411 {offsets = [0, 0], sizes = [16, 128], strides = [1, 1]} : vector<16x384xf32> to vector<16x128xf32>
    %413 = vector.extract_strided_slice %410 {offsets = [0, 0], sizes = [16, 128], strides = [1, 1]} : vector<16x384xf32> to vector<16x128xf32>
    %414 = arith.addf %412, %413 : vector<16x128xf32>
    %415 = arith.negf %414 : vector<16x128xf32>
    %416 = math.exp %415 : vector<16x128xf32>
    %cst_99 = arith.constant 1.000000e+00 : f32
    %417 = vector.broadcast %cst_99 : f32 to vector<16x128xf32>
    %418 = arith.addf %417, %416 : vector<16x128xf32>
    %419 = arith.divf %417, %418 : vector<16x128xf32>
    %420 = vector.extract_strided_slice %411 {offsets = [0, 128], sizes = [16, 128], strides = [1, 1]} : vector<16x384xf32> to vector<16x128xf32>
    %421 = vector.extract_strided_slice %410 {offsets = [0, 128], sizes = [16, 128], strides = [1, 1]} : vector<16x384xf32> to vector<16x128xf32>
    %422 = arith.addf %420, %421 : vector<16x128xf32>
    %423 = arith.negf %422 : vector<16x128xf32>
    %424 = math.exp %423 : vector<16x128xf32>
    %cst_100 = arith.constant 1.000000e+00 : f32
    %425 = vector.broadcast %cst_100 : f32 to vector<16x128xf32>
    %426 = arith.addf %425, %424 : vector<16x128xf32>
    %427 = arith.divf %425, %426 : vector<16x128xf32>
    %428 = vector.extract_strided_slice %411 {offsets = [0, 256], sizes = [16, 128], strides = [1, 1]} : vector<16x384xf32> to vector<16x128xf32>
    %429 = vector.extract_strided_slice %410 {offsets = [0, 256], sizes = [16, 128], strides = [1, 1]} : vector<16x384xf32> to vector<16x128xf32>
    %430 = vector.broadcast %10 : vector<1x128xf32> to vector<16x128xf32>
    %431 = arith.addf %429, %430 : vector<16x128xf32>
    %432 = arith.mulf %419, %431 : vector<16x128xf32>
    %433 = arith.addf %428, %432 : vector<16x128xf32>
    %434 = math.tanh %433 : vector<16x128xf32>
    %435 = arith.subf %404, %434 : vector<16x128xf32>
    %436 = arith.mulf %427, %435 : vector<16x128xf32>
    %437 = arith.addf %434, %436 : vector<16x128xf32>
    %438 = arith.truncf %437 : vector<16x128xf32> to vector<16x128xbf16>
    %c12 = arith.constant 12 : index
    %c0_101 = arith.constant 0 : index
    %c0_102 = arith.constant 0 : index
    %439 = vector.load %arg7[%c12, %c0_101, %c0_102] : memref<16x16x128xbf16, #tpu.memory_space<vmem>>, vector<1x16x128xbf16>
    %440 = vector.shape_cast %439 : vector<1x16x128xbf16> to vector<16x128xbf16>
    %441 = vector.shape_cast %438 : vector<16x128xbf16> to vector<1x16x128xbf16>
    tpu.vector_store %arg7[%c12, %c0_101, %c0_102], %441 {strides = array<i32>} : memref<16x16x128xbf16, #tpu.memory_space<vmem>>, vector<1x16x128xbf16>,
    %c0_103 = arith.constant 0 : index
    %c0_104 = arith.constant 0 : index
    %442 = vector.load %arg4[%c0_103, %c0_104] : memref<128x384xbf16, #tpu.memory_space<vmem>>, vector<128x384xbf16>
    %cst_105 = arith.constant dense<0.000000e+00> : vector<16x384xf32>
    %443 = tpu.matmul %438, %442, %cst_105 {dimension_numbers = #tpu.dot_dimension_numbers<[1], [0], [0], [1], [0, 0, 1, 1], [], []>} : vector<16x128xbf16>, vector<128x384xbf16>, vector<16x384xf32> -> vector<16x384xf32>
    %444 = vector.extract_strided_slice %9 {offsets = [208, 0], sizes = [16, 384], strides = [1, 1]} : vector<256x384xf32> to vector<16x384xf32>
    %445 = vector.extract_strided_slice %444 {offsets = [0, 0], sizes = [16, 128], strides = [1, 1]} : vector<16x384xf32> to vector<16x128xf32>
    %446 = vector.extract_strided_slice %443 {offsets = [0, 0], sizes = [16, 128], strides = [1, 1]} : vector<16x384xf32> to vector<16x128xf32>
    %447 = arith.addf %445, %446 : vector<16x128xf32>
    %448 = arith.negf %447 : vector<16x128xf32>
    %449 = math.exp %448 : vector<16x128xf32>
    %cst_106 = arith.constant 1.000000e+00 : f32
    %450 = vector.broadcast %cst_106 : f32 to vector<16x128xf32>
    %451 = arith.addf %450, %449 : vector<16x128xf32>
    %452 = arith.divf %450, %451 : vector<16x128xf32>
    %453 = vector.extract_strided_slice %444 {offsets = [0, 128], sizes = [16, 128], strides = [1, 1]} : vector<16x384xf32> to vector<16x128xf32>
    %454 = vector.extract_strided_slice %443 {offsets = [0, 128], sizes = [16, 128], strides = [1, 1]} : vector<16x384xf32> to vector<16x128xf32>
    %455 = arith.addf %453, %454 : vector<16x128xf32>
    %456 = arith.negf %455 : vector<16x128xf32>
    %457 = math.exp %456 : vector<16x128xf32>
    %cst_107 = arith.constant 1.000000e+00 : f32
    %458 = vector.broadcast %cst_107 : f32 to vector<16x128xf32>
    %459 = arith.addf %458, %457 : vector<16x128xf32>
    %460 = arith.divf %458, %459 : vector<16x128xf32>
    %461 = vector.extract_strided_slice %444 {offsets = [0, 256], sizes = [16, 128], strides = [1, 1]} : vector<16x384xf32> to vector<16x128xf32>
    %462 = vector.extract_strided_slice %443 {offsets = [0, 256], sizes = [16, 128], strides = [1, 1]} : vector<16x384xf32> to vector<16x128xf32>
    %463 = vector.broadcast %10 : vector<1x128xf32> to vector<16x128xf32>
    %464 = arith.addf %462, %463 : vector<16x128xf32>
    %465 = arith.mulf %452, %464 : vector<16x128xf32>
    %466 = arith.addf %461, %465 : vector<16x128xf32>
    %467 = math.tanh %466 : vector<16x128xf32>
    %468 = arith.subf %437, %467 : vector<16x128xf32>
    %469 = arith.mulf %460, %468 : vector<16x128xf32>
    %470 = arith.addf %467, %469 : vector<16x128xf32>
    %471 = arith.truncf %470 : vector<16x128xf32> to vector<16x128xbf16>
    %c13 = arith.constant 13 : index
    %c0_108 = arith.constant 0 : index
    %c0_109 = arith.constant 0 : index
    %472 = vector.load %arg7[%c13, %c0_108, %c0_109] : memref<16x16x128xbf16, #tpu.memory_space<vmem>>, vector<1x16x128xbf16>
    %473 = vector.shape_cast %472 : vector<1x16x128xbf16> to vector<16x128xbf16>
    %474 = vector.shape_cast %471 : vector<16x128xbf16> to vector<1x16x128xbf16>
    tpu.vector_store %arg7[%c13, %c0_108, %c0_109], %474 {strides = array<i32>} : memref<16x16x128xbf16, #tpu.memory_space<vmem>>, vector<1x16x128xbf16>,
    %c0_110 = arith.constant 0 : index
    %c0_111 = arith.constant 0 : index
    %475 = vector.load %arg4[%c0_110, %c0_111] : memref<128x384xbf16, #tpu.memory_space<vmem>>, vector<128x384xbf16>
    %cst_112 = arith.constant dense<0.000000e+00> : vector<16x384xf32>
    %476 = tpu.matmul %471, %475, %cst_112 {dimension_numbers = #tpu.dot_dimension_numbers<[1], [0], [0], [1], [0, 0, 1, 1], [], []>} : vector<16x128xbf16>, vector<128x384xbf16>, vector<16x384xf32> -> vector<16x384xf32>
    %477 = vector.extract_strided_slice %9 {offsets = [224, 0], sizes = [16, 384], strides = [1, 1]} : vector<256x384xf32> to vector<16x384xf32>
    %478 = vector.extract_strided_slice %477 {offsets = [0, 0], sizes = [16, 128], strides = [1, 1]} : vector<16x384xf32> to vector<16x128xf32>
    %479 = vector.extract_strided_slice %476 {offsets = [0, 0], sizes = [16, 128], strides = [1, 1]} : vector<16x384xf32> to vector<16x128xf32>
    %480 = arith.addf %478, %479 : vector<16x128xf32>
    %481 = arith.negf %480 : vector<16x128xf32>
    %482 = math.exp %481 : vector<16x128xf32>
    %cst_113 = arith.constant 1.000000e+00 : f32
    %483 = vector.broadcast %cst_113 : f32 to vector<16x128xf32>
    %484 = arith.addf %483, %482 : vector<16x128xf32>
    %485 = arith.divf %483, %484 : vector<16x128xf32>
    %486 = vector.extract_strided_slice %477 {offsets = [0, 128], sizes = [16, 128], strides = [1, 1]} : vector<16x384xf32> to vector<16x128xf32>
    %487 = vector.extract_strided_slice %476 {offsets = [0, 128], sizes = [16, 128], strides = [1, 1]} : vector<16x384xf32> to vector<16x128xf32>
    %488 = arith.addf %486, %487 : vector<16x128xf32>
    %489 = arith.negf %488 : vector<16x128xf32>
    %490 = math.exp %489 : vector<16x128xf32>
    %cst_114 = arith.constant 1.000000e+00 : f32
    %491 = vector.broadcast %cst_114 : f32 to vector<16x128xf32>
    %492 = arith.addf %491, %490 : vector<16x128xf32>
    %493 = arith.divf %491, %492 : vector<16x128xf32>
    %494 = vector.extract_strided_slice %477 {offsets = [0, 256], sizes = [16, 128], strides = [1, 1]} : vector<16x384xf32> to vector<16x128xf32>
    %495 = vector.extract_strided_slice %476 {offsets = [0, 256], sizes = [16, 128], strides = [1, 1]} : vector<16x384xf32> to vector<16x128xf32>
    %496 = vector.broadcast %10 : vector<1x128xf32> to vector<16x128xf32>
    %497 = arith.addf %495, %496 : vector<16x128xf32>
    %498 = arith.mulf %485, %497 : vector<16x128xf32>
    %499 = arith.addf %494, %498 : vector<16x128xf32>
    %500 = math.tanh %499 : vector<16x128xf32>
    %501 = arith.subf %470, %500 : vector<16x128xf32>
    %502 = arith.mulf %493, %501 : vector<16x128xf32>
    %503 = arith.addf %500, %502 : vector<16x128xf32>
    %504 = arith.truncf %503 : vector<16x128xf32> to vector<16x128xbf16>
    %c14 = arith.constant 14 : index
    %c0_115 = arith.constant 0 : index
    %c0_116 = arith.constant 0 : index
    %505 = vector.load %arg7[%c14, %c0_115, %c0_116] : memref<16x16x128xbf16, #tpu.memory_space<vmem>>, vector<1x16x128xbf16>
    %506 = vector.shape_cast %505 : vector<1x16x128xbf16> to vector<16x128xbf16>
    %507 = vector.shape_cast %504 : vector<16x128xbf16> to vector<1x16x128xbf16>
    tpu.vector_store %arg7[%c14, %c0_115, %c0_116], %507 {strides = array<i32>} : memref<16x16x128xbf16, #tpu.memory_space<vmem>>, vector<1x16x128xbf16>,
    %c0_117 = arith.constant 0 : index
    %c0_118 = arith.constant 0 : index
    %508 = vector.load %arg4[%c0_117, %c0_118] : memref<128x384xbf16, #tpu.memory_space<vmem>>, vector<128x384xbf16>
    %cst_119 = arith.constant dense<0.000000e+00> : vector<16x384xf32>
    %509 = tpu.matmul %504, %508, %cst_119 {dimension_numbers = #tpu.dot_dimension_numbers<[1], [0], [0], [1], [0, 0, 1, 1], [], []>} : vector<16x128xbf16>, vector<128x384xbf16>, vector<16x384xf32> -> vector<16x384xf32>
    %510 = vector.extract_strided_slice %9 {offsets = [240, 0], sizes = [16, 384], strides = [1, 1]} : vector<256x384xf32> to vector<16x384xf32>
    %511 = vector.extract_strided_slice %510 {offsets = [0, 0], sizes = [16, 128], strides = [1, 1]} : vector<16x384xf32> to vector<16x128xf32>
    %512 = vector.extract_strided_slice %509 {offsets = [0, 0], sizes = [16, 128], strides = [1, 1]} : vector<16x384xf32> to vector<16x128xf32>
    %513 = arith.addf %511, %512 : vector<16x128xf32>
    %514 = arith.negf %513 : vector<16x128xf32>
    %515 = math.exp %514 : vector<16x128xf32>
    %cst_120 = arith.constant 1.000000e+00 : f32
    %516 = vector.broadcast %cst_120 : f32 to vector<16x128xf32>
    %517 = arith.addf %516, %515 : vector<16x128xf32>
    %518 = arith.divf %516, %517 : vector<16x128xf32>
    %519 = vector.extract_strided_slice %510 {offsets = [0, 128], sizes = [16, 128], strides = [1, 1]} : vector<16x384xf32> to vector<16x128xf32>
    %520 = vector.extract_strided_slice %509 {offsets = [0, 128], sizes = [16, 128], strides = [1, 1]} : vector<16x384xf32> to vector<16x128xf32>
    %521 = arith.addf %519, %520 : vector<16x128xf32>
    %522 = arith.negf %521 : vector<16x128xf32>
    %523 = math.exp %522 : vector<16x128xf32>
    %cst_121 = arith.constant 1.000000e+00 : f32
    %524 = vector.broadcast %cst_121 : f32 to vector<16x128xf32>
    %525 = arith.addf %524, %523 : vector<16x128xf32>
    %526 = arith.divf %524, %525 : vector<16x128xf32>
    %527 = vector.extract_strided_slice %510 {offsets = [0, 256], sizes = [16, 128], strides = [1, 1]} : vector<16x384xf32> to vector<16x128xf32>
    %528 = vector.extract_strided_slice %509 {offsets = [0, 256], sizes = [16, 128], strides = [1, 1]} : vector<16x384xf32> to vector<16x128xf32>
    %529 = vector.broadcast %10 : vector<1x128xf32> to vector<16x128xf32>
    %530 = arith.addf %528, %529 : vector<16x128xf32>
    %531 = arith.mulf %518, %530 : vector<16x128xf32>
    %532 = arith.addf %527, %531 : vector<16x128xf32>
    %533 = math.tanh %532 : vector<16x128xf32>
    %534 = arith.subf %503, %533 : vector<16x128xf32>
    %535 = arith.mulf %526, %534 : vector<16x128xf32>
    %536 = arith.addf %533, %535 : vector<16x128xf32>
    %537 = arith.truncf %536 : vector<16x128xf32> to vector<16x128xbf16>
    %c15 = arith.constant 15 : index
    %c0_122 = arith.constant 0 : index
    %c0_123 = arith.constant 0 : index
    %538 = vector.load %arg7[%c15, %c0_122, %c0_123] : memref<16x16x128xbf16, #tpu.memory_space<vmem>>, vector<1x16x128xbf16>
    %539 = vector.shape_cast %538 : vector<1x16x128xbf16> to vector<16x128xbf16>
    %540 = vector.shape_cast %537 : vector<16x128xbf16> to vector<1x16x128xbf16>
    tpu.vector_store %arg7[%c15, %c0_122, %c0_123], %540 {strides = array<i32>} : memref<16x16x128xbf16, #tpu.memory_space<vmem>>, vector<1x16x128xbf16>,
    %c0_124 = arith.constant 0 : index
    %c0_125 = arith.constant 0 : index
    %541 = vector.load %arg8[%c0_124, %c0_125] : memref<16x128xf32, #tpu.memory_space<vmem>>, vector<16x128xf32>
    tpu.vector_store %arg8[%c0_124, %c0_125], %536 {strides = array<i32>} : memref<16x128xf32, #tpu.memory_space<vmem>>, vector<16x128xf32>,
    return
  }
  func.func @transform_0(%arg0: i32, %arg1: i32) -> (i32, i32, i32) {
    %c0_i32 = arith.constant 0 : i32
    %c0_i32_0 = arith.constant 0 : i32
    return %arg1, %arg0, %c0_i32 : i32, i32, i32
  }
  func.func @transform_1(%arg0: i32, %arg1: i32) -> (i32, i32) {
    %c0_i32 = arith.constant 0 : i32
    %c0_i32_0 = arith.constant 0 : i32
    %c0_i32_1 = arith.constant 0 : i32
    return %c0_i32, %c0_i32_0 : i32, i32
  }
  func.func @transform_2(%arg0: i32, %arg1: i32) -> (i32, i32) {
    %c0_i32 = arith.constant 0 : i32
    %c0_i32_0 = arith.constant 0 : i32
    %c0_i32_1 = arith.constant 0 : i32
    return %c0_i32, %c0_i32_0 : i32, i32
  }
  func.func @transform_3(%arg0: i32, %arg1: i32) -> (i32, i32) {
    %c0_i32 = arith.constant 0 : i32
    %c0_i32_0 = arith.constant 0 : i32
    %c0_i32_1 = arith.constant 0 : i32
    return %c0_i32, %c0_i32_0 : i32, i32
  }
  func.func @transform_4(%arg0: i32, %arg1: i32) -> (i32, i32) {
    %c0_i32 = arith.constant 0 : i32
    %c0_i32_0 = arith.constant 0 : i32
    %c0_i32_1 = arith.constant 0 : i32
    return %c0_i32, %c0_i32_0 : i32, i32
  }
  func.func @transform_5(%arg0: i32, %arg1: i32) -> (i32, i32, i32) {
    %c0_i32 = arith.constant 0 : i32
    %c0_i32_0 = arith.constant 0 : i32
    return %arg1, %arg0, %c0_i32 : i32, i32, i32
  }
}

</mosaic_0001>

<llo_original>
// kernel: tpu_custom_call.1
$region0: #{tpu_custom_call.1}
  #allocation0 [shape = 'u32[]', space=smem, size = 0x4, offset = 0x4, fixed_abs, tag = 'smem constant byte address 0x4 - core index']
  #allocation1 [shape = 'u32[144,128]{1,0:T(1,128)}', space=vmem, size = 0x12000, scoped, tag = 'internal scratch']
  #allocation2 [shape = 'f32[16,128]{1,0:T(8,128)}', space=vmem, size = 0x2000, scoped, tag = 'scratch operand']
  %s0 = inlined_call_operand.hbm [shape: bf16[16,16,128], index: 0, kind: input, shape index: {}]
  %s1 = inlined_call_operand.hbm [shape: bf16[128,384], index: 1, kind: input, shape index: {}]
  %s2 = inlined_call_operand.hbm [shape: bf16[128,384], index: 2, kind: input, shape index: {}]
  %s3 = inlined_call_operand.vmem [shape: f32[1,384], index: 3, kind: input, shape index: {}]
  %s4 = inlined_call_operand.vmem [shape: f32[1,128], index: 4, kind: input, shape index: {}]
  %s5 = inlined_call_operand.hbm [shape: bf16[16,16,128], index: 5, kind: output, shape index: {}]
  %s6 = sld [smem:[#allocation0]]
  $region46: #{tpu_custom_call.1} parent=0
    _
  %s8 = ssub.s32 1, %s6
  %s9 = scalar_select 0, %s8, %s6
  $region1: #{tpu_custom_call.1} parent=0
    #allocation3 [shape = 'u8[65536]{0}', space=vmem, size = 0x10000, scoped, tag = 'input window, operand 0, single buffered']
    #allocation4 [shape = 's32[1]{0}', space=sflag, size = 0x4, scoped, tag = 'scoped memory for tpu_custom_call.1']
    #allocation5 [shape = 's32[1]{0}', space=sflag, size = 0x4, scoped, tag = 'scoped memory for tpu_custom_call.1']
    #allocation6 [shape = 'u8[98304]{0}', space=vmem, size = 0x18000, scoped, tag = 'input window, operand 1, single buffered']
    #allocation7 [shape = 's32[1]{0}', space=sflag, size = 0x4, scoped, tag = 'scoped memory for tpu_custom_call.1']
    #allocation8 [shape = 'u8[98304]{0}', space=vmem, size = 0x18000, scoped, tag = 'input window, operand 2, single buffered']
    #allocation9 [shape = 'u8[65536]{0}', space=vmem, size = 0x10000, scoped, tag = 'output window, operand 0, single buffered']
    %10 = vsyncpa [#allocation4], 0
    %11 = vsyncpa [#allocation7], 0
    %12 = vsyncpa [#allocation5], 0
    // Predicated region
    $region2: #{tpu_custom_call.1} parent=1 // pred_check
      _
    $region3: #{tpu_custom_call.1} parent=1 // pred_check_branch
      %14 = sbr.rel (0) target = $region5
    $region4: #{tpu_custom_call.1} parent=1 // pred_region
      %s16 = ssub.s32 2048, 2048
      %17 = vsyncadd [#allocation4], %s16
      %s18 = sshll.u32 [#allocation3], 4
      %s19 = int_to_ptr.vmem [resolvable:$true] %s18
      %24 = dma.hbm_to_vmem [thread:$0]  %s0, 2048, %s19, [#allocation4], 64, 64, 4
    $region5: #{tpu_custom_call.1} parent=1 // pred_fallthru
      _
    // Predicated region
    $region6: #{tpu_custom_call.1} parent=1 // pred_check
      _
    $region7: #{tpu_custom_call.1} parent=1 // pred_check_branch
      %26 = sbr.rel (0) target = $region9
    $region8: #{tpu_custom_call.1} parent=1 // pred_region
      %s28 = ssub.s32 3072, 3072
      %29 = vsyncadd [#allocation7], %s28
      %s30 = sshll.u32 [#allocation6], 4
      %s31 = int_to_ptr.vmem [resolvable:$true] %s30
      %36 = dma.hbm_to_vmem [thread:$0]  %s1, 3072, %s31, [#allocation7], 192, 192, 12
    $region9: #{tpu_custom_call.1} parent=1 // pred_fallthru
      _
    // Predicated region
    $region10: #{tpu_custom_call.1} parent=1 // pred_check
      _
    $region11: #{tpu_custom_call.1} parent=1 // pred_check_branch
      %38 = sbr.rel (0) target = $region13
    $region12: #{tpu_custom_call.1} parent=1 // pred_region
      %s40 = ssub.s32 3072, 3072
      %41 = vsyncadd [#allocation7], %s40
      %s42 = sshll.u32 [#allocation8], 4
      %s43 = int_to_ptr.vmem [resolvable:$true] %s42
      %48 = dma.hbm_to_vmem [thread:$0]  %s2, 3072, %s43, [#allocation7], 192, 192, 12
    $region13: #{tpu_custom_call.1} parent=1 // pred_fallthru
      _
    // Predicated region
    $region14: #{tpu_custom_call.1} parent=1 // pred_check
      _
    $region15: #{tpu_custom_call.1} parent=1 // pred_check_branch
      %50 = sbr.rel (0) target = $region17
    $region16: #{tpu_custom_call.1} parent=1 // pred_region
      _
    $region17: #{tpu_custom_call.1} parent=1 // pred_fallthru
      _
    // Predicated region
    $region18: #{tpu_custom_call.1} parent=1 // pred_check
      _
    $region19: #{tpu_custom_call.1} parent=1 // pred_check_branch
      %52 = sbr.rel (0) target = $region21
    $region20: #{tpu_custom_call.1} parent=1 // pred_region
      _
    $region21: #{tpu_custom_call.1} parent=1 // pred_fallthru
      _
    // Predicated region
    $region22: #{tpu_custom_call.1} parent=1 // pred_check
      _
    $region23: #{tpu_custom_call.1} parent=1 // pred_check_branch
      %54 = sbr.rel (0) target = $region25
    $region24: #{tpu_custom_call.1} parent=1 // pred_region
      %55 = dma.done [#allocation4], 2048
    $region25: #{tpu_custom_call.1} parent=1 // pred_fallthru
      _
    // Predicated region
    $region26: #{tpu_custom_call.1} parent=1 // pred_check
      _
    $region27: #{tpu_custom_call.1} parent=1 // pred_check_branch
      %57 = sbr.rel (0) target = $region29
    $region28: #{tpu_custom_call.1} parent=1 // pred_region
      %58 = dma.done [#allocation7], 3072
    $region29: #{tpu_custom_call.1} parent=1 // pred_fallthru
      _
    // Predicated region
    $region30: #{tpu_custom_call.1} parent=1 // pred_check
      _
    $region31: #{tpu_custom_call.1} parent=1 // pred_check_branch
      %60 = sbr.rel (0) target = $region33
    $region32: #{tpu_custom_call.1} parent=1 // pred_region
      %61 = dma.done [#allocation7], 3072
    $region33: #{tpu_custom_call.1} parent=1 // pred_fallthru
      _
    %p63 = scmp.eq.s32.totalorder 0, 0
    // Predicated region
    $region34: #{tpu_custom_call.1} parent=1 // pred_check
      %p64 = pneg %p63
    $region35: #{tpu_custom_call.1} parent=1 // pred_check_branch
      %66 = sbr.rel (%p64) target = $region37
    $region36: #{tpu_custom_call.1} parent=1 // pred_region
      %67 = vst [vmem:[#allocation2] sm:$0xff] 0.0
      %68 = vst [vmem:[#allocation2 + $0x8] sm:$0xff] 0.0
    $region37: #{tpu_custom_call.1} parent=1 // pred_fallthru
      _
    %v69 = vld [vmem:[#allocation3] sm:$0xf]
    %v70 = vld [vmem:[#allocation3 + $0x4] sm:$0xf]
    %v71 = vld [vmem:[#allocation3 + $0x8] sm:$0xf]
    %v72 = vld [vmem:[#allocation3 + $0xc] sm:$0xf]
    %v73 = vld [vmem:[#allocation3 + $0x10] sm:$0xf]
    %v74 = vld [vmem:[#allocation3 + $0x14] sm:$0xf]
    %v75 = vld [vmem:[#allocation3 + $0x18] sm:$0xf]
    %v76 = vld [vmem:[#allocation3 + $0x1c] sm:$0xf]
    %v77 = vld [vmem:[#allocation3 + $0x20] sm:$0xf]
    %v78 = vld [vmem:[#allocation3 + $0x24] sm:$0xf]
    %v79 = vld [vmem:[#allocation3 + $0x28] sm:$0xf]
    %v80 = vld [vmem:[#allocation3 + $0x2c] sm:$0xf]
    %v81 = vld [vmem:[#allocation3 + $0x30] sm:$0xf]
    %v82 = vld [vmem:[#allocation3 + $0x34] sm:$0xf]
    %v83 = vld [vmem:[#allocation3 + $0x38] sm:$0xf]
    %v84 = vld [vmem:[#allocation3 + $0x3c] sm:$0xf]
    %v85 = vld [vmem:[#allocation3 + $0x40] sm:$0xf]
    %v86 = vld [vmem:[#allocation3 + $0x44] sm:$0xf]
    %v87 = vld [vmem:[#allocation3 + $0x48] sm:$0xf]
    %v88 = vld [vmem:[#allocation3 + $0x4c] sm:$0xf]
    %v89 = vld [vmem:[#allocation3 + $0x50] sm:$0xf]
    %v90 = vld [vmem:[#allocation3 + $0x54] sm:$0xf]
    %v91 = vld [vmem:[#allocation3 + $0x58] sm:$0xf]
    %v92 = vld [vmem:[#allocation3 + $0x5c] sm:$0xf]
    %v93 = vld [vmem:[#allocation3 + $0x60] sm:$0xf]
    %v94 = vld [vmem:[#allocation3 + $0x64] sm:$0xf]
    %v95 = vld [vmem:[#allocation3 + $0x68] sm:$0xf]
    %v96 = vld [vmem:[#allocation3 + $0x6c] sm:$0xf]
    %v97 = vld [vmem:[#allocation3 + $0x70] sm:$0xf]
    %v98 = vld [vmem:[#allocation3 + $0x74] sm:$0xf]
    %v99 = vld [vmem:[#allocation3 + $0x78] sm:$0xf]
    %v100 = vld [vmem:[#allocation3 + $0x7c] sm:$0xf]
    %v101 = vld [vmem:[#allocation6] sm:$0xff]
    %v102 = vld [vmem:[#allocation6 + $0x8] sm:$0xf]
    %v103 = vld [vmem:[#allocation6 + $0xc] sm:$0xff]
    %v104 = vld [vmem:[#allocation6 + $0x14] sm:$0xf]
    %v105 = vld [vmem:[#allocation6 + $0x18] sm:$0xff]
    %v106 = vld [vmem:[#allocation6 + $0x20] sm:$0xf]
    %v107 = vld [vmem:[#allocation6 + $0x24] sm:$0xff]
    %v108 = vld [vmem:[#allocation6 + $0x2c] sm:$0xf]
    %v109 = vld [vmem:[#allocation6 + $0x30] sm:$0xff]
    %v110 = vld [vmem:[#allocation6 + $0x38] sm:$0xf]
    %v111 = vld [vmem:[#allocation6 + $0x3c] sm:$0xff]
    %v112 = vld [vmem:[#allocation6 + $0x44] sm:$0xf]
    %v113 = vld [vmem:[#allocation6 + $0x48] sm:$0xff]
    %v114 = vld [vmem:[#allocation6 + $0x50] sm:$0xf]
    %v115 = vld [vmem:[#allocation6 + $0x54] sm:$0xff]
    %v116 = vld [vmem:[#allocation6 + $0x5c] sm:$0xf]
    %v117 = vld [vmem:[#allocation6 + $0x60] sm:$0xff]
    %v118 = vld [vmem:[#allocation6 + $0x68] sm:$0xf]
    %v119 = vld [vmem:[#allocation6 + $0x6c] sm:$0xff]
    %v120 = vld [vmem:[#allocation6 + $0x74] sm:$0xf]
    %v121 = vld [vmem:[#allocation6 + $0x78] sm:$0xff]
    %v122 = vld [vmem:[#allocation6 + $0x80] sm:$0xf]
    %v123 = vld [vmem:[#allocation6 + $0x84] sm:$0xff]
    %v124 = vld [vmem:[#allocation6 + $0x8c] sm:$0xf]
    %v125 = vld [vmem:[#allocation6 + $0x90] sm:$0xff]
    %v126 = vld [vmem:[#allocation6 + $0x98] sm:$0xf]
    %v127 = vld [vmem:[#allocation6 + $0x9c] sm:$0xff]
    %v128 = vld [vmem:[#allocation6 + $0xa4] sm:$0xf]
    %v129 = vld [vmem:[#allocation6 + $0xa8] sm:$0xff]
    %v130 = vld [vmem:[#allocation6 + $0xb0] sm:$0xf]
    %v131 = vld [vmem:[#allocation6 + $0xb4] sm:$0xff]
    %v132 = vld [vmem:[#allocation6 + $0xbc] sm:$0xf]
    %v133 = vld [vmem:[%s3] sm:$0x7]
    %v135 = vlaneseq
    %v136 = vshrl.u32 %v135, 7
    %v137 = vsub.s32 0, %v136
    %v138 = vrot.slane %v133, %v137
    %v139 = vlaneseq
    %v140 = vshrl.u32 %v139, 7
    %v141 = vsub.s32 1, %v140
    %v142 = vrot.slane %v133, %v141
    %v143 = vlaneseq
    %v144 = vshrl.u32 %v143, 7
    %v145 = vsub.s32 2, %v144
    %v146 = vrot.slane %v133, %v145
    %v182 = vunpack.c.l.b16 %v69
    %v183 = vunpack.c.l.b16 %v70
    %v184 = vunpack.c.l.b16 %v71
    %v185 = vunpack.c.l.b16 %v72
    %v186 = vunpack.c.l.b16 %v73
    %v187 = vunpack.c.l.b16 %v74
    %v188 = vunpack.c.l.b16 %v75
    %v189 = vunpack.c.l.b16 %v76
    %v190 = vunpack.c.l.b16 %v77
    %v191 = vunpack.c.l.b16 %v78
    %v192 = vunpack.c.l.b16 %v79
    %v193 = vunpack.c.l.b16 %v80
    %v194 = vunpack.c.l.b16 %v81
    %v195 = vunpack.c.l.b16 %v82
    %v196 = vunpack.c.l.b16 %v83
    %v197 = vunpack.c.l.b16 %v84
    %v198 = vunpack.c.l.b16 %v85
    %v199 = vunpack.c.l.b16 %v86
    %v200 = vunpack.c.l.b16 %v87
    %v201 = vunpack.c.l.b16 %v88
    %v202 = vunpack.c.l.b16 %v89
    %v203 = vunpack.c.l.b16 %v90
    %v204 = vunpack.c.l.b16 %v91
    %v205 = vunpack.c.l.b16 %v92
    %v206 = vunpack.c.l.b16 %v93
    %v207 = vunpack.c.l.b16 %v94
    %v208 = vunpack.c.l.b16 %v95
    %v209 = vunpack.c.l.b16 %v96
    %v210 = vunpack.c.l.b16 %v97
    %v211 = vunpack.c.l.b16 %v98
    %v212 = vunpack.c.l.b16 %v99
    %v213 = vunpack.c.l.b16 %v100
    %v214 = vpack.c.b16 %v183, %v182
    %v215 = vpack.c.b16 %v185, %v184
    %v216 = vpack.c.b16 %v187, %v186
    %v217 = vpack.c.b16 %v189, %v188
    %v218 = vpack.c.b16 %v191, %v190
    %v219 = vpack.c.b16 %v193, %v192
    %v220 = vpack.c.b16 %v195, %v194
    %v221 = vpack.c.b16 %v197, %v196
    %v222 = vpack.c.b16 %v199, %v198
    %v223 = vpack.c.b16 %v201, %v200
    %v224 = vpack.c.b16 %v203, %v202
    %v225 = vpack.c.b16 %v205, %v204
    %v226 = vpack.c.b16 %v207, %v206
    %v227 = vpack.c.b16 %v209, %v208
    %v228 = vpack.c.b16 %v211, %v210
    %v229 = vpack.c.b16 %v213, %v212
    %v278 = vunpack.c.l.b16 %v101
    %v279 = vunpack.c.h.b16 %v101
    %v280 = vunpack.c.l.b16 %v102
    %v281 = vunpack.c.l.b16 %v103
    %v282 = vunpack.c.h.b16 %v103
    %v283 = vunpack.c.l.b16 %v104
    %v284 = vunpack.c.l.b16 %v105
    %v285 = vunpack.c.h.b16 %v105
    %v286 = vunpack.c.l.b16 %v106
    %v287 = vunpack.c.l.b16 %v107
    %v288 = vunpack.c.h.b16 %v107
    %v289 = vunpack.c.l.b16 %v108
    %v290 = vunpack.c.l.b16 %v109
    %v291 = vunpack.c.h.b16 %v109
    %v292 = vunpack.c.l.b16 %v110
    %v293 = vunpack.c.l.b16 %v111
    %v294 = vunpack.c.h.b16 %v111
    %v295 = vunpack.c.l.b16 %v112
    %v296 = vunpack.c.l.b16 %v113
    %v297 = vunpack.c.h.b16 %v113
    %v298 = vunpack.c.l.b16 %v114
    %v299 = vunpack.c.l.b16 %v115
    %v300 = vunpack.c.h.b16 %v115
    %v301 = vunpack.c.l.b16 %v116
    %v302 = vunpack.c.l.b16 %v117
    %v303 = vunpack.c.h.b16 %v117
    %v304 = vunpack.c.l.b16 %v118
    %v305 = vunpack.c.l.b16 %v119
    %v306 = vunpack.c.h.b16 %v119
    %v307 = vunpack.c.l.b16 %v120
    %v308 = vunpack.c.l.b16 %v121
    %v309 = vunpack.c.h.b16 %v121
    %v310 = vunpack.c.l.b16 %v122
    %v311 = vunpack.c.l.b16 %v123
    %v312 = vunpack.c.h.b16 %v123
    %v313 = vunpack.c.l.b16 %v124
    %v314 = vunpack.c.l.b16 %v125
    %v315 = vunpack.c.h.b16 %v125
    %v316 = vunpack.c.l.b16 %v126
    %v317 = vunpack.c.l.b16 %v127
    %v318 = vunpack.c.h.b16 %v127
    %v319 = vunpack.c.l.b16 %v128
    %v320 = vunpack.c.l.b16 %v129
    %v321 = vunpack.c.h.b16 %v129
    %v322 = vunpack.c.l.b16 %v130
    %v323 = vunpack.c.l.b16 %v131
    %v324 = vunpack.c.h.b16 %v131
    %v325 = vunpack.c.l.b16 %v132
    %v326 = vpack.c.b16 %v281, %v278
    %v327 = vpack.c.b16 %v282, %v279
    %v328 = vpack.c.b16 %v283, %v280
    %v329 = vpack.c.b16 %v287, %v284
    %v330 = vpack.c.b16 %v288, %v285
    %v331 = vpack.c.b16 %v289, %v286
    %v332 = vpack.c.b16 %v293, %v290
    %v333 = vpack.c.b16 %v294, %v291
    %v334 = vpack.c.b16 %v295, %v292
    %v335 = vpack.c.b16 %v299, %v296
    %v336 = vpack.c.b16 %v300, %v297
    %v337 = vpack.c.b16 %v301, %v298
    %v338 = vpack.c.b16 %v305, %v302
    %v339 = vpack.c.b16 %v306, %v303
    %v340 = vpack.c.b16 %v307, %v304
    %v341 = vpack.c.b16 %v311, %v308
    %v342 = vpack.c.b16 %v312, %v309
    %v343 = vpack.c.b16 %v313, %v310
    %v344 = vpack.c.b16 %v317, %v314
    %v345 = vpack.c.b16 %v318, %v315
    %v346 = vpack.c.b16 %v319, %v316
    %v347 = vpack.c.b16 %v323, %v320
    %v348 = vpack.c.b16 %v324, %v321
    %v349 = vpack.c.b16 %v325, %v322
    %374 = vmatprep.subr.bf16.mxu0 %v327
    %375 = vmatpush1.bf16.msra.mxu0 %v326
    %376 = vmatprep.subr.bf16.mxu0 %v330
    %377 = vmatpush1.bf16.msra.mxu0 %v329
    %378 = vmatprep.subr.bf16.mxu0 %v333
    %379 = vmatpush1.bf16.msra.mxu0 %v332
    %380 = vmatprep.subr.bf16.mxu0 %v336
    %381 = vmatpush1.bf16.msra.mxu0 %v335
    %382 = vmatprep.subr.bf16.mxu0 %v339
    %383 = vmatpush1.bf16.msra.mxu0 %v338
    %384 = vmatprep.subr.bf16.mxu0 %v342
    %385 = vmatpush1.bf16.msra.mxu0 %v341
    %386 = vmatprep.subr.bf16.mxu0 %v345
    %387 = vmatpush1.bf16.msra.mxu0 %v344
    %388 = vmatprep.subr.bf16.mxu0 %v348
    %389 = vmatpush1.bf16.msra.mxu0 %v347
    %390 = vmatprep.subr.bf16.mxu0 0
    %391 = vmatpush1.bf16.msra.mxu0 0
    %392 = vmatprep.subr.bf16.mxu0 0
    %393 = vmatpush1.bf16.msra.mxu0 0
    %394 = vmatprep.subr.bf16.mxu0 0
    %395 = vmatpush1.bf16.msra.mxu0 0
    %396 = vmatprep.subr.bf16.mxu0 0
    %397 = vmatpush1.bf16.msra.mxu0 0
    %398 = vmatprep.subr.bf16.mxu0 0
    %399 = vmatpush1.bf16.msra.mxu0 0
    %400 = vmatprep.subr.bf16.mxu0 0
    %401 = vmatpush1.bf16.msra.mxu0 0
    %402 = vmatprep.subr.bf16.mxu0 0
    %403 = vmatpush1.bf16.msra.mxu0 0
    %404 = vmatprep.subr.bf16.mxu0 0
    %405 = vmatpush1.bf16.msra.mxu0 0
    %406 = vmatprep.mubr.bf16.mxu0 0
    %407 = vmatmul.mubr.bf16.gmra.mrb[0].mxu0 %v214
    %v408 = vpop.f32.mrb[0].mxu0
    %v409 = vadd.f32 %v138, %v408
    %v410 = vpop.f32.mrb[0].mxu0
    %v411 = vadd.f32 %v142, %v410
    %v412 = vpop.f32.mrb[0].mxu0
    %v413 = vadd.f32 %v138, %v412
    %v414 = vpop.f32.mrb[0].mxu0
    %v415 = vadd.f32 %v142, %v414
    %416 = vmatprep.mubr.bf16.mxu0 0
    %417 = vmatmul.mubr.bf16.gmra.mrb[0].mxu0 %v215
    %v418 = vpop.f32.mrb[0].mxu0
    %v419 = vadd.f32 %v138, %v418
    %v420 = vpop.f32.mrb[0].mxu0
    %v421 = vadd.f32 %v142, %v420
    %v422 = vpop.f32.mrb[0].mxu0
    %v423 = vadd.f32 %v138, %v422
    %v424 = vpop.f32.mrb[0].mxu0
    %v425 = vadd.f32 %v142, %v424
    %426 = vmatprep.mubr.bf16.mxu0 0
    %427 = vmatmul.mubr.bf16.gmra.mrb[0].mxu0 %v216
    %v428 = vpop.f32.mrb[0].mxu0
    %v429 = vadd.f32 %v138, %v428
    %v430 = vpop.f32.mrb[0].mxu0
    %v431 = vadd.f32 %v142, %v430
    %v432 = vpop.f32.mrb[0].mxu0
    %v433 = vadd.f32 %v138, %v432
    %v434 = vpop.f32.mrb[0].mxu0
    %v435 = vadd.f32 %v142, %v434
    %436 = vmatprep.mubr.bf16.mxu0 0
    %437 = vmatmul.mubr.bf16.gmra.mrb[0].mxu0 %v217
    %v438 = vpop.f32.mrb[0].mxu0
    %v439 = vadd.f32 %v138, %v438
    %v440 = vpop.f32.mrb[0].mxu0
    %v441 = vadd.f32 %v142, %v440
    %v442 = vpop.f32.mrb[0].mxu0
    %v443 = vadd.f32 %v138, %v442
    %v444 = vpop.f32.mrb[0].mxu0
    %v445 = vadd.f32 %v142, %v444
    %446 = vmatprep.mubr.bf16.mxu0 0
    %447 = vmatmul.mubr.bf16.gmra.mrb[0].mxu0 %v218
    %v448 = vpop.f32.mrb[0].mxu0
    %v449 = vadd.f32 %v138, %v448
    %v450 = vpop.f32.mrb[0].mxu0
    %v451 = vadd.f32 %v142, %v450
    %v452 = vpop.f32.mrb[0].mxu0
    %v453 = vadd.f32 %v138, %v452
    %v454 = vpop.f32.mrb[0].mxu0
    %v455 = vadd.f32 %v142, %v454
    %456 = vmatprep.mubr.bf16.mxu0 0
    %457 = vmatmul.mubr.bf16.gmra.mrb[0].mxu0 %v219
    %v458 = vpop.f32.mrb[0].mxu0
    %v459 = vadd.f32 %v138, %v458
    %v460 = vpop.f32.mrb[0].mxu0
    %v461 = vadd.f32 %v142, %v460
    %v462 = vpop.f32.mrb[0].mxu0
    %v463 = vadd.f32 %v138, %v462
    %v464 = vpop.f32.mrb[0].mxu0
    %v465 = vadd.f32 %v142, %v464
    %466 = vmatprep.mubr.bf16.mxu0 0
    %467 = vmatmul.mubr.bf16.gmra.mrb[0].mxu0 %v220
    %v468 = vpop.f32.mrb[0].mxu0
    %v469 = vadd.f32 %v138, %v468
    %v470 = vpop.f32.mrb[0].mxu0
    %v471 = vadd.f32 %v142, %v470
    %v472 = vpop.f32.mrb[0].mxu0
    %v473 = vadd.f32 %v138, %v472
    %v474 = vpop.f32.mrb[0].mxu0
    %v475 = vadd.f32 %v142, %v474
    %476 = vmatprep.mubr.bf16.mxu0 0
    %477 = vmatmul.mubr.bf16.gmra.mrb[0].mxu0 %v221
    %v478 = vpop.f32.mrb[0].mxu0
    %v479 = vadd.f32 %v138, %v478
    %v480 = vpop.f32.mrb[0].mxu0
    %v481 = vadd.f32 %v142, %v480
    %v482 = vpop.f32.mrb[0].mxu0
    %v483 = vadd.f32 %v138, %v482
    %v484 = vpop.f32.mrb[0].mxu0
    %v485 = vadd.f32 %v142, %v484
    %486 = vmatprep.mubr.bf16.mxu0 0
    %487 = vmatmul.mubr.bf16.gmra.mrb[0].mxu0 %v222
    %v488 = vpop.f32.mrb[0].mxu0
    %v489 = vadd.f32 %v138, %v488
    %v490 = vpop.f32.mrb[0].mxu0
    %v491 = vadd.f32 %v142, %v490
    %v492 = vpop.f32.mrb[0].mxu0
    %v493 = vadd.f32 %v138, %v492
    %v494 = vpop.f32.mrb[0].mxu0
    %v495 = vadd.f32 %v142, %v494
    %496 = vmatprep.mubr.bf16.mxu0 0
    %497 = vmatmul.mubr.bf16.gmra.mrb[0].mxu0 %v223
    %v498 = vpop.f32.mrb[0].mxu0
    %v499 = vadd.f32 %v138, %v498
    %v500 = vpop.f32.mrb[0].mxu0
    %v501 = vadd.f32 %v142, %v500
    %v502 = vpop.f32.mrb[0].mxu0
    %v503 = vadd.f32 %v138, %v502
    %v504 = vpop.f32.mrb[0].mxu0
    %v505 = vadd.f32 %v142, %v504
    %506 = vmatprep.mubr.bf16.mxu0 0
    %507 = vmatmul.mubr.bf16.gmra.mrb[0].mxu0 %v224
    %v508 = vpop.f32.mrb[0].mxu0
    %v509 = vadd.f32 %v138, %v508
    %v510 = vpop.f32.mrb[0].mxu0
    %v511 = vadd.f32 %v142, %v510
    %v512 = vpop.f32.mrb[0].mxu0
    %v513 = vadd.f32 %v138, %v512
    %v514 = vpop.f32.mrb[0].mxu0
    %v515 = vadd.f32 %v142, %v514
    %516 = vmatprep.mubr.bf16.mxu0 0
    %517 = vmatmul.mubr.bf16.gmra.mrb[0].mxu0 %v225
    %v518 = vpop.f32.mrb[0].mxu0
    %v519 = vadd.f32 %v138, %v518
    %v520 = vpop.f32.mrb[0].mxu0
    %v521 = vadd.f32 %v142, %v520
    %v522 = vpop.f32.mrb[0].mxu0
    %v523 = vadd.f32 %v138, %v522
    %v524 = vpop.f32.mrb[0].mxu0
    %v525 = vadd.f32 %v142, %v524
    %526 = vmatprep.mubr.bf16.mxu0 0
    %527 = vmatmul.mubr.bf16.gmra.mrb[0].mxu0 %v226
    %v528 = vpop.f32.mrb[0].mxu0
    %v529 = vadd.f32 %v138, %v528
    %v530 = vpop.f32.mrb[0].mxu0
    %v531 = vadd.f32 %v142, %v530
    %v532 = vpop.f32.mrb[0].mxu0
    %v533 = vadd.f32 %v138, %v532
    %v534 = vpop.f32.mrb[0].mxu0
    %v535 = vadd.f32 %v142, %v534
    %536 = vmatprep.mubr.bf16.mxu0 0
    %537 = vmatmul.mubr.bf16.gmra.mrb[0].mxu0 %v227
    %v538 = vpop.f32.mrb[0].mxu0
    %v539 = vadd.f32 %v138, %v538
    %v540 = vpop.f32.mrb[0].mxu0
    %v541 = vadd.f32 %v142, %v540
    %v542 = vpop.f32.mrb[0].mxu0
    %v543 = vadd.f32 %v138, %v542
    %v544 = vpop.f32.mrb[0].mxu0
    %v545 = vadd.f32 %v142, %v544
    %546 = vmatprep.mubr.bf16.mxu0 0
    %547 = vmatmul.mubr.bf16.gmra.mrb[0].mxu0 %v228
    %v548 = vpop.f32.mrb[0].mxu0
    %v549 = vadd.f32 %v138, %v548
    %v550 = vpop.f32.mrb[0].mxu0
    %v551 = vadd.f32 %v142, %v550
    %v552 = vpop.f32.mrb[0].mxu0
    %v553 = vadd.f32 %v138, %v552
    %v554 = vpop.f32.mrb[0].mxu0
    %v555 = vadd.f32 %v142, %v554
    %556 = vmatprep.mubr.bf16.mxu0 0
    %557 = vmatmul.mubr.bf16.gmra.mrb[0].mxu0 %v229
    %v558 = vpop.f32.mrb[0].mxu0
    %v559 = vadd.f32 %v138, %v558
    %v560 = vpop.f32.mrb[0].mxu0
    %v561 = vadd.f32 %v142, %v560
    %v562 = vpop.f32.mrb[0].mxu0
    %v563 = vadd.f32 %v138, %v562
    %v564 = vpop.f32.mrb[0].mxu0
    %v565 = vadd.f32 %v142, %v564
    %566 = vdwg.mxu0
    %567 = vmatprep.subr.bf16.mxu0 0
    %568 = vmatpush1.bf16.msra.mxu0 %v328
    %569 = vmatprep.subr.bf16.mxu0 0
    %570 = vmatpush1.bf16.msra.mxu0 %v331
    %571 = vmatprep.subr.bf16.mxu0 0
    %572 = vmatpush1.bf16.msra.mxu0 %v334
    %573 = vmatprep.subr.bf16.mxu0 0
    %574 = vmatpush1.bf16.msra.mxu0 %v337
    %575 = vmatprep.subr.bf16.mxu0 0
    %576 = vmatpush1.bf16.msra.mxu0 %v340
    %577 = vmatprep.subr.bf16.mxu0 0
    %578 = vmatpush1.bf16.msra.mxu0 %v343
    %579 = vmatprep.subr.bf16.mxu0 0
    %580 = vmatpush1.bf16.msra.mxu0 %v346
    %581 = vmatprep.subr.bf16.mxu0 0
    %582 = vmatpush1.bf16.msra.mxu0 %v349
    %583 = vmatprep.subr.bf16.mxu0 0
    %584 = vmatpush1.bf16.msra.mxu0 0
    %585 = vmatprep.subr.bf16.mxu0 0
    %586 = vmatpush1.bf16.msra.mxu0 0
    %587 = vmatprep.subr.bf16.mxu0 0
    %588 = vmatpush1.bf16.msra.mxu0 0
    %589 = vmatprep.subr.bf16.mxu0 0
    %590 = vmatpush1.bf16.msra.mxu0 0
    %591 = vmatprep.subr.bf16.mxu0 0
    %592 = vmatpush1.bf16.msra.mxu0 0
    %593 = vmatprep.subr.bf16.mxu0 0
    %594 = vmatpush1.bf16.msra.mxu0 0
    %595 = vmatprep.subr.bf16.mxu0 0
    %596 = vmatpush1.bf16.msra.mxu0 0
    %597 = vmatprep.subr.bf16.mxu0 0
    %598 = vmatpush1.bf16.msra.mxu0 0
    %599 = vmatprep.mubr.bf16.mxu0 0
    %600 = vmatmul.mubr.bf16.gmra.mrb[0].mxu0 %v214
    %v601 = vpop.f32.mrb[0].mxu0
    %v602 = vadd.f32 %v146, %v601
    %v603 = vpop.f32.mrb[0].mxu0
    %v604 = vpop.f32.mrb[0].mxu0
    %v605 = vadd.f32 %v146, %v604
    %v606 = vpop.f32.mrb[0].mxu0
    %607 = vmatprep.mubr.bf16.mxu0 0
    %608 = vmatmul.mubr.bf16.gmra.mrb[0].mxu0 %v215
    %v609 = vpop.f32.mrb[0].mxu0
    %v610 = vadd.f32 %v146, %v609
    %v611 = vpop.f32.mrb[0].mxu0
    %v612 = vpop.f32.mrb[0].mxu0
    %v613 = vadd.f32 %v146, %v612
    %v614 = vpop.f32.mrb[0].mxu0
    %615 = vmatprep.mubr.bf16.mxu0 0
    %616 = vmatmul.mubr.bf16.gmra.mrb[0].mxu0 %v216
    %v617 = vpop.f32.mrb[0].mxu0
    %v618 = vadd.f32 %v146, %v617
    %v619 = vpop.f32.mrb[0].mxu0
    %v620 = vpop.f32.mrb[0].mxu0
    %v621 = vadd.f32 %v146, %v620
    %v622 = vpop.f32.mrb[0].mxu0
    %623 = vmatprep.mubr.bf16.mxu0 0
    %624 = vmatmul.mubr.bf16.gmra.mrb[0].mxu0 %v217
    %v625 = vpop.f32.mrb[0].mxu0
    %v626 = vadd.f32 %v146, %v625
    %v627 = vpop.f32.mrb[0].mxu0
    %v628 = vpop.f32.mrb[0].mxu0
    %v629 = vadd.f32 %v146, %v628
    %v630 = vpop.f32.mrb[0].mxu0
    %631 = vmatprep.mubr.bf16.mxu0 0
    %632 = vmatmul.mubr.bf16.gmra.mrb[0].mxu0 %v218
    %v633 = vpop.f32.mrb[0].mxu0
    %v634 = vadd.f32 %v146, %v633
    %v635 = vpop.f32.mrb[0].mxu0
    %v636 = vpop.f32.mrb[0].mxu0
    %v637 = vadd.f32 %v146, %v636
    %v638 = vpop.f32.mrb[0].mxu0
    %639 = vmatprep.mubr.bf16.mxu0 0
    %640 = vmatmul.mubr.bf16.gmra.mrb[0].mxu0 %v219
    %v641 = vpop.f32.mrb[0].mxu0
    %v642 = vadd.f32 %v146, %v641
    %v643 = vpop.f32.mrb[0].mxu0
    %v644 = vpop.f32.mrb[0].mxu0
    %v645 = vadd.f32 %v146, %v644
    %v646 = vpop.f32.mrb[0].mxu0
    %647 = vmatprep.mubr.bf16.mxu0 0
    %648 = vmatmul.mubr.bf16.gmra.mrb[0].mxu0 %v220
    %v649 = vpop.f32.mrb[0].mxu0
    %v650 = vadd.f32 %v146, %v649
    %v651 = vpop.f32.mrb[0].mxu0
    %v652 = vpop.f32.mrb[0].mxu0
    %v653 = vadd.f32 %v146, %v652
    %v654 = vpop.f32.mrb[0].mxu0
    %655 = vmatprep.mubr.bf16.mxu0 0
    %656 = vmatmul.mubr.bf16.gmra.mrb[0].mxu0 %v221
    %v657 = vpop.f32.mrb[0].mxu0
    %v658 = vadd.f32 %v146, %v657
    %v659 = vpop.f32.mrb[0].mxu0
    %v660 = vpop.f32.mrb[0].mxu0
    %v661 = vadd.f32 %v146, %v660
    %v662 = vpop.f32.mrb[0].mxu0
    %663 = vmatprep.mubr.bf16.mxu0 0
    %664 = vmatmul.mubr.bf16.gmra.mrb[0].mxu0 %v222
    %v665 = vpop.f32.mrb[0].mxu0
    %v666 = vadd.f32 %v146, %v665
    %v667 = vpop.f32.mrb[0].mxu0
    %v668 = vpop.f32.mrb[0].mxu0
    %v669 = vadd.f32 %v146, %v668
    %v670 = vpop.f32.mrb[0].mxu0
    %671 = vmatprep.mubr.bf16.mxu0 0
    %672 = vmatmul.mubr.bf16.gmra.mrb[0].mxu0 %v223
    %v673 = vpop.f32.mrb[0].mxu0
    %v674 = vadd.f32 %v146, %v673
    %v675 = vpop.f32.mrb[0].mxu0
    %v676 = vpop.f32.mrb[0].mxu0
    %v677 = vadd.f32 %v146, %v676
    %v678 = vpop.f32.mrb[0].mxu0
    %679 = vmatprep.mubr.bf16.mxu0 0
    %680 = vmatmul.mubr.bf16.gmra.mrb[0].mxu0 %v224
    %v681 = vpop.f32.mrb[0].mxu0
    %v682 = vadd.f32 %v146, %v681
    %v683 = vpop.f32.mrb[0].mxu0
    %v684 = vpop.f32.mrb[0].mxu0
    %v685 = vadd.f32 %v146, %v684
    %v686 = vpop.f32.mrb[0].mxu0
    %687 = vmatprep.mubr.bf16.mxu0 0
    %688 = vmatmul.mubr.bf16.gmra.mrb[0].mxu0 %v225
    %v689 = vpop.f32.mrb[0].mxu0
    %v690 = vadd.f32 %v146, %v689
    %v691 = vpop.f32.mrb[0].mxu0
    %v692 = vpop.f32.mrb[0].mxu0
    %v693 = vadd.f32 %v146, %v692
    %v694 = vpop.f32.mrb[0].mxu0
    %695 = vmatprep.mubr.bf16.mxu0 0
    %696 = vmatmul.mubr.bf16.gmra.mrb[0].mxu0 %v226
    %v697 = vpop.f32.mrb[0].mxu0
    %v698 = vadd.f32 %v146, %v697
    %v699 = vpop.f32.mrb[0].mxu0
    %v700 = vpop.f32.mrb[0].mxu0
    %v701 = vadd.f32 %v146, %v700
    %v702 = vpop.f32.mrb[0].mxu0
    %703 = vmatprep.mubr.bf16.mxu0 0
    %704 = vmatmul.mubr.bf16.gmra.mrb[0].mxu0 %v227
    %v705 = vpop.f32.mrb[0].mxu0
    %v706 = vadd.f32 %v146, %v705
    %v707 = vpop.f32.mrb[0].mxu0
    %v708 = vpop.f32.mrb[0].mxu0
    %v709 = vadd.f32 %v146, %v708
    %v710 = vpop.f32.mrb[0].mxu0
    %711 = vmatprep.mubr.bf16.mxu0 0
    %712 = vmatmul.mubr.bf16.gmra.mrb[0].mxu0 %v228
    %v713 = vpop.f32.mrb[0].mxu0
    %v714 = vadd.f32 %v146, %v713
    %v715 = vpop.f32.mrb[0].mxu0
    %v716 = vpop.f32.mrb[0].mxu0
    %v717 = vadd.f32 %v146, %v716
    %v718 = vpop.f32.mrb[0].mxu0
    %719 = vmatprep.mubr.bf16.mxu0 0
    %720 = vmatmul.mubr.bf16.gmra.mrb[0].mxu0 %v229
    %v721 = vpop.f32.mrb[0].mxu0
    %v722 = vadd.f32 %v146, %v721
    %v723 = vpop.f32.mrb[0].mxu0
    %v724 = vpop.f32.mrb[0].mxu0
    %v725 = vadd.f32 %v146, %v724
    %v726 = vpop.f32.mrb[0].mxu0
    %727 = vdwg.mxu0
    %v728 = vld [vmem:[%s4] sm:$0x1]
    %v729 = vld [vmem:[#allocation2] sm:$0xff]
    %v730 = vld [vmem:[#allocation2 + $0x8] sm:$0xff]
    %v731 = vpack.c.bf16 %v730, %v729
    %v732 = vld [vmem:[#allocation8] sm:$0xff]
    %v733 = vld [vmem:[#allocation8 + $0x8] sm:$0xf]
    %v734 = vld [vmem:[#allocation8 + $0xc] sm:$0xff]
    %v735 = vld [vmem:[#allocation8 + $0x14] sm:$0xf]
    %v736 = vld [vmem:[#allocation8 + $0x18] sm:$0xff]
    %v737 = vld [vmem:[#allocation8 + $0x20] sm:$0xf]
    %v738 = vld [vmem:[#allocation8 + $0x24] sm:$0xff]
    %v739 = vld [vmem:[#allocation8 + $0x2c] sm:$0xf]
    %v740 = vld [vmem:[#allocation8 + $0x30] sm:$0xff]
    %v741 = vld [vmem:[#allocation8 + $0x38] sm:$0xf]
    %v742 = vld [vmem:[#allocation8 + $0x3c] sm:$0xff]
    %v743 = vld [vmem:[#allocation8 + $0x44] sm:$0xf]
    %v744 = vld [vmem:[#allocation8 + $0x48] sm:$0xff]
    %v745 = vld [vmem:[#allocation8 + $0x50] sm:$0xf]
    %v746 = vld [vmem:[#allocation8 + $0x54] sm:$0xff]
    %v747 = vld [vmem:[#allocation8 + $0x5c] sm:$0xf]
    %v748 = vld [vmem:[#allocation8 + $0x60] sm:$0xff]
    %v749 = vld [vmem:[#allocation8 + $0x68] sm:$0xf]
    %v750 = vld [vmem:[#allocation8 + $0x6c] sm:$0xff]
    %v751 = vld [vmem:[#allocation8 + $0x74] sm:$0xf]
    %v752 = vld [vmem:[#allocation8 + $0x78] sm:$0xff]
    %v753 = vld [vmem:[#allocation8 + $0x80] sm:$0xf]
    %v754 = vld [vmem:[#allocation8 + $0x84] sm:$0xff]
    %v755 = vld [vmem:[#allocation8 + $0x8c] sm:$0xf]
    %v756 = vld [vmem:[#allocation8 + $0x90] sm:$0xff]
    %v757 = vld [vmem:[#allocation8 + $0x98] sm:$0xf]
    %v758 = vld [vmem:[#allocation8 + $0x9c] sm:$0xff]
    %v759 = vld [vmem:[#allocation8 + $0xa4] sm:$0xf]
    %v760 = vld [vmem:[#allocation8 + $0xa8] sm:$0xff]
    %v761 = vld [vmem:[#allocation8 + $0xb0] sm:$0xf]
    %v762 = vld [vmem:[#allocation8 + $0xb4] sm:$0xff]
    %v763 = vld [vmem:[#allocation8 + $0xbc] sm:$0xf]
    %v796 = vunpack.c.l.b16 %v732
    %v797 = vunpack.c.h.b16 %v732
    %v798 = vunpack.c.l.b16 %v733
    %v799 = vunpack.c.l.b16 %v734
    %v800 = vunpack.c.h.b16 %v734
    %v801 = vunpack.c.l.b16 %v735
    %v802 = vunpack.c.l.b16 %v736
    %v803 = vunpack.c.h.b16 %v736
    %v804 = vunpack.c.l.b16 %v737
    %v805 = vunpack.c.l.b16 %v738
    %v806 = vunpack.c.h.b16 %v738
    %v807 = vunpack.c.l.b16 %v739
    %v808 = vunpack.c.l.b16 %v740
    %v809 = vunpack.c.h.b16 %v740
    %v810 = vunpack.c.l.b16 %v741
    %v811 = vunpack.c.l.b16 %v742
    %v812 = vunpack.c.h.b16 %v742
    %v813 = vunpack.c.l.b16 %v743
    %v814 = vunpack.c.l.b16 %v744
    %v815 = vunpack.c.h.b16 %v744
    %v816 = vunpack.c.l.b16 %v745
    %v817 = vunpack.c.l.b16 %v746
    %v818 = vunpack.c.h.b16 %v746
    %v819 = vunpack.c.l.b16 %v747
    %v820 = vunpack.c.l.b16 %v748
    %v821 = vunpack.c.h.b16 %v748
    %v822 = vunpack.c.l.b16 %v749
    %v823 = vunpack.c.l.b16 %v750
    %v824 = vunpack.c.h.b16 %v750
    %v825 = vunpack.c.l.b16 %v751
    %v826 = vunpack.c.l.b16 %v752
    %v827 = vunpack.c.h.b16 %v752
    %v828 = vunpack.c.l.b16 %v753
    %v829 = vunpack.c.l.b16 %v754
    %v830 = vunpack.c.h.b16 %v754
    %v831 = vunpack.c.l.b16 %v755
    %v832 = vunpack.c.l.b16 %v756
    %v833 = vunpack.c.h.b16 %v756
    %v834 = vunpack.c.l.b16 %v757
    %v835 = vunpack.c.l.b16 %v758
    %v836 = vunpack.c.h.b16 %v758
    %v837 = vunpack.c.l.b16 %v759
    %v838 = vunpack.c.l.b16 %v760
    %v839 = vunpack.c.h.b16 %v760
    %v840 = vunpack.c.l.b16 %v761
    %v841 = vunpack.c.l.b16 %v762
    %v842 = vunpack.c.h.b16 %v762
    %v843 = vunpack.c.l.b16 %v763
    %v844 = vpack.c.b16 %v799, %v796
    %v845 = vpack.c.b16 %v800, %v797
    %v846 = vpack.c.b16 %v801, %v798
    %v847 = vpack.c.b16 %v805, %v802
    %v848 = vpack.c.b16 %v806, %v803
    %v849 = vpack.c.b16 %v807, %v804
    %v850 = vpack.c.b16 %v811, %v808
    %v851 = vpack.c.b16 %v812, %v809
    %v852 = vpack.c.b16 %v813, %v810
    %v853 = vpack.c.b16 %v817, %v814
    %v854 = vpack.c.b16 %v818, %v815
    %v855 = vpack.c.b16 %v819, %v816
    %v856 = vpack.c.b16 %v823, %v820
    %v857 = vpack.c.b16 %v824, %v821
    %v858 = vpack.c.b16 %v825, %v822
    %v859 = vpack.c.b16 %v829, %v826
    %v860 = vpack.c.b16 %v830, %v827
    %v861 = vpack.c.b16 %v831, %v828
    %v862 = vpack.c.b16 %v835, %v832
    %v863 = vpack.c.b16 %v836, %v833
    %v864 = vpack.c.b16 %v837, %v834
    %v865 = vpack.c.b16 %v841, %v838
    %v866 = vpack.c.b16 %v842, %v839
    %v867 = vpack.c.b16 %v843, %v840
    %892 = vmatprep.subr.bf16.mxu0 %v845
    %893 = vmatpush1.bf16.msra.mxu0 %v844
    %894 = vmatprep.subr.bf16.mxu0 %v848
    %895 = vmatpush1.bf16.msra.mxu0 %v847
    %896 = vmatprep.subr.bf16.mxu0 %v851
    %897 = vmatpush1.bf16.msra.mxu0 %v850
    %898 = vmatprep.subr.bf16.mxu0 %v854
    %899 = vmatpush1.bf16.msra.mxu0 %v853
    %900 = vmatprep.subr.bf16.mxu0 %v857
    %901 = vmatpush1.bf16.msra.mxu0 %v856
    %902 = vmatprep.subr.bf16.mxu0 %v860
    %903 = vmatpush1.bf16.msra.mxu0 %v859
    %904 = vmatprep.subr.bf16.mxu0 %v863
    %905 = vmatpush1.bf16.msra.mxu0 %v862
    %906 = vmatprep.subr.bf16.mxu0 %v866
    %907 = vmatpush1.bf16.msra.mxu0 %v865
    %908 = vmatprep.subr.bf16.mxu0 0
    %909 = vmatpush1.bf16.msra.mxu0 0
    %910 = vmatprep.subr.bf16.mxu0 0
    %911 = vmatpush1.bf16.msra.mxu0 0
    %912 = vmatprep.subr.bf16.mxu0 0
    %913 = vmatpush1.bf16.msra.mxu0 0
    %914 = vmatprep.subr.bf16.mxu0 0
    %915 = vmatpush1.bf16.msra.mxu0 0
    %916 = vmatprep.subr.bf16.mxu0 0
    %917 = vmatpush1.bf16.msra.mxu0 0
    %918 = vmatprep.subr.bf16.mxu0 0
    %919 = vmatpush1.bf16.msra.mxu0 0
    %920 = vmatprep.subr.bf16.mxu0 0
    %921 = vmatpush1.bf16.msra.mxu0 0
    %922 = vmatprep.subr.bf16.mxu0 0
    %923 = vmatpush1.bf16.msra.mxu0 0
    %924 = vmatprep.mubr.bf16.mxu0 0
    %925 = vmatmul.mubr.bf16.gmra.mrb[0].mxu0 %v731
    %v926 = vpop.f32.mrb[0].mxu0
    %v927 = vadd.f32 0.0, %v926
    %v928 = vpop.f32.mrb[0].mxu0
    %v929 = vadd.f32 0.0, %v928
    %v930 = vpop.f32.mrb[0].mxu0
    %v931 = vadd.f32 0.0, %v930
    %v932 = vpop.f32.mrb[0].mxu0
    %v933 = vadd.f32 0.0, %v932
    %934 = vdwg.mxu0
    %935 = vmatprep.subr.bf16.mxu0 0
    %936 = vmatpush1.bf16.msra.mxu0 %v846
    %937 = vmatprep.subr.bf16.mxu0 0
    %938 = vmatpush1.bf16.msra.mxu0 %v849
    %939 = vmatprep.subr.bf16.mxu0 0
    %940 = vmatpush1.bf16.msra.mxu0 %v852
    %941 = vmatprep.subr.bf16.mxu0 0
    %942 = vmatpush1.bf16.msra.mxu0 %v855
    %943 = vmatprep.subr.bf16.mxu0 0
    %944 = vmatpush1.bf16.msra.mxu0 %v858
    %945 = vmatprep.subr.bf16.mxu0 0
    %946 = vmatpush1.bf16.msra.mxu0 %v861
    %947 = vmatprep.subr.bf16.mxu0 0
    %948 = vmatpush1.bf16.msra.mxu0 %v864
    %949 = vmatprep.subr.bf16.mxu0 0
    %950 = vmatpush1.bf16.msra.mxu0 %v867
    %951 = vmatprep.subr.bf16.mxu0 0
    %952 = vmatpush1.bf16.msra.mxu0 0
    %953 = vmatprep.subr.bf16.mxu0 0
    %954 = vmatpush1.bf16.msra.mxu0 0
    %955 = vmatprep.subr.bf16.mxu0 0
    %956 = vmatpush1.bf16.msra.mxu0 0
    %957 = vmatprep.subr.bf16.mxu0 0
    %958 = vmatpush1.bf16.msra.mxu0 0
    %959 = vmatprep.subr.bf16.mxu0 0
    %960 = vmatpush1.bf16.msra.mxu0 0
    %961 = vmatprep.subr.bf16.mxu0 0
    %962 = vmatpush1.bf16.msra.mxu0 0
    %963 = vmatprep.subr.bf16.mxu0 0
    %964 = vmatpush1.bf16.msra.mxu0 0
    %965 = vmatprep.subr.bf16.mxu0 0
    %966 = vmatpush1.bf16.msra.mxu0 0
    %967 = vmatprep.mubr.bf16.mxu0 0
    %968 = vmatmul.mubr.bf16.gmra.mrb[0].mxu0 %v731
    %v969 = vpop.f32.mrb[0].mxu0
    %v970 = vadd.f32 0.0, %v969
    %v971 = vpop.f32.mrb[0].mxu0
    %v972 = vpop.f32.mrb[0].mxu0
    %v973 = vadd.f32 0.0, %v972
    %v974 = vpop.f32.mrb[0].mxu0
    %975 = vdwg.mxu0
    %v976 = vadd.f32 %v409, %v927
    %v977 = vadd.f32 %v413, %v931
    %v978 = vxor.u32 %v976, 2147483648
    %v979 = vxor.u32 %v977, 2147483648
    %v980 = vmul.f32 %v978, 1.442695
    %v981 = vpow.pop %v980
    %v982 = vmul.f32 %v979, 1.442695
    %v983 = vpow.pop %v982
    %v984 = vadd.f32 %v981, 1.0
    %v985 = vadd.f32 %v983, 1.0
    %v986 = vrcp.pop %v984
    %v987 = vmul.f32 1.0, %v986
    %v988 = vrcp.pop %v985
    %v989 = vmul.f32 1.0, %v988
    %v990 = vadd.f32 %v411, %v929
    %v991 = vadd.f32 %v415, %v933
    %v992 = vxor.u32 %v990, 2147483648
    %v993 = vxor.u32 %v991, 2147483648
    %v994 = vmul.f32 %v992, 1.442695
    %v995 = vpow.pop %v994
    %v996 = vmul.f32 %v993, 1.442695
    %v997 = vpow.pop %v996
    %v998 = vadd.f32 %v995, 1.0
    %v999 = vadd.f32 %v997, 1.0
    %v1000 = vrcp.pop %v998
    %v1001 = vmul.f32 1.0, %v1000
    %v1002 = vrcp.pop %v999
    %v1003 = vmul.f32 1.0, %v1002
    %v1005 = vlaneseq
    %v1006 = vshrl.u32 %v1005, 7
    %v1007 = vsub.s32 0, %v1006
    %v1008 = vrot.slane %v728, %v1007
    %v1010 = vadd.f32 %v970, %v1008
    %v1011 = vadd.f32 %v973, %v1008
    %v1012 = vmul.f32 %v987, %v1010
    %v1013 = vmul.f32 %v989, %v1011
    %v1014 = vadd.f32 %v602, %v1012
    %v1015 = vadd.f32 %v605, %v1013
    %v1016 = vtanh.pop %v1014
    %v1017 = vtanh.pop %v1015
    %v1018 = vsub.f32 %v729, %v1016
    %v1019 = vsub.f32 %v730, %v1017
    %v1020 = vmul.f32 %v1001, %v1018
    %v1021 = vmul.f32 %v1003, %v1019
    %v1022 = vadd.f32 %v1016, %v1020
    %v1023 = vadd.f32 %v1017, %v1021
    %v1024 = vpack.c.bf16 %v1023, %v1022
    %v1026 = vunpack.c.l.b16 %v1024
    %v1027 = vunpack.c.h.b16 %v1024
    %v1028 = vpack.c.b16 %v1026, %v1026
    %v1029 = vpack.c.b16 %v1027, %v1027
    %1032 = vst [vmem:[#allocation9] sm:$0xf] %v1028
    %1033 = vst [vmem:[#allocation9 + $0x4] sm:$0xf] %v1029
    %v1034 = vld [vmem:[#allocation8] sm:$0xff]
    %v1035 = vld [vmem:[#allocation8 + $0x8] sm:$0xf]
    %v1036 = vld [vmem:[#allocation8 + $0xc] sm:$0xff]
    %v1037 = vld [vmem:[#allocation8 + $0x14] sm:$0xf]
    %v1038 = vld [vmem:[#allocation8 + $0x18] sm:$0xff]
    %v1039 = vld [vmem:[#allocation8 + $0x20] sm:$0xf]
    %v1040 = vld [vmem:[#allocation8 + $0x24] sm:$0xff]
    %v1041 = vld [vmem:[#allocation8 + $0x2c] sm:$0xf]
    %v1042 = vld [vmem:[#allocation8 + $0x30] sm:$0xff]
    %v1043 = vld [vmem:[#allocation8 + $0x38] sm:$0xf]
    %v1044 = vld [vmem:[#allocation8 + $0x3c] sm:$0xff]
    %v1045 = vld [vmem:[#allocation8 + $0x44] sm:$0xf]
    %v1046 = vld [vmem:[#allocation8 + $0x48] sm:$0xff]
    %v1047 = vld [vmem:[#allocation8 + $0x50] sm:$0xf]
    %v1048 = vld [vmem:[#allocation8 + $0x54] sm:$0xff]
    %v1049 = vld [vmem:[#allocation8 + $0x5c] sm:$0xf]
    %v1050 = vld [vmem:[#allocation8 + $0x60] sm:$0xff]
    %v1051 = vld [vmem:[#allocation8 + $0x68] sm:$0xf]
    %v1052 = vld [vmem:[#allocation8 + $0x6c] sm:$0xff]
    %v1053 = vld [vmem:[#allocation8 + $0x74] sm:$0xf]
    %v1054 = vld [vmem:[#allocation8 + $0x78] sm:$0xff]
    %v1055 = vld [vmem:[#allocation8 + $0x80] sm:$0xf]
    %v1056 = vld [vmem:[#allocation8 + $0x84] sm:$0xff]
    %v1057 = vld [vmem:[#allocation8 + $0x8c] sm:$0xf]
    %v1058 = vld [vmem:[#allocation8 + $0x90] sm:$0xff]
    %v1059 = vld [vmem:[#allocation8 + $0x98] sm:$0xf]
    %v1060 = vld [vmem:[#allocation8 + $0x9c] sm:$0xff]
    %v1061 = vld [vmem:[#allocation8 + $0xa4] sm:$0xf]
    %v1062 = vld [vmem:[#allocation8 + $0xa8] sm:$0xff]
    %v1063 = vld [vmem:[#allocation8 + $0xb0] sm:$0xf]
    %v1064 = vld [vmem:[#allocation8 + $0xb4] sm:$0xff]
    %v1065 = vld [vmem:[#allocation8 + $0xbc] sm:$0xf]
    %v1098 = vunpack.c.l.b16 %v1034
    %v1099 = vunpack.c.h.b16 %v1034
    %v1100 = vunpack.c.l.b16 %v1035
    %v1101 = vunpack.c.l.b16 %v1036
    %v1102 = vunpack.c.h.b16 %v1036
    %v1103 = vunpack.c.l.b16 %v1037
    %v1104 = vunpack.c.l.b16 %v1038
    %v1105 = vunpack.c.h.b16 %v1038
    %v1106 = vunpack.c.l.b16 %v1039
    %v1107 = vunpack.c.l.b16 %v1040
    %v1108 = vunpack.c.h.b16 %v1040
    %v1109 = vunpack.c.l.b16 %v1041
    %v1110 = vunpack.c.l.b16 %v1042
    %v1111 = vunpack.c.h.b16 %v1042
    %v1112 = vunpack.c.l.b16 %v1043
    %v1113 = vunpack.c.l.b16 %v1044
    %v1114 = vunpack.c.h.b16 %v1044
    %v1115 = vunpack.c.l.b16 %v1045
    %v1116 = vunpack.c.l.b16 %v1046
    %v1117 = vunpack.c.h.b16 %v1046
    %v1118 = vunpack.c.l.b16 %v1047
    %v1119 = vunpack.c.l.b16 %v1048
    %v1120 = vunpack.c.h.b16 %v1048
    %v1121 = vunpack.c.l.b16 %v1049
    %v1122 = vunpack.c.l.b16 %v1050
    %v1123 = vunpack.c.h.b16 %v1050
    %v1124 = vunpack.c.l.b16 %v1051
    %v1125 = vunpack.c.l.b16 %v1052
    %v1126 = vunpack.c.h.b16 %v1052
    %v1127 = vunpack.c.l.b16 %v1053
    %v1128 = vunpack.c.l.b16 %v1054
    %v1129 = vunpack.c.h.b16 %v1054
    %v1130 = vunpack.c.l.b16 %v1055
    %v1131 = vunpack.c.l.b16 %v1056
    %v1132 = vunpack.c.h.b16 %v1056
    %v1133 = vunpack.c.l.b16 %v1057
    %v1134 = vunpack.c.l.b16 %v1058
    %v1135 = vunpack.c.h.b16 %v1058
    %v1136 = vunpack.c.l.b16 %v1059
    %v1137 = vunpack.c.l.b16 %v1060
    %v1138 = vunpack.c.h.b16 %v1060
    %v1139 = vunpack.c.l.b16 %v1061
    %v1140 = vunpack.c.l.b16 %v1062
    %v1141 = vunpack.c.h.b16 %v1062
    %v1142 = vunpack.c.l.b16 %v1063
    %v1143 = vunpack.c.l.b16 %v1064
    %v1144 = vunpack.c.h.b16 %v1064
    %v1145 = vunpack.c.l.b16 %v1065
    %v1146 = vpack.c.b16 %v1101, %v1098
    %v1147 = vpack.c.b16 %v1102, %v1099
    %v1148 = vpack.c.b16 %v1103, %v1100
    %v1149 = vpack.c.b16 %v1107, %v1104
    %v1150 = vpack.c.b16 %v1108, %v1105
    %v1151 = vpack.c.b16 %v1109, %v1106
    %v1152 = vpack.c.b16 %v1113, %v1110
    %v1153 = vpack.c.b16 %v1114, %v1111
    %v1154 = vpack.c.b16 %v1115, %v1112
    %v1155 = vpack.c.b16 %v1119, %v1116
    %v1156 = vpack.c.b16 %v1120, %v1117
    %v1157 = vpack.c.b16 %v1121, %v1118
    %v1158 = vpack.c.b16 %v1125, %v1122
    %v1159 = vpack.c.b16 %v1126, %v1123
    %v1160 = vpack.c.b16 %v1127, %v1124
    %v1161 = vpack.c.b16 %v1131, %v1128
    %v1162 = vpack.c.b16 %v1132, %v1129
    %v1163 = vpack.c.b16 %v1133, %v1130
    %v1164 = vpack.c.b16 %v1137, %v1134
    %v1165 = vpack.c.b16 %v1138, %v1135
    %v1166 = vpack.c.b16 %v1139, %v1136
    %v1167 = vpack.c.b16 %v1143, %v1140
    %v1168 = vpack.c.b16 %v1144, %v1141
    %v1169 = vpack.c.b16 %v1145, %v1142
    %1194 = vmatprep.subr.bf16.mxu0 %v1147
    %1195 = vmatpush1.bf16.msra.mxu0 %v1146
    %1196 = vmatprep.subr.bf16.mxu0 %v1150
    %1197 = vmatpush1.bf16.msra.mxu0 %v1149
    %1198 = vmatprep.subr.bf16.mxu0 %v1153
    %1199 = vmatpush1.bf16.msra.mxu0 %v1152
    %1200 = vmatprep.subr.bf16.mxu0 %v1156
    %1201 = vmatpush1.bf16.msra.mxu0 %v1155
    %1202 = vmatprep.subr.bf16.mxu0 %v1159
    %1203 = vmatpush1.bf16.msra.mxu0 %v1158
    %1204 = vmatprep.subr.bf16.mxu0 %v1162
    %1205 = vmatpush1.bf16.msra.mxu0 %v1161
    %1206 = vmatprep.subr.bf16.mxu0 %v1165
    %1207 = vmatpush1.bf16.msra.mxu0 %v1164
    %1208 = vmatprep.subr.bf16.mxu0 %v1168
    %1209 = vmatpush1.bf16.msra.mxu0 %v1167
    %1210 = vmatprep.subr.bf16.mxu0 0
    %1211 = vmatpush1.bf16.msra.mxu0 0
    %1212 = vmatprep.subr.bf16.mxu0 0
    %1213 = vmatpush1.bf16.msra.mxu0 0
    %1214 = vmatprep.subr.bf16.mxu0 0
    %1215 = vmatpush1.bf16.msra.mxu0 0
    %1216 = vmatprep.subr.bf16.mxu0 0
    %1217 = vmatpush1.bf16.msra.mxu0 0
    %1218 = vmatprep.subr.bf16.mxu0 0
    %1219 = vmatpush1.bf16.msra.mxu0 0
    %1220 = vmatprep.subr.bf16.mxu0 0
    %1221 = vmatpush1.bf16.msra.mxu0 0
    %1222 = vmatprep.subr.bf16.mxu0 0
    %1223 = vmatpush1.bf16.msra.mxu0 0
    %1224 = vmatprep.subr.bf16.mxu0 0
    %1225 = vmatpush1.bf16.msra.mxu0 0
    %1226 = vmatprep.mubr.bf16.mxu0 0
    %1227 = vmatmul.mubr.bf16.gmra.mrb[0].mxu0 %v1024
    %v1228 = vpop.f32.mrb[0].mxu0
    %v1229 = vadd.f32 0.0, %v1228
    %v1230 = vpop.f32.mrb[0].mxu0
    %v1231 = vadd.f32 0.0, %v1230
    %v1232 = vpop.f32.mrb[0].mxu0
    %v1233 = vadd.f32 0.0, %v1232
    %v1234 = vpop.f32.mrb[0].mxu0
    %v1235 = vadd.f32 0.0, %v1234
    %1236 = vdwg.mxu0
    %1237 = vmatprep.subr.bf16.mxu0 0
    %1238 = vmatpush1.bf16.msra.mxu0 %v1148
    %1239 = vmatprep.subr.bf16.mxu0 0
    %1240 = vmatpush1.bf16.msra.mxu0 %v1151
    %1241 = vmatprep.subr.bf16.mxu0 0
    %1242 = vmatpush1.bf16.msra.mxu0 %v1154
    %1243 = vmatprep.subr.bf16.mxu0 0
    %1244 = vmatpush1.bf16.msra.mxu0 %v1157
    %1245 = vmatprep.subr.bf16.mxu0 0
    %1246 = vmatpush1.bf16.msra.mxu0 %v1160
    %1247 = vmatprep.subr.bf16.mxu0 0
    %1248 = vmatpush1.bf16.msra.mxu0 %v1163
    %1249 = vmatprep.subr.bf16.mxu0 0
    %1250 = vmatpush1.bf16.msra.mxu0 %v1166
    %1251 = vmatprep.subr.bf16.mxu0 0
    %1252 = vmatpush1.bf16.msra.mxu0 %v1169
    %1253 = vmatprep.subr.bf16.mxu0 0
    %1254 = vmatpush1.bf16.msra.mxu0 0
    %1255 = vmatprep.subr.bf16.mxu0 0
    %1256 = vmatpush1.bf16.msra.mxu0 0
    %1257 = vmatprep.subr.bf16.mxu0 0
    %1258 = vmatpush1.bf16.msra.mxu0 0
    %1259 = vmatprep.subr.bf16.mxu0 0
    %1260 = vmatpush1.bf16.msra.mxu0 0
    %1261 = vmatprep.subr.bf16.mxu0 0
    %1262 = vmatpush1.bf16.msra.mxu0 0
    %1263 = vmatprep.subr.bf16.mxu0 0
    %1264 = vmatpush1.bf16.msra.mxu0 0
    %1265 = vmatprep.subr.bf16.mxu0 0
    %1266 = vmatpush1.bf16.msra.mxu0 0
    %1267 = vmatprep.subr.bf16.mxu0 0
    %1268 = vmatpush1.bf16.msra.mxu0 0
    %1269 = vmatprep.mubr.bf16.mxu0 0
    %1270 = vmatmul.mubr.bf16.gmra.mrb[0].mxu0 %v1024
    %v1271 = vpop.f32.mrb[0].mxu0
    %v1272 = vadd.f32 0.0, %v1271
    %v1273 = vpop.f32.mrb[0].mxu0
    %v1274 = vpop.f32.mrb[0].mxu0
    %v1275 = vadd.f32 0.0, %v1274
    %v1276 = vpop.f32.mrb[0].mxu0
    %1277 = vdwg.mxu0
    %v1278 = vadd.f32 %v419, %v1229
    %v1279 = vadd.f32 %v423, %v1233
    %v1280 = vxor.u32 %v1278, 2147483648
    %v1281 = vxor.u32 %v1279, 2147483648
    %v1282 = vmul.f32 %v1280, 1.442695
    %v1283 = vpow.pop %v1282
    %v1284 = vmul.f32 %v1281, 1.442695
    %v1285 = vpow.pop %v1284
    %v1286 = vadd.f32 %v1283, 1.0
    %v1287 = vadd.f32 %v1285, 1.0
    %v1288 = vrcp.pop %v1286
    %v1289 = vmul.f32 1.0, %v1288
    %v1290 = vrcp.pop %v1287
    %v1291 = vmul.f32 1.0, %v1290
    %v1292 = vadd.f32 %v421, %v1231
    %v1293 = vadd.f32 %v425, %v1235
    %v1294 = vxor.u32 %v1292, 2147483648
    %v1295 = vxor.u32 %v1293, 2147483648
    %v1296 = vmul.f32 %v1294, 1.442695
    %v1297 = vpow.pop %v1296
    %v1298 = vmul.f32 %v1295, 1.442695
    %v1299 = vpow.pop %v1298
    %v1300 = vadd.f32 %v1297, 1.0
    %v1301 = vadd.f32 %v1299, 1.0
    %v1302 = vrcp.pop %v1300
    %v1303 = vmul.f32 1.0, %v1302
    %v1304 = vrcp.pop %v1301
    %v1305 = vmul.f32 1.0, %v1304
    %v1306 = vadd.f32 %v1272, %v1008
    %v1307 = vadd.f32 %v1275, %v1008
    %v1308 = vmul.f32 %v1289, %v1306
    %v1309 = vmul.f32 %v1291, %v1307
    %v1310 = vadd.f32 %v610, %v1308
    %v1311 = vadd.f32 %v613, %v1309
    %v1312 = vtanh.pop %v1310
    %v1313 = vtanh.pop %v1311
    %v1314 = vsub.f32 %v1022, %v1312
    %v1315 = vsub.f32 %v1023, %v1313
    %v1316 = vmul.f32 %v1303, %v1314
    %v1317 = vmul.f32 %v1305, %v1315
    %v1318 = vadd.f32 %v1312, %v1316
    %v1319 = vadd.f32 %v1313, %v1317
    %v1320 = vpack.c.bf16 %v1319, %v1318
    %v1322 = vunpack.c.l.b16 %v1320
    %v1323 = vunpack.c.h.b16 %v1320
    %v1324 = vpack.c.b16 %v1322, %v1322
    %v1325 = vpack.c.b16 %v1323, %v1323
    %s1328 = scalar_lea.vmem [#allocation9], 8
    %1329 = vst [vmem:[%s1328] sm:$0xf] %v1324
    %1330 = vst [vmem:[%s1328 + $0x4] sm:$0xf] %v1325
    %v1331 = vld [vmem:[#allocation8] sm:$0xff]
    %v1332 = vld [vmem:[#allocation8 + $0x8] sm:$0xf]
    %v1333 = vld [vmem:[#allocation8 + $0xc] sm:$0xff]
    %v1334 = vld [vmem:[#allocation8 + $0x14] sm:$0xf]
    %v1335 = vld [vmem:[#allocation8 + $0x18] sm:$0xff]
    %v1336 = vld [vmem:[#allocation8 + $0x20] sm:$0xf]
    %v1337 = vld [vmem:[#allocation8 + $0x24] sm:$0xff]
    %v1338 = vld [vmem:[#allocation8 + $0x2c] sm:$0xf]
    %v1339 = vld [vmem:[#allocation8 + $0x30] sm:$0xff]
    %v1340 = vld [vmem:[#allocation8 + $0x38] sm:$0xf]
    %v1341 = vld [vmem:[#allocation8 + $0x3c] sm:$0xff]
    %v1342 = vld [vmem:[#allocation8 + $0x44] sm:$0xf]
    %v1343 = vld [vmem:[#allocation8 + $0x48] sm:$0xff]
    %v1344 = vld [vmem:[#allocation8 + $0x50] sm:$0xf]
    %v1345 = vld [vmem:[#allocation8 + $0x54] sm:$0xff]
    %v1346 = vld [vmem:[#allocation8 + $0x5c] sm:$0xf]
    %v1347 = vld [vmem:[#allocation8 + $0x60] sm:$0xff]
    %v1348 = vld [vmem:[#allocation8 + $0x68] sm:$0xf]
    %v1349 = vld [vmem:[#allocation8 + $0x6c] sm:$0xff]
    %v1350 = vld [vmem:[#allocation8 + $0x74] sm:$0xf]
    %v1351 = vld [vmem:[#allocation8 + $0x78] sm:$0xff]
    %v1352 = vld [vmem:[#allocation8 + $0x80] sm:$0xf]
    %v1353 = vld [vmem:[#allocation8 + $0x84] sm:$0xff]
    %v1354 = vld [vmem:[#allocation8 + $0x8c] sm:$0xf]
    %v1355 = vld [vmem:[#allocation8 + $0x90] sm:$0xff]
    %v1356 = vld [vmem:[#allocation8 + $0x98] sm:$0xf]
    %v1357 = vld [vmem:[#allocation8 + $0x9c] sm:$0xff]
    %v1358 = vld [vmem:[#allocation8 + $0xa4] sm:$0xf]
    %v1359 = vld [vmem:[#allocation8 + $0xa8] sm:$0xff]
    %v1360 = vld [vmem:[#allocation8 + $0xb0] sm:$0xf]
    %v1361 = vld [vmem:[#allocation8 + $0xb4] sm:$0xff]
    %v1362 = vld [vmem:[#allocation8 + $0xbc] sm:$0xf]
    %v1395 = vunpack.c.l.b16 %v1331
    %v1396 = vunpack.c.h.b16 %v1331
    %v1397 = vunpack.c.l.b16 %v1332
    %v1398 = vunpack.c.l.b16 %v1333
    %v1399 = vunpack.c.h.b16 %v1333
    %v1400 = vunpack.c.l.b16 %v1334
    %v1401 = vunpack.c.l.b16 %v1335
    %v1402 = vunpack.c.h.b16 %v1335
    %v1403 = vunpack.c.l.b16 %v1336
    %v1404 = vunpack.c.l.b16 %v1337
    %v1405 = vunpack.c.h.b16 %v1337
    %v1406 = vunpack.c.l.b16 %v1338
    %v1407 = vunpack.c.l.b16 %v1339
    %v1408 = vunpack.c.h.b16 %v1339
    %v1409 = vunpack.c.l.b16 %v1340
    %v1410 = vunpack.c.l.b16 %v1341
    %v1411 = vunpack.c.h.b16 %v1341
    %v1412 = vunpack.c.l.b16 %v1342
    %v1413 = vunpack.c.l.b16 %v1343
    %v1414 = vunpack.c.h.b16 %v1343
    %v1415 = vunpack.c.l.b16 %v1344
    %v1416 = vunpack.c.l.b16 %v1345
    %v1417 = vunpack.c.h.b16 %v1345
    %v1418 = vunpack.c.l.b16 %v1346
    %v1419 = vunpack.c.l.b16 %v1347
    %v1420 = vunpack.c.h.b16 %v1347
    %v1421 = vunpack.c.l.b16 %v1348
    %v1422 = vunpack.c.l.b16 %v1349
    %v1423 = vunpack.c.h.b16 %v1349
    %v1424 = vunpack.c.l.b16 %v1350
    %v1425 = vunpack.c.l.b16 %v1351
    %v1426 = vunpack.c.h.b16 %v1351
    %v1427 = vunpack.c.l.b16 %v1352
    %v1428 = vunpack.c.l.b16 %v1353
    %v1429 = vunpack.c.h.b16 %v1353
    %v1430 = vunpack.c.l.b16 %v1354
    %v1431 = vunpack.c.l.b16 %v1355
    %v1432 = vunpack.c.h.b16 %v1355
    %v1433 = vunpack.c.l.b16 %v1356
    %v1434 = vunpack.c.l.b16 %v1357
    %v1435 = vunpack.c.h.b16 %v1357
    %v1436 = vunpack.c.l.b16 %v1358
    %v1437 = vunpack.c.l.b16 %v1359
    %v1438 = vunpack.c.h.b16 %v1359
    %v1439 = vunpack.c.l.b16 %v1360
    %v1440 = vunpack.c.l.b16 %v1361
    %v1441 = vunpack.c.h.b16 %v1361
    %v1442 = vunpack.c.l.b16 %v1362
    %v1443 = vpack.c.b16 %v1398, %v1395
    %v1444 = vpack.c.b16 %v1399, %v1396
    %v1445 = vpack.c.b16 %v1400, %v1397
    %v1446 = vpack.c.b16 %v1404, %v1401
    %v1447 = vpack.c.b16 %v1405, %v1402
    %v1448 = vpack.c.b16 %v1406, %v1403
    %v1449 = vpack.c.b16 %v1410, %v1407
    %v1450 = vpack.c.b16 %v1411, %v1408
    %v1451 = vpack.c.b16 %v1412, %v1409
    %v1452 = vpack.c.b16 %v1416, %v1413
    %v1453 = vpack.c.b16 %v1417, %v1414
    %v1454 = vpack.c.b16 %v1418, %v1415
    %v1455 = vpack.c.b16 %v1422, %v1419
    %v1456 = vpack.c.b16 %v1423, %v1420
    %v1457 = vpack.c.b16 %v1424, %v1421
    %v1458 = vpack.c.b16 %v1428, %v1425
    %v1459 = vpack.c.b16 %v1429, %v1426
    %v1460 = vpack.c.b16 %v1430, %v1427
    %v1461 = vpack.c.b16 %v1434, %v1431
    %v1462 = vpack.c.b16 %v1435, %v1432
    %v1463 = vpack.c.b16 %v1436, %v1433
    %v1464 = vpack.c.b16 %v1440, %v1437
    %v1465 = vpack.c.b16 %v1441, %v1438
    %v1466 = vpack.c.b16 %v1442, %v1439
    %1491 = vmatprep.subr.bf16.mxu0 %v1444
    %1492 = vmatpush1.bf16.msra.mxu0 %v1443
    %1493 = vmatprep.subr.bf16.mxu0 %v1447
    %1494 = vmatpush1.bf16.msra.mxu0 %v1446
    %1495 = vmatprep.subr.bf16.mxu0 %v1450
    %1496 = vmatpush1.bf16.msra.mxu0 %v1449
    %1497 = vmatprep.subr.bf16.mxu0 %v1453
    %1498 = vmatpush1.bf16.msra.mxu0 %v1452
    %1499 = vmatprep.subr.bf16.mxu0 %v1456
    %1500 = vmatpush1.bf16.msra.mxu0 %v1455
    %1501 = vmatprep.subr.bf16.mxu0 %v1459
    %1502 = vmatpush1.bf16.msra.mxu0 %v1458
    %1503 = vmatprep.subr.bf16.mxu0 %v1462
    %1504 = vmatpush1.bf16.msra.mxu0 %v1461
    %1505 = vmatprep.subr.bf16.mxu0 %v1465
    %1506 = vmatpush1.bf16.msra.mxu0 %v1464
    %1507 = vmatprep.subr.bf16.mxu0 0
    %1508 = vmatpush1.bf16.msra.mxu0 0
    %1509 = vmatprep.subr.bf16.mxu0 0
    %1510 = vmatpush1.bf16.msra.mxu0 0
    %1511 = vmatprep.subr.bf16.mxu0 0
    %1512 = vmatpush1.bf16.msra.mxu0 0
    %1513 = vmatprep.subr.bf16.mxu0 0
    %1514 = vmatpush1.bf16.msra.mxu0 0
    %1515 = vmatprep.subr.bf16.mxu0 0
    %1516 = vmatpush1.bf16.msra.mxu0 0
    %1517 = vmatprep.subr.bf16.mxu0 0
    %1518 = vmatpush1.bf16.msra.mxu0 0
    %1519 = vmatprep.subr.bf16.mxu0 0
    %1520 = vmatpush1.bf16.msra.mxu0 0
    %1521 = vmatprep.subr.bf16.mxu0 0
    %1522 = vmatpush1.bf16.msra.mxu0 0
    %1523 = vmatprep.mubr.bf16.mxu0 0
    %1524 = vmatmul.mubr.bf16.gmra.mrb[0].mxu0 %v1320
    %v1525 = vpop.f32.mrb[0].mxu0
    %v1526 = vadd.f32 0.0, %v1525
    %v1527 = vpop.f32.mrb[0].mxu0
    %v1528 = vadd.f32 0.0, %v1527
    %v1529 = vpop.f32.mrb[0].mxu0
    %v1530 = vadd.f32 0.0, %v1529
    %v1531 = vpop.f32.mrb[0].mxu0
    %v1532 = vadd.f32 0.0, %v1531
    %1533 = vdwg.mxu0
    %1534 = vmatprep.subr.bf16.mxu0 0
    %1535 = vmatpush1.bf16.msra.mxu0 %v1445
    %1536 = vmatprep.subr.bf16.mxu0 0
    %1537 = vmatpush1.bf16.msra.mxu0 %v1448
    %1538 = vmatprep.subr.bf16.mxu0 0
    %1539 = vmatpush1.bf16.msra.mxu0 %v1451
    %1540 = vmatprep.subr.bf16.mxu0 0
    %1541 = vmatpush1.bf16.msra.mxu0 %v1454
    %1542 = vmatprep.subr.bf16.mxu0 0
    %1543 = vmatpush1.bf16.msra.mxu0 %v1457
    %1544 = vmatprep.subr.bf16.mxu0 0
    %1545 = vmatpush1.bf16.msra.mxu0 %v1460
    %1546 = vmatprep.subr.bf16.mxu0 0
    %1547 = vmatpush1.bf16.msra.mxu0 %v1463
    %1548 = vmatprep.subr.bf16.mxu0 0
    %1549 = vmatpush1.bf16.msra.mxu0 %v1466
    %1550 = vmatprep.subr.bf16.mxu0 0
    %1551 = vmatpush1.bf16.msra.mxu0 0
    %1552 = vmatprep.subr.bf16.mxu0 0
    %1553 = vmatpush1.bf16.msra.mxu0 0
    %1554 = vmatprep.subr.bf16.mxu0 0
    %1555 = vmatpush1.bf16.msra.mxu0 0
    %1556 = vmatprep.subr.bf16.mxu0 0
    %1557 = vmatpush1.bf16.msra.mxu0 0
    %1558 = vmatprep.subr.bf16.mxu0 0
    %1559 = vmatpush1.bf16.msra.mxu0 0
    %1560 = vmatprep.subr.bf16.mxu0 0
    %1561 = vmatpush1.bf16.msra.mxu0 0
    %1562 = vmatprep.subr.bf16.mxu0 0
    %1563 = vmatpush1.bf16.msra.mxu0 0
    %1564 = vmatprep.subr.bf16.mxu0 0
    %1565 = vmatpush1.bf16.msra.mxu0 0
    %1566 = vmatprep.mubr.bf16.mxu0 0
    %1567 = vmatmul.mubr.bf16.gmra.mrb[0].mxu0 %v1320
    %v1568 = vpop.f32.mrb[0].mxu0
    %v1569 = vadd.f32 0.0, %v1568
    %v1570 = vpop.f32.mrb[0].mxu0
    %v1571 = vpop.f32.mrb[0].mxu0
    %v1572 = vadd.f32 0.0, %v1571
    %v1573 = vpop.f32.mrb[0].mxu0
    %1574 = vdwg.mxu0
    %v1575 = vadd.f32 %v429, %v1526
    %v1576 = vadd.f32 %v433, %v1530
    %v1577 = vxor.u32 %v1575, 2147483648
    %v1578 = vxor.u32 %v1576, 2147483648
    %v1579 = vmul.f32 %v1577, 1.442695
    %v1580 = vpow.pop %v1579
    %v1581 = vmul.f32 %v1578, 1.442695
    %v1582 = vpow.pop %v1581
    %v1583 = vadd.f32 %v1580, 1.0
    %v1584 = vadd.f32 %v1582, 1.0
    %v1585 = vrcp.pop %v1583
    %v1586 = vmul.f32 1.0, %v1585
    %v1587 = vrcp.pop %v1584
    %v1588 = vmul.f32 1.0, %v1587
    %v1589 = vadd.f32 %v431, %v1528
    %v1590 = vadd.f32 %v435, %v1532
    %v1591 = vxor.u32 %v1589, 2147483648
    %v1592 = vxor.u32 %v1590, 2147483648
    %v1593 = vmul.f32 %v1591, 1.442695
    %v1594 = vpow.pop %v1593
    %v1595 = vmul.f32 %v1592, 1.442695
    %v1596 = vpow.pop %v1595
    %v1597 = vadd.f32 %v1594, 1.0
    %v1598 = vadd.f32 %v1596, 1.0
    %v1599 = vrcp.pop %v1597
    %v1600 = vmul.f32 1.0, %v1599
    %v1601 = vrcp.pop %v1598
    %v1602 = vmul.f32 1.0, %v1601
    %v1603 = vadd.f32 %v1569, %v1008
    %v1604 = vadd.f32 %v1572, %v1008
    %v1605 = vmul.f32 %v1586, %v1603
    %v1606 = vmul.f32 %v1588, %v1604
    %v1607 = vadd.f32 %v618, %v1605
    %v1608 = vadd.f32 %v621, %v1606
    %v1609 = vtanh.pop %v1607
    %v1610 = vtanh.pop %v1608
    %v1611 = vsub.f32 %v1318, %v1609
    %v1612 = vsub.f32 %v1319, %v1610
    %v1613 = vmul.f32 %v1600, %v1611
    %v1614 = vmul.f32 %v1602, %v1612
    %v1615 = vadd.f32 %v1609, %v1613
    %v1616 = vadd.f32 %v1610, %v1614
    %v1617 = vpack.c.bf16 %v1616, %v1615
    %v1619 = vunpack.c.l.b16 %v1617
    %v1620 = vunpack.c.h.b16 %v1617
    %v1621 = vpack.c.b16 %v1619, %v1619
    %v1622 = vpack.c.b16 %v1620, %v1620
    %s1625 = scalar_lea.vmem [#allocation9], 16
    %1626 = vst [vmem:[%s1625] sm:$0xf] %v1621
    %1627 = vst [vmem:[%s1625 + $0x4] sm:$0xf] %v1622
    %v1628 = vld [vmem:[#allocation8] sm:$0xff]
    %v1629 = vld [vmem:[#allocation8 + $0x8] sm:$0xf]
    %v1630 = vld [vmem:[#allocation8 + $0xc] sm:$0xff]
    %v1631 = vld [vmem:[#allocation8 + $0x14] sm:$0xf]
    %v1632 = vld [vmem:[#allocation8 + $0x18] sm:$0xff]
    %v1633 = vld [vmem:[#allocation8 + $0x20] sm:$0xf]
    %v1634 = vld [vmem:[#allocation8 + $0x24] sm:$0xff]
    %v1635 = vld [vmem:[#allocation8 + $0x2c] sm:$0xf]
    %v1636 = vld [vmem:[#allocation8 + $0x30] sm:$0xff]
    %v1637 = vld [vmem:[#allocation8 + $0x38] sm:$0xf]
    %v1638 = vld [vmem:[#allocation8 + $0x3c] sm:$0xff]
    %v1639 = vld [vmem:[#allocation8 + $0x44] sm:$0xf]
    %v1640 = vld [vmem:[#allocation8 + $0x48] sm:$0xff]
    %v1641 = vld [vmem:[#allocation8 + $0x50] sm:$0xf]
    %v1642 = vld [vmem:[#allocation8 + $0x54] sm:$0xff]
    %v1643 = vld [vmem:[#allocation8 + $0x5c] sm:$0xf]
    %v1644 = vld [vmem:[#allocation8 + $0x60] sm:$0xff]
    %v1645 = vld [vmem:[#allocation8 + $0x68] sm:$0xf]
    %v1646 = vld [vmem:[#allocation8 + $0x6c] sm:$0xff]
    %v1647 = vld [vmem:[#allocation8 + $0x74] sm:$0xf]
    %v1648 = vld [vmem:[#allocation8 + $0x78] sm:$0xff]
    %v1649 = vld [vmem:[#allocation8 + $0x80] sm:$0xf]
    %v1650 = vld [vmem:[#allocation8 + $0x84] sm:$0xff]
    %v1651 = vld [vmem:[#allocation8 + $0x8c] sm:$0xf]
    %v1652 = vld [vmem:[#allocation8 + $0x90] sm:$0xff]
    %v1653 = vld [vmem:[#allocation8 + $0x98] sm:$0xf]
    %v1654 = vld [vmem:[#allocation8 + $0x9c] sm:$0xff]
    %v1655 = vld [vmem:[#allocation8 + $0xa4] sm:$0xf]
    %v1656 = vld [vmem:[#allocation8 + $0xa8] sm:$0xff]
    %v1657 = vld [vmem:[#allocation8 + $0xb0] sm:$0xf]
    %v1658 = vld [vmem:[#allocation8 + $0xb4] sm:$0xff]
    %v1659 = vld [vmem:[#allocation8 + $0xbc] sm:$0xf]
    %v1692 = vunpack.c.l.b16 %v1628
    %v1693 = vunpack.c.h.b16 %v1628
    %v1694 = vunpack.c.l.b16 %v1629
    %v1695 = vunpack.c.l.b16 %v1630
    %v1696 = vunpack.c.h.b16 %v1630
    %v1697 = vunpack.c.l.b16 %v1631
    %v1698 = vunpack.c.l.b16 %v1632
    %v1699 = vunpack.c.h.b16 %v1632
    %v1700 = vunpack.c.l.b16 %v1633
    %v1701 = vunpack.c.l.b16 %v1634
    %v1702 = vunpack.c.h.b16 %v1634
    %v1703 = vunpack.c.l.b16 %v1635
    %v1704 = vunpack.c.l.b16 %v1636
    %v1705 = vunpack.c.h.b16 %v1636
    %v1706 = vunpack.c.l.b16 %v1637
    %v1707 = vunpack.c.l.b16 %v1638
    %v1708 = vunpack.c.h.b16 %v1638
    %v1709 = vunpack.c.l.b16 %v1639
    %v1710 = vunpack.c.l.b16 %v1640
    %v1711 = vunpack.c.h.b16 %v1640
    %v1712 = vunpack.c.l.b16 %v1641
    %v1713 = vunpack.c.l.b16 %v1642
    %v1714 = vunpack.c.h.b16 %v1642
    %v1715 = vunpack.c.l.b16 %v1643
    %v1716 = vunpack.c.l.b16 %v1644
    %v1717 = vunpack.c.h.b16 %v1644
    %v1718 = vunpack.c.l.b16 %v1645
    %v1719 = vunpack.c.l.b16 %v1646
    %v1720 = vunpack.c.h.b16 %v1646
    %v1721 = vunpack.c.l.b16 %v1647
    %v1722 = vunpack.c.l.b16 %v1648
    %v1723 = vunpack.c.h.b16 %v1648
    %v1724 = vunpack.c.l.b16 %v1649
    %v1725 = vunpack.c.l.b16 %v1650
    %v1726 = vunpack.c.h.b16 %v1650
    %v1727 = vunpack.c.l.b16 %v1651
    %v1728 = vunpack.c.l.b16 %v1652
    %v1729 = vunpack.c.h.b16 %v1652
    %v1730 = vunpack.c.l.b16 %v1653
    %v1731 = vunpack.c.l.b16 %v1654
    %v1732 = vunpack.c.h.b16 %v1654
    %v1733 = vunpack.c.l.b16 %v1655
    %v1734 = vunpack.c.l.b16 %v1656
    %v1735 = vunpack.c.h.b16 %v1656
    %v1736 = vunpack.c.l.b16 %v1657
    %v1737 = vunpack.c.l.b16 %v1658
    %v1738 = vunpack.c.h.b16 %v1658
    %v1739 = vunpack.c.l.b16 %v1659
    %v1740 = vpack.c.b16 %v1695, %v1692
    %v1741 = vpack.c.b16 %v1696, %v1693
    %v1742 = vpack.c.b16 %v1697, %v1694
    %v1743 = vpack.c.b16 %v1701, %v1698
    %v1744 = vpack.c.b16 %v1702, %v1699
    %v1745 = vpack.c.b16 %v1703, %v1700
    %v1746 = vpack.c.b16 %v1707, %v1704
    %v1747 = vpack.c.b16 %v1708, %v1705
    %v1748 = vpack.c.b16 %v1709, %v1706
    %v1749 = vpack.c.b16 %v1713, %v1710
    %v1750 = vpack.c.b16 %v1714, %v1711
    %v1751 = vpack.c.b16 %v1715, %v1712
    %v1752 = vpack.c.b16 %v1719, %v1716
    %v1753 = vpack.c.b16 %v1720, %v1717
    %v1754 = vpack.c.b16 %v1721, %v1718
    %v1755 = vpack.c.b16 %v1725, %v1722
    %v1756 = vpack.c.b16 %v1726, %v1723
    %v1757 = vpack.c.b16 %v1727, %v1724
    %v1758 = vpack.c.b16 %v1731, %v1728
    %v1759 = vpack.c.b16 %v1732, %v1729
    %v1760 = vpack.c.b16 %v1733, %v1730
    %v1761 = vpack.c.b16 %v1737, %v1734
    %v1762 = vpack.c.b16 %v1738, %v1735
    %v1763 = vpack.c.b16 %v1739, %v1736
    %1788 = vmatprep.subr.bf16.mxu0 %v1741
    %1789 = vmatpush1.bf16.msra.mxu0 %v1740
    %1790 = vmatprep.subr.bf16.mxu0 %v1744
    %1791 = vmatpush1.bf16.msra.mxu0 %v1743
    %1792 = vmatprep.subr.bf16.mxu0 %v1747
    %1793 = vmatpush1.bf16.msra.mxu0 %v1746
    %1794 = vmatprep.subr.bf16.mxu0 %v1750
    %1795 = vmatpush1.bf16.msra.mxu0 %v1749
    %1796 = vmatprep.subr.bf16.mxu0 %v1753
    %1797 = vmatpush1.bf16.msra.mxu0 %v1752
    %1798 = vmatprep.subr.bf16.mxu0 %v1756
    %1799 = vmatpush1.bf16.msra.mxu0 %v1755
    %1800 = vmatprep.subr.bf16.mxu0 %v1759
    %1801 = vmatpush1.bf16.msra.mxu0 %v1758
    %1802 = vmatprep.subr.bf16.mxu0 %v1762
    %1803 = vmatpush1.bf16.msra.mxu0 %v1761
    %1804 = vmatprep.subr.bf16.mxu0 0
    %1805 = vmatpush1.bf16.msra.mxu0 0
    %1806 = vmatprep.subr.bf16.mxu0 0
    %1807 = vmatpush1.bf16.msra.mxu0 0
    %1808 = vmatprep.subr.bf16.mxu0 0
    %1809 = vmatpush1.bf16.msra.mxu0 0
    %1810 = vmatprep.subr.bf16.mxu0 0
    %1811 = vmatpush1.bf16.msra.mxu0 0
    %1812 = vmatprep.subr.bf16.mxu0 0
    %1813 = vmatpush1.bf16.msra.mxu0 0
    %1814 = vmatprep.subr.bf16.mxu0 0
    %1815 = vmatpush1.bf16.msra.mxu0 0
    %1816 = vmatprep.subr.bf16.mxu0 0
    %1817 = vmatpush1.bf16.msra.mxu0 0
    %1818 = vmatprep.subr.bf16.mxu0 0
    %1819 = vmatpush1.bf16.msra.mxu0 0
    %1820 = vmatprep.mubr.bf16.mxu0 0
    %1821 = vmatmul.mubr.bf16.gmra.mrb[0].mxu0 %v1617
    %v1822 = vpop.f32.mrb[0].mxu0
    %v1823 = vadd.f32 0.0, %v1822
    %v1824 = vpop.f32.mrb[0].mxu0
    %v1825 = vadd.f32 0.0, %v1824
    %v1826 = vpop.f32.mrb[0].mxu0
    %v1827 = vadd.f32 0.0, %v1826
    %v1828 = vpop.f32.mrb[0].mxu0
    %v1829 = vadd.f32 0.0, %v1828
    %1830 = vdwg.mxu0
    %1831 = vmatprep.subr.bf16.mxu0 0
    %1832 = vmatpush1.bf16.msra.mxu0 %v1742
    %1833 = vmatprep.subr.bf16.mxu0 0
    %1834 = vmatpush1.bf16.msra.mxu0 %v1745
    %1835 = vmatprep.subr.bf16.mxu0 0
    %1836 = vmatpush1.bf16.msra.mxu0 %v1748
    %1837 = vmatprep.subr.bf16.mxu0 0
    %1838 = vmatpush1.bf16.msra.mxu0 %v1751
    %1839 = vmatprep.subr.bf16.mxu0 0
    %1840 = vmatpush1.bf16.msra.mxu0 %v1754
    %1841 = vmatprep.subr.bf16.mxu0 0
    %1842 = vmatpush1.bf16.msra.mxu0 %v1757
    %1843 = vmatprep.subr.bf16.mxu0 0
    %1844 = vmatpush1.bf16.msra.mxu0 %v1760
    %1845 = vmatprep.subr.bf16.mxu0 0
    %1846 = vmatpush1.bf16.msra.mxu0 %v1763
    %1847 = vmatprep.subr.bf16.mxu0 0
    %1848 = vmatpush1.bf16.msra.mxu0 0
    %1849 = vmatprep.subr.bf16.mxu0 0
    %1850 = vmatpush1.bf16.msra.mxu0 0
    %1851 = vmatprep.subr.bf16.mxu0 0
    %1852 = vmatpush1.bf16.msra.mxu0 0
    %1853 = vmatprep.subr.bf16.mxu0 0
    %1854 = vmatpush1.bf16.msra.mxu0 0
    %1855 = vmatprep.subr.bf16.mxu0 0
    %1856 = vmatpush1.bf16.msra.mxu0 0
    %1857 = vmatprep.subr.bf16.mxu0 0
    %1858 = vmatpush1.bf16.msra.mxu0 0
    %1859 = vmatprep.subr.bf16.mxu0 0
    %1860 = vmatpush1.bf16.msra.mxu0 0
    %1861 = vmatprep.subr.bf16.mxu0 0
    %1862 = vmatpush1.bf16.msra.mxu0 0
    %1863 = vmatprep.mubr.bf16.mxu0 0
    %1864 = vmatmul.mubr.bf16.gmra.mrb[0].mxu0 %v1617
    %v1865 = vpop.f32.mrb[0].mxu0
    %v1866 = vadd.f32 0.0, %v1865
    %v1867 = vpop.f32.mrb[0].mxu0
    %v1868 = vpop.f32.mrb[0].mxu0
    %v1869 = vadd.f32 0.0, %v1868
    %v1870 = vpop.f32.mrb[0].mxu0
    %1871 = vdwg.mxu0
    %v1872 = vadd.f32 %v439, %v1823
    %v1873 = vadd.f32 %v443, %v1827
    %v1874 = vxor.u32 %v1872, 2147483648
    %v1875 = vxor.u32 %v1873, 2147483648
    %v1876 = vmul.f32 %v1874, 1.442695
    %v1877 = vpow.pop %v1876
    %v1878 = vmul.f32 %v1875, 1.442695
    %v1879 = vpow.pop %v1878
    %v1880 = vadd.f32 %v1877, 1.0
    %v1881 = vadd.f32 %v1879, 1.0
    %v1882 = vrcp.pop %v1880
    %v1883 = vmul.f32 1.0, %v1882
    %v1884 = vrcp.pop %v1881
    %v1885 = vmul.f32 1.0, %v1884
    %v1886 = vadd.f32 %v441, %v1825
    %v1887 = vadd.f32 %v445, %v1829
    %v1888 = vxor.u32 %v1886, 2147483648
    %v1889 = vxor.u32 %v1887, 2147483648
    %v1890 = vmul.f32 %v1888, 1.442695
    %v1891 = vpow.pop %v1890
    %v1892 = vmul.f32 %v1889, 1.442695
    %v1893 = vpow.pop %v1892
    %v1894 = vadd.f32 %v1891, 1.0
    %v1895 = vadd.f32 %v1893, 1.0
    %v1896 = vrcp.pop %v1894
    %v1897 = vmul.f32 1.0, %v1896
    %v1898 = vrcp.pop %v1895
    %v1899 = vmul.f32 1.0, %v1898
    %v1900 = vadd.f32 %v1866, %v1008
    %v1901 = vadd.f32 %v1869, %v1008
    %v1902 = vmul.f32 %v1883, %v1900
    %v1903 = vmul.f32 %v1885, %v1901
    %v1904 = vadd.f32 %v626, %v1902
    %v1905 = vadd.f32 %v629, %v1903
    %v1906 = vtanh.pop %v1904
    %v1907 = vtanh.pop %v1905
    %v1908 = vsub.f32 %v1615, %v1906
    %v1909 = vsub.f32 %v1616, %v1907
    %v1910 = vmul.f32 %v1897, %v1908
    %v1911 = vmul.f32 %v1899, %v1909
    %v1912 = vadd.f32 %v1906, %v1910
    %v1913 = vadd.f32 %v1907, %v1911
    %v1914 = vpack.c.bf16 %v1913, %v1912
    %v1916 = vunpack.c.l.b16 %v1914
    %v1917 = vunpack.c.h.b16 %v1914
    %v1918 = vpack.c.b16 %v1916, %v1916
    %v1919 = vpack.c.b16 %v1917, %v1917
    %s1922 = scalar_lea.vmem [#allocation9], 24
    %1923 = vst [vmem:[%s1922] sm:$0xf] %v1918
    %1924 = vst [vmem:[%s1922 + $0x4] sm:$0xf] %v1919
    %v1925 = vld [vmem:[#allocation8] sm:$0xff]
    %v1926 = vld [vmem:[#allocation8 + $0x8] sm:$0xf]
    %v1927 = vld [vmem:[#allocation8 + $0xc] sm:$0xff]
    %v1928 = vld [vmem:[#allocation8 + $0x14] sm:$0xf]
    %v1929 = vld [vmem:[#allocation8 + $0x18] sm:$0xff]
    %v1930 = vld [vmem:[#allocation8 + $0x20] sm:$0xf]
    %v1931 = vld [vmem:[#allocation8 + $0x24] sm:$0xff]
    %v1932 = vld [vmem:[#allocation8 + $0x2c] sm:$0xf]
    %v1933 = vld [vmem:[#allocation8 + $0x30] sm:$0xff]
    %v1934 = vld [vmem:[#allocation8 + $0x38] sm:$0xf]
    %v1935 = vld [vmem:[#allocation8 + $0x3c] sm:$0xff]
    %v1936 = vld [vmem:[#allocation8 + $0x44] sm:$0xf]
    %v1937 = vld [vmem:[#allocation8 + $0x48] sm:$0xff]
    %v1938 = vld [vmem:[#allocation8 + $0x50] sm:$0xf]
    %v1939 = vld [vmem:[#allocation8 + $0x54] sm:$0xff]
    %v1940 = vld [vmem:[#allocation8 + $0x5c] sm:$0xf]
    %v1941 = vld [vmem:[#allocation8 + $0x60] sm:$0xff]
    %v1942 = vld [vmem:[#allocation8 + $0x68] sm:$0xf]
    %v1943 = vld [vmem:[#allocation8 + $0x6c] sm:$0xff]
    %v1944 = vld [vmem:[#allocation8 + $0x74] sm:$0xf]
    %v1945 = vld [vmem:[#allocation8 + $0x78] sm:$0xff]
    %v1946 = vld [vmem:[#allocation8 + $0x80] sm:$0xf]
    %v1947 = vld [vmem:[#allocation8 + $0x84] sm:$0xff]
    %v1948 = vld [vmem:[#allocation8 + $0x8c] sm:$0xf]
    %v1949 = vld [vmem:[#allocation8 + $0x90] sm:$0xff]
    %v1950 = vld [vmem:[#allocation8 + $0x98] sm:$0xf]
    %v1951 = vld [vmem:[#allocation8 + $0x9c] sm:$0xff]
    %v1952 = vld [vmem:[#allocation8 + $0xa4] sm:$0xf]
    %v1953 = vld [vmem:[#allocation8 + $0xa8] sm:$0xff]
    %v1954 = vld [vmem:[#allocation8 + $0xb0] sm:$0xf]
    %v1955 = vld [vmem:[#allocation8 + $0xb4] sm:$0xff]
    %v1956 = vld [vmem:[#allocation8 + $0xbc] sm:$0xf]
    %v1989 = vunpack.c.l.b16 %v1925
    %v1990 = vunpack.c.h.b16 %v1925
    %v1991 = vunpack.c.l.b16 %v1926
    %v1992 = vunpack.c.l.b16 %v1927
    %v1993 = vunpack.c.h.b16 %v1927
    %v1994 = vunpack.c.l.b16 %v1928
    %v1995 = vunpack.c.l.b16 %v1929
    %v1996 = vunpack.c.h.b16 %v1929
    %v1997 = vunpack.c.l.b16 %v1930
    %v1998 = vunpack.c.l.b16 %v1931
    %v1999 = vunpack.c.h.b16 %v1931
    %v2000 = vunpack.c.l.b16 %v1932
    %v2001 = vunpack.c.l.b16 %v1933
    %v2002 = vunpack.c.h.b16 %v1933
    %v2003 = vunpack.c.l.b16 %v1934
    %v2004 = vunpack.c.l.b16 %v1935
    %v2005 = vunpack.c.h.b16 %v1935
    %v2006 = vunpack.c.l.b16 %v1936
    %v2007 = vunpack.c.l.b16 %v1937
    %v2008 = vunpack.c.h.b16 %v1937
    %v2009 = vunpack.c.l.b16 %v1938
    %v2010 = vunpack.c.l.b16 %v1939
    %v2011 = vunpack.c.h.b16 %v1939
    %v2012 = vunpack.c.l.b16 %v1940
    %v2013 = vunpack.c.l.b16 %v1941
    %v2014 = vunpack.c.h.b16 %v1941
    %v2015 = vunpack.c.l.b16 %v1942
    %v2016 = vunpack.c.l.b16 %v1943
    %v2017 = vunpack.c.h.b16 %v1943
    %v2018 = vunpack.c.l.b16 %v1944
    %v2019 = vunpack.c.l.b16 %v1945
    %v2020 = vunpack.c.h.b16 %v1945
    %v2021 = vunpack.c.l.b16 %v1946
    %v2022 = vunpack.c.l.b16 %v1947
    %v2023 = vunpack.c.h.b16 %v1947
    %v2024 = vunpack.c.l.b16 %v1948
    %v2025 = vunpack.c.l.b16 %v1949
    %v2026 = vunpack.c.h.b16 %v1949
    %v2027 = vunpack.c.l.b16 %v1950
    %v2028 = vunpack.c.l.b16 %v1951
    %v2029 = vunpack.c.h.b16 %v1951
    %v2030 = vunpack.c.l.b16 %v1952
    %v2031 = vunpack.c.l.b16 %v1953
    %v2032 = vunpack.c.h.b16 %v1953
    %v2033 = vunpack.c.l.b16 %v1954
    %v2034 = vunpack.c.l.b16 %v1955
    %v2035 = vunpack.c.h.b16 %v1955
    %v2036 = vunpack.c.l.b16 %v1956
    %v2037 = vpack.c.b16 %v1992, %v1989
    %v2038 = vpack.c.b16 %v1993, %v1990
    %v2039 = vpack.c.b16 %v1994, %v1991
    %v2040 = vpack.c.b16 %v1998, %v1995
    %v2041 = vpack.c.b16 %v1999, %v1996
    %v2042 = vpack.c.b16 %v2000, %v1997
    %v2043 = vpack.c.b16 %v2004, %v2001
    %v2044 = vpack.c.b16 %v2005, %v2002
    %v2045 = vpack.c.b16 %v2006, %v2003
    %v2046 = vpack.c.b16 %v2010, %v2007
    %v2047 = vpack.c.b16 %v2011, %v2008
    %v2048 = vpack.c.b16 %v2012, %v2009
    %v2049 = vpack.c.b16 %v2016, %v2013
    %v2050 = vpack.c.b16 %v2017, %v2014
    %v2051 = vpack.c.b16 %v2018, %v2015
    %v2052 = vpack.c.b16 %v2022, %v2019
    %v2053 = vpack.c.b16 %v2023, %v2020
    %v2054 = vpack.c.b16 %v2024, %v2021
    %v2055 = vpack.c.b16 %v2028, %v2025
    %v2056 = vpack.c.b16 %v2029, %v2026
    %v2057 = vpack.c.b16 %v2030, %v2027
    %v2058 = vpack.c.b16 %v2034, %v2031
    %v2059 = vpack.c.b16 %v2035, %v2032
    %v2060 = vpack.c.b16 %v2036, %v2033
    %2085 = vmatprep.subr.bf16.mxu0 %v2038
    %2086 = vmatpush1.bf16.msra.mxu0 %v2037
    %2087 = vmatprep.subr.bf16.mxu0 %v2041
    %2088 = vmatpush1.bf16.msra.mxu0 %v2040
    %2089 = vmatprep.subr.bf16.mxu0 %v2044
    %2090 = vmatpush1.bf16.msra.mxu0 %v2043
    %2091 = vmatprep.subr.bf16.mxu0 %v2047
    %2092 = vmatpush1.bf16.msra.mxu0 %v2046
    %2093 = vmatprep.subr.bf16.mxu0 %v2050
    %2094 = vmatpush1.bf16.msra.mxu0 %v2049
    %2095 = vmatprep.subr.bf16.mxu0 %v2053
    %2096 = vmatpush1.bf16.msra.mxu0 %v2052
    %2097 = vmatprep.subr.bf16.mxu0 %v2056
    %2098 = vmatpush1.bf16.msra.mxu0 %v2055
    %2099 = vmatprep.subr.bf16.mxu0 %v2059
    %2100 = vmatpush1.bf16.msra.mxu0 %v2058
    %2101 = vmatprep.subr.bf16.mxu0 0
    %2102 = vmatpush1.bf16.msra.mxu0 0
    %2103 = vmatprep.subr.bf16.mxu0 0
    %2104 = vmatpush1.bf16.msra.mxu0 0
    %2105 = vmatprep.subr.bf16.mxu0 0
    %2106 = vmatpush1.bf16.msra.mxu0 0
    %2107 = vmatprep.subr.bf16.mxu0 0
    %2108 = vmatpush1.bf16.msra.mxu0 0
    %2109 = vmatprep.subr.bf16.mxu0 0
    %2110 = vmatpush1.bf16.msra.mxu0 0
    %2111 = vmatprep.subr.bf16.mxu0 0
    %2112 = vmatpush1.bf16.msra.mxu0 0
    %2113 = vmatprep.subr.bf16.mxu0 0
    %2114 = vmatpush1.bf16.msra.mxu0 0
    %2115 = vmatprep.subr.bf16.mxu0 0
    %2116 = vmatpush1.bf16.msra.mxu0 0
    %2117 = vmatprep.mubr.bf16.mxu0 0
    %2118 = vmatmul.mubr.bf16.gmra.mrb[0].mxu0 %v1914
    %v2119 = vpop.f32.mrb[0].mxu0
    %v2120 = vadd.f32 0.0, %v2119
    %v2121 = vpop.f32.mrb[0].mxu0
    %v2122 = vadd.f32 0.0, %v2121
    %v2123 = vpop.f32.mrb[0].mxu0
    %v2124 = vadd.f32 0.0, %v2123
    %v2125 = vpop.f32.mrb[0].mxu0
    %v2126 = vadd.f32 0.0, %v2125
    %2127 = vdwg.mxu0
    %2128 = vmatprep.subr.bf16.mxu0 0
    %2129 = vmatpush1.bf16.msra.mxu0 %v2039
    %2130 = vmatprep.subr.bf16.mxu0 0
    %2131 = vmatpush1.bf16.msra.mxu0 %v2042
    %2132 = vmatprep.subr.bf16.mxu0 0
    %2133 = vmatpush1.bf16.msra.mxu0 %v2045
    %2134 = vmatprep.subr.bf16.mxu0 0
    %2135 = vmatpush1.bf16.msra.mxu0 %v2048
    %2136 = vmatprep.subr.bf16.mxu0 0
    %2137 = vmatpush1.bf16.msra.mxu0 %v2051
    %2138 = vmatprep.subr.bf16.mxu0 0
    %2139 = vmatpush1.bf16.msra.mxu0 %v2054
    %2140 = vmatprep.subr.bf16.mxu0 0
    %2141 = vmatpush1.bf16.msra.mxu0 %v2057
    %2142 = vmatprep.subr.bf16.mxu0 0
    %2143 = vmatpush1.bf16.msra.mxu0 %v2060
    %2144 = vmatprep.subr.bf16.mxu0 0
    %2145 = vmatpush1.bf16.msra.mxu0 0
    %2146 = vmatprep.subr.bf16.mxu0 0
    %2147 = vmatpush1.bf16.msra.mxu0 0
    %2148 = vmatprep.subr.bf16.mxu0 0
    %2149 = vmatpush1.bf16.msra.mxu0 0
    %2150 = vmatprep.subr.bf16.mxu0 0
    %2151 = vmatpush1.bf16.msra.mxu0 0
    %2152 = vmatprep.subr.bf16.mxu0 0
    %2153 = vmatpush1.bf16.msra.mxu0 0
    %2154 = vmatprep.subr.bf16.mxu0 0
    %2155 = vmatpush1.bf16.msra.mxu0 0
    %2156 = vmatprep.subr.bf16.mxu0 0
    %2157 = vmatpush1.bf16.msra.mxu0 0
    %2158 = vmatprep.subr.bf16.mxu0 0
    %2159 = vmatpush1.bf16.msra.mxu0 0
    %2160 = vmatprep.mubr.bf16.mxu0 0
    %2161 = vmatmul.mubr.bf16.gmra.mrb[0].mxu0 %v1914
    %v2162 = vpop.f32.mrb[0].mxu0
    %v2163 = vadd.f32 0.0, %v2162
    %v2164 = vpop.f32.mrb[0].mxu0
    %v2165 = vpop.f32.mrb[0].mxu0
    %v2166 = vadd.f32 0.0, %v2165
    %v2167 = vpop.f32.mrb[0].mxu0
    %2168 = vdwg.mxu0
    %v2169 = vadd.f32 %v449, %v2120
    %v2170 = vadd.f32 %v453, %v2124
    %v2171 = vxor.u32 %v2169, 2147483648
    %v2172 = vxor.u32 %v2170, 2147483648
    %v2173 = vmul.f32 %v2171, 1.442695
    %v2174 = vpow.pop %v2173
    %v2175 = vmul.f32 %v2172, 1.442695
    %v2176 = vpow.pop %v2175
    %v2177 = vadd.f32 %v2174, 1.0
    %v2178 = vadd.f32 %v2176, 1.0
    %v2179 = vrcp.pop %v2177
    %v2180 = vmul.f32 1.0, %v2179
    %v2181 = vrcp.pop %v2178
    %v2182 = vmul.f32 1.0, %v2181
    %v2183 = vadd.f32 %v451, %v2122
    %v2184 = vadd.f32 %v455, %v2126
    %v2185 = vxor.u32 %v2183, 2147483648
    %v2186 = vxor.u32 %v2184, 2147483648
    %v2187 = vmul.f32 %v2185, 1.442695
    %v2188 = vpow.pop %v2187
    %v2189 = vmul.f32 %v2186, 1.442695
    %v2190 = vpow.pop %v2189
    %v2191 = vadd.f32 %v2188, 1.0
    %v2192 = vadd.f32 %v2190, 1.0
    %v2193 = vrcp.pop %v2191
    %v2194 = vmul.f32 1.0, %v2193
    %v2195 = vrcp.pop %v2192
    %v2196 = vmul.f32 1.0, %v2195
    %v2197 = vadd.f32 %v2163, %v1008
    %v2198 = vadd.f32 %v2166, %v1008
    %v2199 = vmul.f32 %v2180, %v2197
    %v2200 = vmul.f32 %v2182, %v2198
    %v2201 = vadd.f32 %v634, %v2199
    %v2202 = vadd.f32 %v637, %v2200
    %v2203 = vtanh.pop %v2201
    %v2204 = vtanh.pop %v2202
    %v2205 = vsub.f32 %v1912, %v2203
    %v2206 = vsub.f32 %v1913, %v2204
    %v2207 = vmul.f32 %v2194, %v2205
    %v2208 = vmul.f32 %v2196, %v2206
    %v2209 = vadd.f32 %v2203, %v2207
    %v2210 = vadd.f32 %v2204, %v2208
    %v2211 = vpack.c.bf16 %v2210, %v2209
    %v2213 = vunpack.c.l.b16 %v2211
    %v2214 = vunpack.c.h.b16 %v2211
    %v2215 = vpack.c.b16 %v2213, %v2213
    %v2216 = vpack.c.b16 %v2214, %v2214
    %s2219 = scalar_lea.vmem [#allocation9], 32
    %2220 = vst [vmem:[%s2219] sm:$0xf] %v2215
    %2221 = vst [vmem:[%s2219 + $0x4] sm:$0xf] %v2216
    %v2222 = vld [vmem:[#allocation8] sm:$0xff]
    %v2223 = vld [vmem:[#allocation8 + $0x8] sm:$0xf]
    %v2224 = vld [vmem:[#allocation8 + $0xc] sm:$0xff]
    %v2225 = vld [vmem:[#allocation8 + $0x14] sm:$0xf]
    %v2226 = vld [vmem:[#allocation8 + $0x18] sm:$0xff]
    %v2227 = vld [vmem:[#allocation8 + $0x20] sm:$0xf]
    %v2228 = vld [vmem:[#allocation8 + $0x24] sm:$0xff]
    %v2229 = vld [vmem:[#allocation8 + $0x2c] sm:$0xf]
    %v2230 = vld [vmem:[#allocation8 + $0x30] sm:$0xff]
    %v2231 = vld [vmem:[#allocation8 + $0x38] sm:$0xf]
    %v2232 = vld [vmem:[#allocation8 + $0x3c] sm:$0xff]
    %v2233 = vld [vmem:[#allocation8 + $0x44] sm:$0xf]
    %v2234 = vld [vmem:[#allocation8 + $0x48] sm:$0xff]
    %v2235 = vld [vmem:[#allocation8 + $0x50] sm:$0xf]
    %v2236 = vld [vmem:[#allocation8 + $0x54] sm:$0xff]
    %v2237 = vld [vmem:[#allocation8 + $0x5c] sm:$0xf]
    %v2238 = vld [vmem:[#allocation8 + $0x60] sm:$0xff]
    %v2239 = vld [vmem:[#allocation8 + $0x68] sm:$0xf]
    %v2240 = vld [vmem:[#allocation8 + $0x6c] sm:$0xff]
    %v2241 = vld [vmem:[#allocation8 + $0x74] sm:$0xf]
    %v2242 = vld [vmem:[#allocation8 + $0x78] sm:$0xff]
    %v2243 = vld [vmem:[#allocation8 + $0x80] sm:$0xf]
    %v2244 = vld [vmem:[#allocation8 + $0x84] sm:$0xff]
    %v2245 = vld [vmem:[#allocation8 + $0x8c] sm:$0xf]
    %v2246 = vld [vmem:[#allocation8 + $0x90] sm:$0xff]
    %v2247 = vld [vmem:[#allocation8 + $0x98] sm:$0xf]
    %v2248 = vld [vmem:[#allocation8 + $0x9c] sm:$0xff]
    %v2249 = vld [vmem:[#allocation8 + $0xa4] sm:$0xf]
    %v2250 = vld [vmem:[#allocation8 + $0xa8] sm:$0xff]
    %v2251 = vld [vmem:[#allocation8 + $0xb0] sm:$0xf]
    %v2252 = vld [vmem:[#allocation8 + $0xb4] sm:$0xff]
    %v2253 = vld [vmem:[#allocation8 + $0xbc] sm:$0xf]
    %v2286 = vunpack.c.l.b16 %v2222
    %v2287 = vunpack.c.h.b16 %v2222
    %v2288 = vunpack.c.l.b16 %v2223
    %v2289 = vunpack.c.l.b16 %v2224
    %v2290 = vunpack.c.h.b16 %v2224
    %v2291 = vunpack.c.l.b16 %v2225
    %v2292 = vunpack.c.l.b16 %v2226
    %v2293 = vunpack.c.h.b16 %v2226
    %v2294 = vunpack.c.l.b16 %v2227
    %v2295 = vunpack.c.l.b16 %v2228
    %v2296 = vunpack.c.h.b16 %v2228
    %v2297 = vunpack.c.l.b16 %v2229
    %v2298 = vunpack.c.l.b16 %v2230
    %v2299 = vunpack.c.h.b16 %v2230
    %v2300 = vunpack.c.l.b16 %v2231
    %v2301 = vunpack.c.l.b16 %v2232
    %v2302 = vunpack.c.h.b16 %v2232
    %v2303 = vunpack.c.l.b16 %v2233
    %v2304 = vunpack.c.l.b16 %v2234
    %v2305 = vunpack.c.h.b16 %v2234
    %v2306 = vunpack.c.l.b16 %v2235
    %v2307 = vunpack.c.l.b16 %v2236
    %v2308 = vunpack.c.h.b16 %v2236
    %v2309 = vunpack.c.l.b16 %v2237
    %v2310 = vunpack.c.l.b16 %v2238
    %v2311 = vunpack.c.h.b16 %v2238
    %v2312 = vunpack.c.l.b16 %v2239
    %v2313 = vunpack.c.l.b16 %v2240
    %v2314 = vunpack.c.h.b16 %v2240
    %v2315 = vunpack.c.l.b16 %v2241
    %v2316 = vunpack.c.l.b16 %v2242
    %v2317 = vunpack.c.h.b16 %v2242
    %v2318 = vunpack.c.l.b16 %v2243
    %v2319 = vunpack.c.l.b16 %v2244
    %v2320 = vunpack.c.h.b16 %v2244
    %v2321 = vunpack.c.l.b16 %v2245
    %v2322 = vunpack.c.l.b16 %v2246
    %v2323 = vunpack.c.h.b16 %v2246
    %v2324 = vunpack.c.l.b16 %v2247
    %v2325 = vunpack.c.l.b16 %v2248
    %v2326 = vunpack.c.h.b16 %v2248
    %v2327 = vunpack.c.l.b16 %v2249
    %v2328 = vunpack.c.l.b16 %v2250
    %v2329 = vunpack.c.h.b16 %v2250
    %v2330 = vunpack.c.l.b16 %v2251
    %v2331 = vunpack.c.l.b16 %v2252
    %v2332 = vunpack.c.h.b16 %v2252
    %v2333 = vunpack.c.l.b16 %v2253
    %v2334 = vpack.c.b16 %v2289, %v2286
    %v2335 = vpack.c.b16 %v2290, %v2287
    %v2336 = vpack.c.b16 %v2291, %v2288
    %v2337 = vpack.c.b16 %v2295, %v2292
    %v2338 = vpack.c.b16 %v2296, %v2293
    %v2339 = vpack.c.b16 %v2297, %v2294
    %v2340 = vpack.c.b16 %v2301, %v2298
    %v2341 = vpack.c.b16 %v2302, %v2299
    %v2342 = vpack.c.b16 %v2303, %v2300
    %v2343 = vpack.c.b16 %v2307, %v2304
    %v2344 = vpack.c.b16 %v2308, %v2305
    %v2345 = vpack.c.b16 %v2309, %v2306
    %v2346 = vpack.c.b16 %v2313, %v2310
    %v2347 = vpack.c.b16 %v2314, %v2311
    %v2348 = vpack.c.b16 %v2315, %v2312
    %v2349 = vpack.c.b16 %v2319, %v2316
    %v2350 = vpack.c.b16 %v2320, %v2317
    %v2351 = vpack.c.b16 %v2321, %v2318
    %v2352 = vpack.c.b16 %v2325, %v2322
    %v2353 = vpack.c.b16 %v2326, %v2323
    %v2354 = vpack.c.b16 %v2327, %v2324
    %v2355 = vpack.c.b16 %v2331, %v2328
    %v2356 = vpack.c.b16 %v2332, %v2329
    %v2357 = vpack.c.b16 %v2333, %v2330
    %2382 = vmatprep.subr.bf16.mxu0 %v2335
    %2383 = vmatpush1.bf16.msra.mxu0 %v2334
    %2384 = vmatprep.subr.bf16.mxu0 %v2338
    %2385 = vmatpush1.bf16.msra.mxu0 %v2337
    %2386 = vmatprep.subr.bf16.mxu0 %v2341
    %2387 = vmatpush1.bf16.msra.mxu0 %v2340
    %2388 = vmatprep.subr.bf16.mxu0 %v2344
    %2389 = vmatpush1.bf16.msra.mxu0 %v2343
    %2390 = vmatprep.subr.bf16.mxu0 %v2347
    %2391 = vmatpush1.bf16.msra.mxu0 %v2346
    %2392 = vmatprep.subr.bf16.mxu0 %v2350
    %2393 = vmatpush1.bf16.msra.mxu0 %v2349
    %2394 = vmatprep.subr.bf16.mxu0 %v2353
    %2395 = vmatpush1.bf16.msra.mxu0 %v2352
    %2396 = vmatprep.subr.bf16.mxu0 %v2356
    %2397 = vmatpush1.bf16.msra.mxu0 %v2355
    %2398 = vmatprep.subr.bf16.mxu0 0
    %2399 = vmatpush1.bf16.msra.mxu0 0
    %2400 = vmatprep.subr.bf16.mxu0 0
    %2401 = vmatpush1.bf16.msra.mxu0 0
    %2402 = vmatprep.subr.bf16.mxu0 0
    %2403 = vmatpush1.bf16.msra.mxu0 0
    %2404 = vmatprep.subr.bf16.mxu0 0
    %2405 = vmatpush1.bf16.msra.mxu0 0
    %2406 = vmatprep.subr.bf16.mxu0 0
    %2407 = vmatpush1.bf16.msra.mxu0 0
    %2408 = vmatprep.subr.bf16.mxu0 0
    %2409 = vmatpush1.bf16.msra.mxu0 0
    %2410 = vmatprep.subr.bf16.mxu0 0
    %2411 = vmatpush1.bf16.msra.mxu0 0
    %2412 = vmatprep.subr.bf16.mxu0 0
    %2413 = vmatpush1.bf16.msra.mxu0 0
    %2414 = vmatprep.mubr.bf16.mxu0 0
    %2415 = vmatmul.mubr.bf16.gmra.mrb[0].mxu0 %v2211
    %v2416 = vpop.f32.mrb[0].mxu0
    %v2417 = vadd.f32 0.0, %v2416
    %v2418 = vpop.f32.mrb[0].mxu0
    %v2419 = vadd.f32 0.0, %v2418
    %v2420 = vpop.f32.mrb[0].mxu0
    %v2421 = vadd.f32 0.0, %v2420
    %v2422 = vpop.f32.mrb[0].mxu0
    %v2423 = vadd.f32 0.0, %v2422
    %2424 = vdwg.mxu0
    %2425 = vmatprep.subr.bf16.mxu0 0
    %2426 = vmatpush1.bf16.msra.mxu0 %v2336
    %2427 = vmatprep.subr.bf16.mxu0 0
    %2428 = vmatpush1.bf16.msra.mxu0 %v2339
    %2429 = vmatprep.subr.bf16.mxu0 0
    %2430 = vmatpush1.bf16.msra.mxu0 %v2342
    %2431 = vmatprep.subr.bf16.mxu0 0
    %2432 = vmatpush1.bf16.msra.mxu0 %v2345
    %2433 = vmatprep.subr.bf16.mxu0 0
    %2434 = vmatpush1.bf16.msra.mxu0 %v2348
    %2435 = vmatprep.subr.bf16.mxu0 0
    %2436 = vmatpush1.bf16.msra.mxu0 %v2351
    %2437 = vmatprep.subr.bf16.mxu0 0
    %2438 = vmatpush1.bf16.msra.mxu0 %v2354
    %2439 = vmatprep.subr.bf16.mxu0 0
    %2440 = vmatpush1.bf16.msra.mxu0 %v2357
    %2441 = vmatprep.subr.bf16.mxu0 0
    %2442 = vmatpush1.bf16.msra.mxu0 0
    %2443 = vmatprep.subr.bf16.mxu0 0
    %2444 = vmatpush1.bf16.msra.mxu0 0
    %2445 = vmatprep.subr.bf16.mxu0 0
    %2446 = vmatpush1.bf16.msra.mxu0 0
    %2447 = vmatprep.subr.bf16.mxu0 0
    %2448 = vmatpush1.bf16.msra.mxu0 0
    %2449 = vmatprep.subr.bf16.mxu0 0
    %2450 = vmatpush1.bf16.msra.mxu0 0
    %2451 = vmatprep.subr.bf16.mxu0 0
    %2452 = vmatpush1.bf16.msra.mxu0 0
    %2453 = vmatprep.subr.bf16.mxu0 0
    %2454 = vmatpush1.bf16.msra.mxu0 0
    %2455 = vmatprep.subr.bf16.mxu0 0
    %2456 = vmatpush1.bf16.msra.mxu0 0
    %2457 = vmatprep.mubr.bf16.mxu0 0
    %2458 = vmatmul.mubr.bf16.gmra.mrb[0].mxu0 %v2211
    %v2459 = vpop.f32.mrb[0].mxu0
    %v2460 = vadd.f32 0.0, %v2459
    %v2461 = vpop.f32.mrb[0].mxu0
    %v2462 = vpop.f32.mrb[0].mxu0
    %v2463 = vadd.f32 0.0, %v2462
    %v2464 = vpop.f32.mrb[0].mxu0
    %2465 = vdwg.mxu0
    %v2466 = vadd.f32 %v459, %v2417
    %v2467 = vadd.f32 %v463, %v2421
    %v2468 = vxor.u32 %v2466, 2147483648
    %v2469 = vxor.u32 %v2467, 2147483648
    %v2470 = vmul.f32 %v2468, 1.442695
    %v2471 = vpow.pop %v2470
    %v2472 = vmul.f32 %v2469, 1.442695
    %v2473 = vpow.pop %v2472
    %v2474 = vadd.f32 %v2471, 1.0
    %v2475 = vadd.f32 %v2473, 1.0
    %v2476 = vrcp.pop %v2474
    %v2477 = vmul.f32 1.0, %v2476
    %v2478 = vrcp.pop %v2475
    %v2479 = vmul.f32 1.0, %v2478
    %v2480 = vadd.f32 %v461, %v2419
    %v2481 = vadd.f32 %v465, %v2423
    %v2482 = vxor.u32 %v2480, 2147483648
    %v2483 = vxor.u32 %v2481, 2147483648
    %v2484 = vmul.f32 %v2482, 1.442695
    %v2485 = vpow.pop %v2484
    %v2486 = vmul.f32 %v2483, 1.442695
    %v2487 = vpow.pop %v2486
    %v2488 = vadd.f32 %v2485, 1.0
    %v2489 = vadd.f32 %v2487, 1.0
    %v2490 = vrcp.pop %v2488
    %v2491 = vmul.f32 1.0, %v2490
    %v2492 = vrcp.pop %v2489
    %v2493 = vmul.f32 1.0, %v2492
    %v2494 = vadd.f32 %v2460, %v1008
    %v2495 = vadd.f32 %v2463, %v1008
    %v2496 = vmul.f32 %v2477, %v2494
    %v2497 = vmul.f32 %v2479, %v2495
    %v2498 = vadd.f32 %v642, %v2496
    %v2499 = vadd.f32 %v645, %v2497
    %v2500 = vtanh.pop %v2498
    %v2501 = vtanh.pop %v2499
    %v2502 = vsub.f32 %v2209, %v2500
    %v2503 = vsub.f32 %v2210, %v2501
    %v2504 = vmul.f32 %v2491, %v2502
    %v2505 = vmul.f32 %v2493, %v2503
    %v2506 = vadd.f32 %v2500, %v2504
    %v2507 = vadd.f32 %v2501, %v2505
    %v2508 = vpack.c.bf16 %v2507, %v2506
    %v2510 = vunpack.c.l.b16 %v2508
    %v2511 = vunpack.c.h.b16 %v2508
    %v2512 = vpack.c.b16 %v2510, %v2510
    %v2513 = vpack.c.b16 %v2511, %v2511
    %s2516 = scalar_lea.vmem [#allocation9], 40
    %2517 = vst [vmem:[%s2516] sm:$0xf] %v2512
    %2518 = vst [vmem:[%s2516 + $0x4] sm:$0xf] %v2513
    %v2519 = vld [vmem:[#allocation8] sm:$0xff]
    %v2520 = vld [vmem:[#allocation8 + $0x8] sm:$0xf]
    %v2521 = vld [vmem:[#allocation8 + $0xc] sm:$0xff]
    %v2522 = vld [vmem:[#allocation8 + $0x14] sm:$0xf]
    %v2523 = vld [vmem:[#allocation8 + $0x18] sm:$0xff]
    %v2524 = vld [vmem:[#allocation8 + $0x20] sm:$0xf]
    %v2525 = vld [vmem:[#allocation8 + $0x24] sm:$0xff]
    %v2526 = vld [vmem:[#allocation8 + $0x2c] sm:$0xf]
    %v2527 = vld [vmem:[#allocation8 + $0x30] sm:$0xff]
    %v2528 = vld [vmem:[#allocation8 + $0x38] sm:$0xf]
    %v2529 = vld [vmem:[#allocation8 + $0x3c] sm:$0xff]
    %v2530 = vld [vmem:[#allocation8 + $0x44] sm:$0xf]
    %v2531 = vld [vmem:[#allocation8 + $0x48] sm:$0xff]
    %v2532 = vld [vmem:[#allocation8 + $0x50] sm:$0xf]
    %v2533 = vld [vmem:[#allocation8 + $0x54] sm:$0xff]
    %v2534 = vld [vmem:[#allocation8 + $0x5c] sm:$0xf]
    %v2535 = vld [vmem:[#allocation8 + $0x60] sm:$0xff]
    %v2536 = vld [vmem:[#allocation8 + $0x68] sm:$0xf]
    %v2537 = vld [vmem:[#allocation8 + $0x6c] sm:$0xff]
    %v2538 = vld [vmem:[#allocation8 + $0x74] sm:$0xf]
    %v2539 = vld [vmem:[#allocation8 + $0x78] sm:$0xff]
    %v2540 = vld [vmem:[#allocation8 + $0x80] sm:$0xf]
    %v2541 = vld [vmem:[#allocation8 + $0x84] sm:$0xff]
    %v2542 = vld [vmem:[#allocation8 + $0x8c] sm:$0xf]
    %v2543 = vld [vmem:[#allocation8 + $0x90] sm:$0xff]
    %v2544 = vld [vmem:[#allocation8 + $0x98] sm:$0xf]
    %v2545 = vld [vmem:[#allocation8 + $0x9c] sm:$0xff]
    %v2546 = vld [vmem:[#allocation8 + $0xa4] sm:$0xf]
    %v2547 = vld [vmem:[#allocation8 + $0xa8] sm:$0xff]
    %v2548 = vld [vmem:[#allocation8 + $0xb0] sm:$0xf]
    %v2549 = vld [vmem:[#allocation8 + $0xb4] sm:$0xff]
    %v2550 = vld [vmem:[#allocation8 + $0xbc] sm:$0xf]
    %v2583 = vunpack.c.l.b16 %v2519
    %v2584 = vunpack.c.h.b16 %v2519
    %v2585 = vunpack.c.l.b16 %v2520
    %v2586 = vunpack.c.l.b16 %v2521
    %v2587 = vunpack.c.h.b16 %v2521
    %v2588 = vunpack.c.l.b16 %v2522
    %v2589 = vunpack.c.l.b16 %v2523
    %v2590 = vunpack.c.h.b16 %v2523
    %v2591 = vunpack.c.l.b16 %v2524
    %v2592 = vunpack.c.l.b16 %v2525
    %v2593 = vunpack.c.h.b16 %v2525
    %v2594 = vunpack.c.l.b16 %v2526
    %v2595 = vunpack.c.l.b16 %v2527
    %v2596 = vunpack.c.h.b16 %v2527
    %v2597 = vunpack.c.l.b16 %v2528
    %v2598 = vunpack.c.l.b16 %v2529
    %v2599 = vunpack.c.h.b16 %v2529
    %v2600 = vunpack.c.l.b16 %v2530
    %v2601 = vunpack.c.l.b16 %v2531
    %v2602 = vunpack.c.h.b16 %v2531
    %v2603 = vunpack.c.l.b16 %v2532
    %v2604 = vunpack.c.l.b16 %v2533
    %v2605 = vunpack.c.h.b16 %v2533
    %v2606 = vunpack.c.l.b16 %v2534
    %v2607 = vunpack.c.l.b16 %v2535
    %v2608 = vunpack.c.h.b16 %v2535
    %v2609 = vunpack.c.l.b16 %v2536
    %v2610 = vunpack.c.l.b16 %v2537
    %v2611 = vunpack.c.h.b16 %v2537
    %v2612 = vunpack.c.l.b16 %v2538
    %v2613 = vunpack.c.l.b16 %v2539
    %v2614 = vunpack.c.h.b16 %v2539
    %v2615 = vunpack.c.l.b16 %v2540
    %v2616 = vunpack.c.l.b16 %v2541
    %v2617 = vunpack.c.h.b16 %v2541
    %v2618 = vunpack.c.l.b16 %v2542
    %v2619 = vunpack.c.l.b16 %v2543
    %v2620 = vunpack.c.h.b16 %v2543
    %v2621 = vunpack.c.l.b16 %v2544
    %v2622 = vunpack.c.l.b16 %v2545
    %v2623 = vunpack.c.h.b16 %v2545
    %v2624 = vunpack.c.l.b16 %v2546
    %v2625 = vunpack.c.l.b16 %v2547
    %v2626 = vunpack.c.h.b16 %v2547
    %v2627 = vunpack.c.l.b16 %v2548
    %v2628 = vunpack.c.l.b16 %v2549
    %v2629 = vunpack.c.h.b16 %v2549
    %v2630 = vunpack.c.l.b16 %v2550
    %v2631 = vpack.c.b16 %v2586, %v2583
    %v2632 = vpack.c.b16 %v2587, %v2584
    %v2633 = vpack.c.b16 %v2588, %v2585
    %v2634 = vpack.c.b16 %v2592, %v2589
    %v2635 = vpack.c.b16 %v2593, %v2590
    %v2636 = vpack.c.b16 %v2594, %v2591
    %v2637 = vpack.c.b16 %v2598, %v2595
    %v2638 = vpack.c.b16 %v2599, %v2596
    %v2639 = vpack.c.b16 %v2600, %v2597
    %v2640 = vpack.c.b16 %v2604, %v2601
    %v2641 = vpack.c.b16 %v2605, %v2602
    %v2642 = vpack.c.b16 %v2606, %v2603
    %v2643 = vpack.c.b16 %v2610, %v2607
    %v2644 = vpack.c.b16 %v2611, %v2608
    %v2645 = vpack.c.b16 %v2612, %v2609
    %v2646 = vpack.c.b16 %v2616, %v2613
    %v2647 = vpack.c.b16 %v2617, %v2614
    %v2648 = vpack.c.b16 %v2618, %v2615
    %v2649 = vpack.c.b16 %v2622, %v2619
    %v2650 = vpack.c.b16 %v2623, %v2620
    %v2651 = vpack.c.b16 %v2624, %v2621
    %v2652 = vpack.c.b16 %v2628, %v2625
    %v2653 = vpack.c.b16 %v2629, %v2626
    %v2654 = vpack.c.b16 %v2630, %v2627
    %2679 = vmatprep.subr.bf16.mxu0 %v2632
    %2680 = vmatpush1.bf16.msra.mxu0 %v2631
    %2681 = vmatprep.subr.bf16.mxu0 %v2635
    %2682 = vmatpush1.bf16.msra.mxu0 %v2634
    %2683 = vmatprep.subr.bf16.mxu0 %v2638
    %2684 = vmatpush1.bf16.msra.mxu0 %v2637
    %2685 = vmatprep.subr.bf16.mxu0 %v2641
    %2686 = vmatpush1.bf16.msra.mxu0 %v2640
    %2687 = vmatprep.subr.bf16.mxu0 %v2644
    %2688 = vmatpush1.bf16.msra.mxu0 %v2643
    %2689 = vmatprep.subr.bf16.mxu0 %v2647
    %2690 = vmatpush1.bf16.msra.mxu0 %v2646
    %2691 = vmatprep.subr.bf16.mxu0 %v2650
    %2692 = vmatpush1.bf16.msra.mxu0 %v2649
    %2693 = vmatprep.subr.bf16.mxu0 %v2653
    %2694 = vmatpush1.bf16.msra.mxu0 %v2652
    %2695 = vmatprep.subr.bf16.mxu0 0
    %2696 = vmatpush1.bf16.msra.mxu0 0
    %2697 = vmatprep.subr.bf16.mxu0 0
    %2698 = vmatpush1.bf16.msra.mxu0 0
    %2699 = vmatprep.subr.bf16.mxu0 0
    %2700 = vmatpush1.bf16.msra.mxu0 0
    %2701 = vmatprep.subr.bf16.mxu0 0
    %2702 = vmatpush1.bf16.msra.mxu0 0
    %2703 = vmatprep.subr.bf16.mxu0 0
    %2704 = vmatpush1.bf16.msra.mxu0 0
    %2705 = vmatprep.subr.bf16.mxu0 0
    %2706 = vmatpush1.bf16.msra.mxu0 0
    %2707 = vmatprep.subr.bf16.mxu0 0
    %2708 = vmatpush1.bf16.msra.mxu0 0
    %2709 = vmatprep.subr.bf16.mxu0 0
    %2710 = vmatpush1.bf16.msra.mxu0 0
    %2711 = vmatprep.mubr.bf16.mxu0 0
    %2712 = vmatmul.mubr.bf16.gmra.mrb[0].mxu0 %v2508
    %v2713 = vpop.f32.mrb[0].mxu0
    %v2714 = vadd.f32 0.0, %v2713
    %v2715 = vpop.f32.mrb[0].mxu0
    %v2716 = vadd.f32 0.0, %v2715
    %v2717 = vpop.f32.mrb[0].mxu0
    %v2718 = vadd.f32 0.0, %v2717
    %v2719 = vpop.f32.mrb[0].mxu0
    %v2720 = vadd.f32 0.0, %v2719
    %2721 = vdwg.mxu0
    %2722 = vmatprep.subr.bf16.mxu0 0
    %2723 = vmatpush1.bf16.msra.mxu0 %v2633
    %2724 = vmatprep.subr.bf16.mxu0 0
    %2725 = vmatpush1.bf16.msra.mxu0 %v2636
    %2726 = vmatprep.subr.bf16.mxu0 0
    %2727 = vmatpush1.bf16.msra.mxu0 %v2639
    %2728 = vmatprep.subr.bf16.mxu0 0
    %2729 = vmatpush1.bf16.msra.mxu0 %v2642
    %2730 = vmatprep.subr.bf16.mxu0 0
    %2731 = vmatpush1.bf16.msra.mxu0 %v2645
    %2732 = vmatprep.subr.bf16.mxu0 0
    %2733 = vmatpush1.bf16.msra.mxu0 %v2648
    %2734 = vmatprep.subr.bf16.mxu0 0
    %2735 = vmatpush1.bf16.msra.mxu0 %v2651
    %2736 = vmatprep.subr.bf16.mxu0 0
    %2737 = vmatpush1.bf16.msra.mxu0 %v2654
    %2738 = vmatprep.subr.bf16.mxu0 0
    %2739 = vmatpush1.bf16.msra.mxu0 0
    %2740 = vmatprep.subr.bf16.mxu0 0
    %2741 = vmatpush1.bf16.msra.mxu0 0
    %2742 = vmatprep.subr.bf16.mxu0 0
    %2743 = vmatpush1.bf16.msra.mxu0 0
    %2744 = vmatprep.subr.bf16.mxu0 0
    %2745 = vmatpush1.bf16.msra.mxu0 0
    %2746 = vmatprep.subr.bf16.mxu0 0
    %2747 = vmatpush1.bf16.msra.mxu0 0
    %2748 = vmatprep.subr.bf16.mxu0 0
    %2749 = vmatpush1.bf16.msra.mxu0 0
    %2750 = vmatprep.subr.bf16.mxu0 0
    %2751 = vmatpush1.bf16.msra.mxu0 0
    %2752 = vmatprep.subr.bf16.mxu0 0
    %2753 = vmatpush1.bf16.msra.mxu0 0
    %2754 = vmatprep.mubr.bf16.mxu0 0
    %2755 = vmatmul.mubr.bf16.gmra.mrb[0].mxu0 %v2508
    %v2756 = vpop.f32.mrb[0].mxu0
    %v2757 = vadd.f32 0.0, %v2756
    %v2758 = vpop.f32.mrb[0].mxu0
    %v2759 = vpop.f32.mrb[0].mxu0
    %v2760 = vadd.f32 0.0, %v2759
    %v2761 = vpop.f32.mrb[0].mxu0
    %2762 = vdwg.mxu0
    %v2763 = vadd.f32 %v469, %v2714
    %v2764 = vadd.f32 %v473, %v2718
    %v2765 = vxor.u32 %v2763, 2147483648
    %v2766 = vxor.u32 %v2764, 2147483648
    %v2767 = vmul.f32 %v2765, 1.442695
    %v2768 = vpow.pop %v2767
    %v2769 = vmul.f32 %v2766, 1.442695
    %v2770 = vpow.pop %v2769
    %v2771 = vadd.f32 %v2768, 1.0
    %v2772 = vadd.f32 %v2770, 1.0
    %v2773 = vrcp.pop %v2771
    %v2774 = vmul.f32 1.0, %v2773
    %v2775 = vrcp.pop %v2772
    %v2776 = vmul.f32 1.0, %v2775
    %v2777 = vadd.f32 %v471, %v2716
    %v2778 = vadd.f32 %v475, %v2720
    %v2779 = vxor.u32 %v2777, 2147483648
    %v2780 = vxor.u32 %v2778, 2147483648
    %v2781 = vmul.f32 %v2779, 1.442695
    %v2782 = vpow.pop %v2781
    %v2783 = vmul.f32 %v2780, 1.442695
    %v2784 = vpow.pop %v2783
    %v2785 = vadd.f32 %v2782, 1.0
    %v2786 = vadd.f32 %v2784, 1.0
    %v2787 = vrcp.pop %v2785
    %v2788 = vmul.f32 1.0, %v2787
    %v2789 = vrcp.pop %v2786
    %v2790 = vmul.f32 1.0, %v2789
    %v2791 = vadd.f32 %v2757, %v1008
    %v2792 = vadd.f32 %v2760, %v1008
    %v2793 = vmul.f32 %v2774, %v2791
    %v2794 = vmul.f32 %v2776, %v2792
    %v2795 = vadd.f32 %v650, %v2793
    %v2796 = vadd.f32 %v653, %v2794
    %v2797 = vtanh.pop %v2795
    %v2798 = vtanh.pop %v2796
    %v2799 = vsub.f32 %v2506, %v2797
    %v2800 = vsub.f32 %v2507, %v2798
    %v2801 = vmul.f32 %v2788, %v2799
    %v2802 = vmul.f32 %v2790, %v2800
    %v2803 = vadd.f32 %v2797, %v2801
    %v2804 = vadd.f32 %v2798, %v2802
    %v2805 = vpack.c.bf16 %v2804, %v2803
    %v2807 = vunpack.c.l.b16 %v2805
    %v2808 = vunpack.c.h.b16 %v2805
    %v2809 = vpack.c.b16 %v2807, %v2807
    %v2810 = vpack.c.b16 %v2808, %v2808
    %s2813 = scalar_lea.vmem [#allocation9], 48
    %2814 = vst [vmem:[%s2813] sm:$0xf] %v2809
    %2815 = vst [vmem:[%s2813 + $0x4] sm:$0xf] %v2810
    %v2816 = vld [vmem:[#allocation8] sm:$0xff]
    %v2817 = vld [vmem:[#allocation8 + $0x8] sm:$0xf]
    %v2818 = vld [vmem:[#allocation8 + $0xc] sm:$0xff]
    %v2819 = vld [vmem:[#allocation8 + $0x14] sm:$0xf]
    %v2820 = vld [vmem:[#allocation8 + $0x18] sm:$0xff]
    %v2821 = vld [vmem:[#allocation8 + $0x20] sm:$0xf]
    %v2822 = vld [vmem:[#allocation8 + $0x24] sm:$0xff]
    %v2823 = vld [vmem:[#allocation8 + $0x2c] sm:$0xf]
    %v2824 = vld [vmem:[#allocation8 + $0x30] sm:$0xff]
    %v2825 = vld [vmem:[#allocation8 + $0x38] sm:$0xf]
    %v2826 = vld [vmem:[#allocation8 + $0x3c] sm:$0xff]
    %v2827 = vld [vmem:[#allocation8 + $0x44] sm:$0xf]
    %v2828 = vld [vmem:[#allocation8 + $0x48] sm:$0xff]
    %v2829 = vld [vmem:[#allocation8 + $0x50] sm:$0xf]
    %v2830 = vld [vmem:[#allocation8 + $0x54] sm:$0xff]
    %v2831 = vld [vmem:[#allocation8 + $0x5c] sm:$0xf]
    %v2832 = vld [vmem:[#allocation8 + $0x60] sm:$0xff]
    %v2833 = vld [vmem:[#allocation8 + $0x68] sm:$0xf]
    %v2834 = vld [vmem:[#allocation8 + $0x6c] sm:$0xff]
    %v2835 = vld [vmem:[#allocation8 + $0x74] sm:$0xf]
    %v2836 = vld [vmem:[#allocation8 + $0x78] sm:$0xff]
    %v2837 = vld [vmem:[#allocation8 + $0x80] sm:$0xf]
    %v2838 = vld [vmem:[#allocation8 + $0x84] sm:$0xff]
    %v2839 = vld [vmem:[#allocation8 + $0x8c] sm:$0xf]
    %v2840 = vld [vmem:[#allocation8 + $0x90] sm:$0xff]
    %v2841 = vld [vmem:[#allocation8 + $0x98] sm:$0xf]
    %v2842 = vld [vmem:[#allocation8 + $0x9c] sm:$0xff]
    %v2843 = vld [vmem:[#allocation8 + $0xa4] sm:$0xf]
    %v2844 = vld [vmem:[#allocation8 + $0xa8] sm:$0xff]
    %v2845 = vld [vmem:[#allocation8 + $0xb0] sm:$0xf]
    %v2846 = vld [vmem:[#allocation8 + $0xb4] sm:$0xff]
    %v2847 = vld [vmem:[#allocation8 + $0xbc] sm:$0xf]
    %v2880 = vunpack.c.l.b16 %v2816
    %v2881 = vunpack.c.h.b16 %v2816
    %v2882 = vunpack.c.l.b16 %v2817
    %v2883 = vunpack.c.l.b16 %v2818
    %v2884 = vunpack.c.h.b16 %v2818
    %v2885 = vunpack.c.l.b16 %v2819
    %v2886 = vunpack.c.l.b16 %v2820
    %v2887 = vunpack.c.h.b16 %v2820
    %v2888 = vunpack.c.l.b16 %v2821
    %v2889 = vunpack.c.l.b16 %v2822
    %v2890 = vunpack.c.h.b16 %v2822
    %v2891 = vunpack.c.l.b16 %v2823
    %v2892 = vunpack.c.l.b16 %v2824
    %v2893 = vunpack.c.h.b16 %v2824
    %v2894 = vunpack.c.l.b16 %v2825
    %v2895 = vunpack.c.l.b16 %v2826
    %v2896 = vunpack.c.h.b16 %v2826
    %v2897 = vunpack.c.l.b16 %v2827
    %v2898 = vunpack.c.l.b16 %v2828
    %v2899 = vunpack.c.h.b16 %v2828
    %v2900 = vunpack.c.l.b16 %v2829
    %v2901 = vunpack.c.l.b16 %v2830
    %v2902 = vunpack.c.h.b16 %v2830
    %v2903 = vunpack.c.l.b16 %v2831
    %v2904 = vunpack.c.l.b16 %v2832
    %v2905 = vunpack.c.h.b16 %v2832
    %v2906 = vunpack.c.l.b16 %v2833
    %v2907 = vunpack.c.l.b16 %v2834
    %v2908 = vunpack.c.h.b16 %v2834
    %v2909 = vunpack.c.l.b16 %v2835
    %v2910 = vunpack.c.l.b16 %v2836
    %v2911 = vunpack.c.h.b16 %v2836
    %v2912 = vunpack.c.l.b16 %v2837
    %v2913 = vunpack.c.l.b16 %v2838
    %v2914 = vunpack.c.h.b16 %v2838
    %v2915 = vunpack.c.l.b16 %v2839
    %v2916 = vunpack.c.l.b16 %v2840
    %v2917 = vunpack.c.h.b16 %v2840
    %v2918 = vunpack.c.l.b16 %v2841
    %v2919 = vunpack.c.l.b16 %v2842
    %v2920 = vunpack.c.h.b16 %v2842
    %v2921 = vunpack.c.l.b16 %v2843
    %v2922 = vunpack.c.l.b16 %v2844
    %v2923 = vunpack.c.h.b16 %v2844
    %v2924 = vunpack.c.l.b16 %v2845
    %v2925 = vunpack.c.l.b16 %v2846
    %v2926 = vunpack.c.h.b16 %v2846
    %v2927 = vunpack.c.l.b16 %v2847
    %v2928 = vpack.c.b16 %v2883, %v2880
    %v2929 = vpack.c.b16 %v2884, %v2881
    %v2930 = vpack.c.b16 %v2885, %v2882
    %v2931 = vpack.c.b16 %v2889, %v2886
    %v2932 = vpack.c.b16 %v2890, %v2887
    %v2933 = vpack.c.b16 %v2891, %v2888
    %v2934 = vpack.c.b16 %v2895, %v2892
    %v2935 = vpack.c.b16 %v2896, %v2893
    %v2936 = vpack.c.b16 %v2897, %v2894
    %v2937 = vpack.c.b16 %v2901, %v2898
    %v2938 = vpack.c.b16 %v2902, %v2899
    %v2939 = vpack.c.b16 %v2903, %v2900
    %v2940 = vpack.c.b16 %v2907, %v2904
    %v2941 = vpack.c.b16 %v2908, %v2905
    %v2942 = vpack.c.b16 %v2909, %v2906
    %v2943 = vpack.c.b16 %v2913, %v2910
    %v2944 = vpack.c.b16 %v2914, %v2911
    %v2945 = vpack.c.b16 %v2915, %v2912
    %v2946 = vpack.c.b16 %v2919, %v2916
    %v2947 = vpack.c.b16 %v2920, %v2917
    %v2948 = vpack.c.b16 %v2921, %v2918
    %v2949 = vpack.c.b16 %v2925, %v2922
    %v2950 = vpack.c.b16 %v2926, %v2923
    %v2951 = vpack.c.b16 %v2927, %v2924
    %2976 = vmatprep.subr.bf16.mxu0 %v2929
    %2977 = vmatpush1.bf16.msra.mxu0 %v2928
    %2978 = vmatprep.subr.bf16.mxu0 %v2932
    %2979 = vmatpush1.bf16.msra.mxu0 %v2931
    %2980 = vmatprep.subr.bf16.mxu0 %v2935
    %2981 = vmatpush1.bf16.msra.mxu0 %v2934
    %2982 = vmatprep.subr.bf16.mxu0 %v2938
    %2983 = vmatpush1.bf16.msra.mxu0 %v2937
    %2984 = vmatprep.subr.bf16.mxu0 %v2941
    %2985 = vmatpush1.bf16.msra.mxu0 %v2940
    %2986 = vmatprep.subr.bf16.mxu0 %v2944
    %2987 = vmatpush1.bf16.msra.mxu0 %v2943
    %2988 = vmatprep.subr.bf16.mxu0 %v2947
    %2989 = vmatpush1.bf16.msra.mxu0 %v2946
    %2990 = vmatprep.subr.bf16.mxu0 %v2950
    %2991 = vmatpush1.bf16.msra.mxu0 %v2949
    %2992 = vmatprep.subr.bf16.mxu0 0
    %2993 = vmatpush1.bf16.msra.mxu0 0
    %2994 = vmatprep.subr.bf16.mxu0 0
    %2995 = vmatpush1.bf16.msra.mxu0 0
    %2996 = vmatprep.subr.bf16.mxu0 0
    %2997 = vmatpush1.bf16.msra.mxu0 0
    %2998 = vmatprep.subr.bf16.mxu0 0
    %2999 = vmatpush1.bf16.msra.mxu0 0
    %3000 = vmatprep.subr.bf16.mxu0 0
    %3001 = vmatpush1.bf16.msra.mxu0 0
    %3002 = vmatprep.subr.bf16.mxu0 0
    %3003 = vmatpush1.bf16.msra.mxu0 0
    %3004 = vmatprep.subr.bf16.mxu0 0
    %3005 = vmatpush1.bf16.msra.mxu0 0
    %3006 = vmatprep.subr.bf16.mxu0 0
    %3007 = vmatpush1.bf16.msra.mxu0 0
    %3008 = vmatprep.mubr.bf16.mxu0 0
    %3009 = vmatmul.mubr.bf16.gmra.mrb[0].mxu0 %v2805
    %v3010 = vpop.f32.mrb[0].mxu0
    %v3011 = vadd.f32 0.0, %v3010
    %v3012 = vpop.f32.mrb[0].mxu0
    %v3013 = vadd.f32 0.0, %v3012
    %v3014 = vpop.f32.mrb[0].mxu0
    %v3015 = vadd.f32 0.0, %v3014
    %v3016 = vpop.f32.mrb[0].mxu0
    %v3017 = vadd.f32 0.0, %v3016
    %3018 = vdwg.mxu0
    %3019 = vmatprep.subr.bf16.mxu0 0
    %3020 = vmatpush1.bf16.msra.mxu0 %v2930
    %3021 = vmatprep.subr.bf16.mxu0 0
    %3022 = vmatpush1.bf16.msra.mxu0 %v2933
    %3023 = vmatprep.subr.bf16.mxu0 0
    %3024 = vmatpush1.bf16.msra.mxu0 %v2936
    %3025 = vmatprep.subr.bf16.mxu0 0
    %3026 = vmatpush1.bf16.msra.mxu0 %v2939
    %3027 = vmatprep.subr.bf16.mxu0 0
    %3028 = vmatpush1.bf16.msra.mxu0 %v2942
    %3029 = vmatprep.subr.bf16.mxu0 0
    %3030 = vmatpush1.bf16.msra.mxu0 %v2945
    %3031 = vmatprep.subr.bf16.mxu0 0
    %3032 = vmatpush1.bf16.msra.mxu0 %v2948
    %3033 = vmatprep.subr.bf16.mxu0 0
    %3034 = vmatpush1.bf16.msra.mxu0 %v2951
    %3035 = vmatprep.subr.bf16.mxu0 0
    %3036 = vmatpush1.bf16.msra.mxu0 0
    %3037 = vmatprep.subr.bf16.mxu0 0
    %3038 = vmatpush1.bf16.msra.mxu0 0
    %3039 = vmatprep.subr.bf16.mxu0 0
    %3040 = vmatpush1.bf16.msra.mxu0 0
    %3041 = vmatprep.subr.bf16.mxu0 0
    %3042 = vmatpush1.bf16.msra.mxu0 0
    %3043 = vmatprep.subr.bf16.mxu0 0
    %3044 = vmatpush1.bf16.msra.mxu0 0
    %3045 = vmatprep.subr.bf16.mxu0 0
    %3046 = vmatpush1.bf16.msra.mxu0 0
    %3047 = vmatprep.subr.bf16.mxu0 0
    %3048 = vmatpush1.bf16.msra.mxu0 0
    %3049 = vmatprep.subr.bf16.mxu0 0
    %3050 = vmatpush1.bf16.msra.mxu0 0
    %3051 = vmatprep.mubr.bf16.mxu0 0
    %3052 = vmatmul.mubr.bf16.gmra.mrb[0].mxu0 %v2805
    %v3053 = vpop.f32.mrb[0].mxu0
    %v3054 = vadd.f32 0.0, %v3053
    %v3055 = vpop.f32.mrb[0].mxu0
    %v3056 = vpop.f32.mrb[0].mxu0
    %v3057 = vadd.f32 0.0, %v3056
    %v3058 = vpop.f32.mrb[0].mxu0
    %3059 = vdwg.mxu0
    %v3060 = vadd.f32 %v479, %v3011
    %v3061 = vadd.f32 %v483, %v3015
    %v3062 = vxor.u32 %v3060, 2147483648
    %v3063 = vxor.u32 %v3061, 2147483648
    %v3064 = vmul.f32 %v3062, 1.442695
    %v3065 = vpow.pop %v3064
    %v3066 = vmul.f32 %v3063, 1.442695
    %v3067 = vpow.pop %v3066
    %v3068 = vadd.f32 %v3065, 1.0
    %v3069 = vadd.f32 %v3067, 1.0
    %v3070 = vrcp.pop %v3068
    %v3071 = vmul.f32 1.0, %v3070
    %v3072 = vrcp.pop %v3069
    %v3073 = vmul.f32 1.0, %v3072
    %v3074 = vadd.f32 %v481, %v3013
    %v3075 = vadd.f32 %v485, %v3017
    %v3076 = vxor.u32 %v3074, 2147483648
    %v3077 = vxor.u32 %v3075, 2147483648
    %v3078 = vmul.f32 %v3076, 1.442695
    %v3079 = vpow.pop %v3078
    %v3080 = vmul.f32 %v3077, 1.442695
    %v3081 = vpow.pop %v3080
    %v3082 = vadd.f32 %v3079, 1.0
    %v3083 = vadd.f32 %v3081, 1.0
    %v3084 = vrcp.pop %v3082
    %v3085 = vmul.f32 1.0, %v3084
    %v3086 = vrcp.pop %v3083
    %v3087 = vmul.f32 1.0, %v3086
    %v3088 = vadd.f32 %v3054, %v1008
    %v3089 = vadd.f32 %v3057, %v1008
    %v3090 = vmul.f32 %v3071, %v3088
    %v3091 = vmul.f32 %v3073, %v3089
    %v3092 = vadd.f32 %v658, %v3090
    %v3093 = vadd.f32 %v661, %v3091
    %v3094 = vtanh.pop %v3092
    %v3095 = vtanh.pop %v3093
    %v3096 = vsub.f32 %v2803, %v3094
    %v3097 = vsub.f32 %v2804, %v3095
    %v3098 = vmul.f32 %v3085, %v3096
    %v3099 = vmul.f32 %v3087, %v3097
    %v3100 = vadd.f32 %v3094, %v3098
    %v3101 = vadd.f32 %v3095, %v3099
    %v3102 = vpack.c.bf16 %v3101, %v3100
    %v3104 = vunpack.c.l.b16 %v3102
    %v3105 = vunpack.c.h.b16 %v3102
    %v3106 = vpack.c.b16 %v3104, %v3104
    %v3107 = vpack.c.b16 %v3105, %v3105
    %s3110 = scalar_lea.vmem [#allocation9], 56
    %3111 = vst [vmem:[%s3110] sm:$0xf] %v3106
    %3112 = vst [vmem:[%s3110 + $0x4] sm:$0xf] %v3107
    %v3113 = vld [vmem:[#allocation8] sm:$0xff]
    %v3114 = vld [vmem:[#allocation8 + $0x8] sm:$0xf]
    %v3115 = vld [vmem:[#allocation8 + $0xc] sm:$0xff]
    %v3116 = vld [vmem:[#allocation8 + $0x14] sm:$0xf]
    %v3117 = vld [vmem:[#allocation8 + $0x18] sm:$0xff]
    %v3118 = vld [vmem:[#allocation8 + $0x20] sm:$0xf]
    %v3119 = vld [vmem:[#allocation8 + $0x24] sm:$0xff]
    %v3120 = vld [vmem:[#allocation8 + $0x2c] sm:$0xf]
    %v3121 = vld [vmem:[#allocation8 + $0x30] sm:$0xff]
    %v3122 = vld [vmem:[#allocation8 + $0x38] sm:$0xf]
    %v3123 = vld [vmem:[#allocation8 + $0x3c] sm:$0xff]
    %v3124 = vld [vmem:[#allocation8 + $0x44] sm:$0xf]
    %v3125 = vld [vmem:[#allocation8 + $0x48] sm:$0xff]
    %v3126 = vld [vmem:[#allocation8 + $0x50] sm:$0xf]
    %v3127 = vld [vmem:[#allocation8 + $0x54] sm:$0xff]
    %v3128 = vld [vmem:[#allocation8 + $0x5c] sm:$0xf]
    %v3129 = vld [vmem:[#allocation8 + $0x60] sm:$0xff]
    %v3130 = vld [vmem:[#allocation8 + $0x68] sm:$0xf]
    %v3131 = vld [vmem:[#allocation8 + $0x6c] sm:$0xff]
    %v3132 = vld [vmem:[#allocation8 + $0x74] sm:$0xf]
    %v3133 = vld [vmem:[#allocation8 + $0x78] sm:$0xff]
    %v3134 = vld [vmem:[#allocation8 + $0x80] sm:$0xf]
    %v3135 = vld [vmem:[#allocation8 + $0x84] sm:$0xff]
    %v3136 = vld [vmem:[#allocation8 + $0x8c] sm:$0xf]
    %v3137 = vld [vmem:[#allocation8 + $0x90] sm:$0xff]
    %v3138 = vld [vmem:[#allocation8 + $0x98] sm:$0xf]
    %v3139 = vld [vmem:[#allocation8 + $0x9c] sm:$0xff]
    %v3140 = vld [vmem:[#allocation8 + $0xa4] sm:$0xf]
    %v3141 = vld [vmem:[#allocation8 + $0xa8] sm:$0xff]
    %v3142 = vld [vmem:[#allocation8 + $0xb0] sm:$0xf]
    %v3143 = vld [vmem:[#allocation8 + $0xb4] sm:$0xff]
    %v3144 = vld [vmem:[#allocation8 + $0xbc] sm:$0xf]
    %v3177 = vunpack.c.l.b16 %v3113
    %v3178 = vunpack.c.h.b16 %v3113
    %v3179 = vunpack.c.l.b16 %v3114
    %v3180 = vunpack.c.l.b16 %v3115
    %v3181 = vunpack.c.h.b16 %v3115
    %v3182 = vunpack.c.l.b16 %v3116
    %v3183 = vunpack.c.l.b16 %v3117
    %v3184 = vunpack.c.h.b16 %v3117
    %v3185 = vunpack.c.l.b16 %v3118
    %v3186 = vunpack.c.l.b16 %v3119
    %v3187 = vunpack.c.h.b16 %v3119
    %v3188 = vunpack.c.l.b16 %v3120
    %v3189 = vunpack.c.l.b16 %v3121
    %v3190 = vunpack.c.h.b16 %v3121
    %v3191 = vunpack.c.l.b16 %v3122
    %v3192 = vunpack.c.l.b16 %v3123
    %v3193 = vunpack.c.h.b16 %v3123
    %v3194 = vunpack.c.l.b16 %v3124
    %v3195 = vunpack.c.l.b16 %v3125
    %v3196 = vunpack.c.h.b16 %v3125
    %v3197 = vunpack.c.l.b16 %v3126
    %v3198 = vunpack.c.l.b16 %v3127
    %v3199 = vunpack.c.h.b16 %v3127
    %v3200 = vunpack.c.l.b16 %v3128
    %v3201 = vunpack.c.l.b16 %v3129
    %v3202 = vunpack.c.h.b16 %v3129
    %v3203 = vunpack.c.l.b16 %v3130
    %v3204 = vunpack.c.l.b16 %v3131
    %v3205 = vunpack.c.h.b16 %v3131
    %v3206 = vunpack.c.l.b16 %v3132
    %v3207 = vunpack.c.l.b16 %v3133
    %v3208 = vunpack.c.h.b16 %v3133
    %v3209 = vunpack.c.l.b16 %v3134
    %v3210 = vunpack.c.l.b16 %v3135
    %v3211 = vunpack.c.h.b16 %v3135
    %v3212 = vunpack.c.l.b16 %v3136
    %v3213 = vunpack.c.l.b16 %v3137
    %v3214 = vunpack.c.h.b16 %v3137
    %v3215 = vunpack.c.l.b16 %v3138
    %v3216 = vunpack.c.l.b16 %v3139
    %v3217 = vunpack.c.h.b16 %v3139
    %v3218 = vunpack.c.l.b16 %v3140
    %v3219 = vunpack.c.l.b16 %v3141
    %v3220 = vunpack.c.h.b16 %v3141
    %v3221 = vunpack.c.l.b16 %v3142
    %v3222 = vunpack.c.l.b16 %v3143
    %v3223 = vunpack.c.h.b16 %v3143
    %v3224 = vunpack.c.l.b16 %v3144
    %v3225 = vpack.c.b16 %v3180, %v3177
    %v3226 = vpack.c.b16 %v3181, %v3178
    %v3227 = vpack.c.b16 %v3182, %v3179
    %v3228 = vpack.c.b16 %v3186, %v3183
    %v3229 = vpack.c.b16 %v3187, %v3184
    %v3230 = vpack.c.b16 %v3188, %v3185
    %v3231 = vpack.c.b16 %v3192, %v3189
    %v3232 = vpack.c.b16 %v3193, %v3190
    %v3233 = vpack.c.b16 %v3194, %v3191
    %v3234 = vpack.c.b16 %v3198, %v3195
    %v3235 = vpack.c.b16 %v3199, %v3196
    %v3236 = vpack.c.b16 %v3200, %v3197
    %v3237 = vpack.c.b16 %v3204, %v3201
    %v3238 = vpack.c.b16 %v3205, %v3202
    %v3239 = vpack.c.b16 %v3206, %v3203
    %v3240 = vpack.c.b16 %v3210, %v3207
    %v3241 = vpack.c.b16 %v3211, %v3208
    %v3242 = vpack.c.b16 %v3212, %v3209
    %v3243 = vpack.c.b16 %v3216, %v3213
    %v3244 = vpack.c.b16 %v3217, %v3214
    %v3245 = vpack.c.b16 %v3218, %v3215
    %v3246 = vpack.c.b16 %v3222, %v3219
    %v3247 = vpack.c.b16 %v3223, %v3220
    %v3248 = vpack.c.b16 %v3224, %v3221
    %3273 = vmatprep.subr.bf16.mxu0 %v3226
    %3274 = vmatpush1.bf16.msra.mxu0 %v3225
    %3275 = vmatprep.subr.bf16.mxu0 %v3229
    %3276 = vmatpush1.bf16.msra.mxu0 %v3228
    %3277 = vmatprep.subr.bf16.mxu0 %v3232
    %3278 = vmatpush1.bf16.msra.mxu0 %v3231
    %3279 = vmatprep.subr.bf16.mxu0 %v3235
    %3280 = vmatpush1.bf16.msra.mxu0 %v3234
    %3281 = vmatprep.subr.bf16.mxu0 %v3238
    %3282 = vmatpush1.bf16.msra.mxu0 %v3237
    %3283 = vmatprep.subr.bf16.mxu0 %v3241
    %3284 = vmatpush1.bf16.msra.mxu0 %v3240
    %3285 = vmatprep.subr.bf16.mxu0 %v3244
    %3286 = vmatpush1.bf16.msra.mxu0 %v3243
    %3287 = vmatprep.subr.bf16.mxu0 %v3247
    %3288 = vmatpush1.bf16.msra.mxu0 %v3246
    %3289 = vmatprep.subr.bf16.mxu0 0
    %3290 = vmatpush1.bf16.msra.mxu0 0
    %3291 = vmatprep.subr.bf16.mxu0 0
    %3292 = vmatpush1.bf16.msra.mxu0 0
    %3293 = vmatprep.subr.bf16.mxu0 0
    %3294 = vmatpush1.bf16.msra.mxu0 0
    %3295 = vmatprep.subr.bf16.mxu0 0
    %3296 = vmatpush1.bf16.msra.mxu0 0
    %3297 = vmatprep.subr.bf16.mxu0 0
    %3298 = vmatpush1.bf16.msra.mxu0 0
    %3299 = vmatprep.subr.bf16.mxu0 0
    %3300 = vmatpush1.bf16.msra.mxu0 0
    %3301 = vmatprep.subr.bf16.mxu0 0
    %3302 = vmatpush1.bf16.msra.mxu0 0
    %3303 = vmatprep.subr.bf16.mxu0 0
    %3304 = vmatpush1.bf16.msra.mxu0 0
    %3305 = vmatprep.mubr.bf16.mxu0 0
    %3306 = vmatmul.mubr.bf16.gmra.mrb[0].mxu0 %v3102
    %v3307 = vpop.f32.mrb[0].mxu0
    %v3308 = vadd.f32 0.0, %v3307
    %v3309 = vpop.f32.mrb[0].mxu0
    %v3310 = vadd.f32 0.0, %v3309
    %v3311 = vpop.f32.mrb[0].mxu0
    %v3312 = vadd.f32 0.0, %v3311
    %v3313 = vpop.f32.mrb[0].mxu0
    %v3314 = vadd.f32 0.0, %v3313
    %3315 = vdwg.mxu0
    %3316 = vmatprep.subr.bf16.mxu0 0
    %3317 = vmatpush1.bf16.msra.mxu0 %v3227
    %3318 = vmatprep.subr.bf16.mxu0 0
    %3319 = vmatpush1.bf16.msra.mxu0 %v3230
    %3320 = vmatprep.subr.bf16.mxu0 0
    %3321 = vmatpush1.bf16.msra.mxu0 %v3233
    %3322 = vmatprep.subr.bf16.mxu0 0
    %3323 = vmatpush1.bf16.msra.mxu0 %v3236
    %3324 = vmatprep.subr.bf16.mxu0 0
    %3325 = vmatpush1.bf16.msra.mxu0 %v3239
    %3326 = vmatprep.subr.bf16.mxu0 0
    %3327 = vmatpush1.bf16.msra.mxu0 %v3242
    %3328 = vmatprep.subr.bf16.mxu0 0
    %3329 = vmatpush1.bf16.msra.mxu0 %v3245
    %3330 = vmatprep.subr.bf16.mxu0 0
    %3331 = vmatpush1.bf16.msra.mxu0 %v3248
    %3332 = vmatprep.subr.bf16.mxu0 0
    %3333 = vmatpush1.bf16.msra.mxu0 0
    %3334 = vmatprep.subr.bf16.mxu0 0
    %3335 = vmatpush1.bf16.msra.mxu0 0
    %3336 = vmatprep.subr.bf16.mxu0 0
    %3337 = vmatpush1.bf16.msra.mxu0 0
    %3338 = vmatprep.subr.bf16.mxu0 0
    %3339 = vmatpush1.bf16.msra.mxu0 0
    %3340 = vmatprep.subr.bf16.mxu0 0
    %3341 = vmatpush1.bf16.msra.mxu0 0
    %3342 = vmatprep.subr.bf16.mxu0 0
    %3343 = vmatpush1.bf16.msra.mxu0 0
    %3344 = vmatprep.subr.bf16.mxu0 0
    %3345 = vmatpush1.bf16.msra.mxu0 0
    %3346 = vmatprep.subr.bf16.mxu0 0
    %3347 = vmatpush1.bf16.msra.mxu0 0
    %3348 = vmatprep.mubr.bf16.mxu0 0
    %3349 = vmatmul.mubr.bf16.gmra.mrb[0].mxu0 %v3102
    %v3350 = vpop.f32.mrb[0].mxu0
    %v3351 = vadd.f32 0.0, %v3350
    %v3352 = vpop.f32.mrb[0].mxu0
    %v3353 = vpop.f32.mrb[0].mxu0
    %v3354 = vadd.f32 0.0, %v3353
    %v3355 = vpop.f32.mrb[0].mxu0
    %3356 = vdwg.mxu0
    %v3357 = vadd.f32 %v489, %v3308
    %v3358 = vadd.f32 %v493, %v3312
    %v3359 = vxor.u32 %v3357, 2147483648
    %v3360 = vxor.u32 %v3358, 2147483648
    %v3361 = vmul.f32 %v3359, 1.442695
    %v3362 = vpow.pop %v3361
    %v3363 = vmul.f32 %v3360, 1.442695
    %v3364 = vpow.pop %v3363
    %v3365 = vadd.f32 %v3362, 1.0
    %v3366 = vadd.f32 %v3364, 1.0
    %v3367 = vrcp.pop %v3365
    %v3368 = vmul.f32 1.0, %v3367
    %v3369 = vrcp.pop %v3366
    %v3370 = vmul.f32 1.0, %v3369
    %v3371 = vadd.f32 %v491, %v3310
    %v3372 = vadd.f32 %v495, %v3314
    %v3373 = vxor.u32 %v3371, 2147483648
    %v3374 = vxor.u32 %v3372, 2147483648
    %v3375 = vmul.f32 %v3373, 1.442695
    %v3376 = vpow.pop %v3375
    %v3377 = vmul.f32 %v3374, 1.442695
    %v3378 = vpow.pop %v3377
    %v3379 = vadd.f32 %v3376, 1.0
    %v3380 = vadd.f32 %v3378, 1.0
    %v3381 = vrcp.pop %v3379
    %v3382 = vmul.f32 1.0, %v3381
    %v3383 = vrcp.pop %v3380
    %v3384 = vmul.f32 1.0, %v3383
    %v3385 = vadd.f32 %v3351, %v1008
    %v3386 = vadd.f32 %v3354, %v1008
    %v3387 = vmul.f32 %v3368, %v3385
    %v3388 = vmul.f32 %v3370, %v3386
    %v3389 = vadd.f32 %v666, %v3387
    %v3390 = vadd.f32 %v669, %v3388
    %v3391 = vtanh.pop %v3389
    %v3392 = vtanh.pop %v3390
    %v3393 = vsub.f32 %v3100, %v3391
    %v3394 = vsub.f32 %v3101, %v3392
    %v3395 = vmul.f32 %v3382, %v3393
    %v3396 = vmul.f32 %v3384, %v3394
    %v3397 = vadd.f32 %v3391, %v3395
    %v3398 = vadd.f32 %v3392, %v3396
    %v3399 = vpack.c.bf16 %v3398, %v3397
    %v3401 = vunpack.c.l.b16 %v3399
    %v3402 = vunpack.c.h.b16 %v3399
    %v3403 = vpack.c.b16 %v3401, %v3401
    %v3404 = vpack.c.b16 %v3402, %v3402
    %s3407 = scalar_lea.vmem [#allocation9], 64
    %3408 = vst [vmem:[%s3407] sm:$0xf] %v3403
    %3409 = vst [vmem:[%s3407 + $0x4] sm:$0xf] %v3404
    %v3410 = vld [vmem:[#allocation8] sm:$0xff]
    %v3411 = vld [vmem:[#allocation8 + $0x8] sm:$0xf]
    %v3412 = vld [vmem:[#allocation8 + $0xc] sm:$0xff]
    %v3413 = vld [vmem:[#allocation8 + $0x14] sm:$0xf]
    %v3414 = vld [vmem:[#allocation8 + $0x18] sm:$0xff]
    %v3415 = vld [vmem:[#allocation8 + $0x20] sm:$0xf]
    %v3416 = vld [vmem:[#allocation8 + $0x24] sm:$0xff]
    %v3417 = vld [vmem:[#allocation8 + $0x2c] sm:$0xf]
    %v3418 = vld [vmem:[#allocation8 + $0x30] sm:$0xff]
    %v3419 = vld [vmem:[#allocation8 + $0x38] sm:$0xf]
    %v3420 = vld [vmem:[#allocation8 + $0x3c] sm:$0xff]
    %v3421 = vld [vmem:[#allocation8 + $0x44] sm:$0xf]
    %v3422 = vld [vmem:[#allocation8 + $0x48] sm:$0xff]
    %v3423 = vld [vmem:[#allocation8 + $0x50] sm:$0xf]
    %v3424 = vld [vmem:[#allocation8 + $0x54] sm:$0xff]
    %v3425 = vld [vmem:[#allocation8 + $0x5c] sm:$0xf]
    %v3426 = vld [vmem:[#allocation8 + $0x60] sm:$0xff]
    %v3427 = vld [vmem:[#allocation8 + $0x68] sm:$0xf]
    %v3428 = vld [vmem:[#allocation8 + $0x6c] sm:$0xff]
    %v3429 = vld [vmem:[#allocation8 + $0x74] sm:$0xf]
    %v3430 = vld [vmem:[#allocation8 + $0x78] sm:$0xff]
    %v3431 = vld [vmem:[#allocation8 + $0x80] sm:$0xf]
    %v3432 = vld [vmem:[#allocation8 + $0x84] sm:$0xff]
    %v3433 = vld [vmem:[#allocation8 + $0x8c] sm:$0xf]
    %v3434 = vld [vmem:[#allocation8 + $0x90] sm:$0xff]
    %v3435 = vld [vmem:[#allocation8 + $0x98] sm:$0xf]
    %v3436 = vld [vmem:[#allocation8 + $0x9c] sm:$0xff]
    %v3437 = vld [vmem:[#allocation8 + $0xa4] sm:$0xf]
    %v3438 = vld [vmem:[#allocation8 + $0xa8] sm:$0xff]
    %v3439 = vld [vmem:[#allocation8 + $0xb0] sm:$0xf]
    %v3440 = vld [vmem:[#allocation8 + $0xb4] sm:$0xff]
    %v3441 = vld [vmem:[#allocation8 + $0xbc] sm:$0xf]
    %v3474 = vunpack.c.l.b16 %v3410
    %v3475 = vunpack.c.h.b16 %v3410
    %v3476 = vunpack.c.l.b16 %v3411
    %v3477 = vunpack.c.l.b16 %v3412
    %v3478 = vunpack.c.h.b16 %v3412
    %v3479 = vunpack.c.l.b16 %v3413
    %v3480 = vunpack.c.l.b16 %v3414
    %v3481 = vunpack.c.h.b16 %v3414
    %v3482 = vunpack.c.l.b16 %v3415
    %v3483 = vunpack.c.l.b16 %v3416
    %v3484 = vunpack.c.h.b16 %v3416
    %v3485 = vunpack.c.l.b16 %v3417
    %v3486 = vunpack.c.l.b16 %v3418
    %v3487 = vunpack.c.h.b16 %v3418
    %v3488 = vunpack.c.l.b16 %v3419
    %v3489 = vunpack.c.l.b16 %v3420
    %v3490 = vunpack.c.h.b16 %v3420
    %v3491 = vunpack.c.l.b16 %v3421
    %v3492 = vunpack.c.l.b16 %v3422
    %v3493 = vunpack.c.h.b16 %v3422
    %v3494 = vunpack.c.l.b16 %v3423
    %v3495 = vunpack.c.l.b16 %v3424
    %v3496 = vunpack.c.h.b16 %v3424
    %v3497 = vunpack.c.l.b16 %v3425
    %v3498 = vunpack.c.l.b16 %v3426
    %v3499 = vunpack.c.h.b16 %v3426
    %v3500 = vunpack.c.l.b16 %v3427
    %v3501 = vunpack.c.l.b16 %v3428
    %v3502 = vunpack.c.h.b16 %v3428
    %v3503 = vunpack.c.l.b16 %v3429
    %v3504 = vunpack.c.l.b16 %v3430
    %v3505 = vunpack.c.h.b16 %v3430
    %v3506 = vunpack.c.l.b16 %v3431
    %v3507 = vunpack.c.l.b16 %v3432
    %v3508 = vunpack.c.h.b16 %v3432
    %v3509 = vunpack.c.l.b16 %v3433
    %v3510 = vunpack.c.l.b16 %v3434
    %v3511 = vunpack.c.h.b16 %v3434
    %v3512 = vunpack.c.l.b16 %v3435
    %v3513 = vunpack.c.l.b16 %v3436
    %v3514 = vunpack.c.h.b16 %v3436
    %v3515 = vunpack.c.l.b16 %v3437
    %v3516 = vunpack.c.l.b16 %v3438
    %v3517 = vunpack.c.h.b16 %v3438
    %v3518 = vunpack.c.l.b16 %v3439
    %v3519 = vunpack.c.l.b16 %v3440
    %v3520 = vunpack.c.h.b16 %v3440
    %v3521 = vunpack.c.l.b16 %v3441
    %v3522 = vpack.c.b16 %v3477, %v3474
    %v3523 = vpack.c.b16 %v3478, %v3475
    %v3524 = vpack.c.b16 %v3479, %v3476
    %v3525 = vpack.c.b16 %v3483, %v3480
    %v3526 = vpack.c.b16 %v3484, %v3481
    %v3527 = vpack.c.b16 %v3485, %v3482
    %v3528 = vpack.c.b16 %v3489, %v3486
    %v3529 = vpack.c.b16 %v3490, %v3487
    %v3530 = vpack.c.b16 %v3491, %v3488
    %v3531 = vpack.c.b16 %v3495, %v3492
    %v3532 = vpack.c.b16 %v3496, %v3493
    %v3533 = vpack.c.b16 %v3497, %v3494
    %v3534 = vpack.c.b16 %v3501, %v3498
    %v3535 = vpack.c.b16 %v3502, %v3499
    %v3536 = vpack.c.b16 %v3503, %v3500
    %v3537 = vpack.c.b16 %v3507, %v3504
    %v3538 = vpack.c.b16 %v3508, %v3505
    %v3539 = vpack.c.b16 %v3509, %v3506
    %v3540 = vpack.c.b16 %v3513, %v3510
    %v3541 = vpack.c.b16 %v3514, %v3511
    %v3542 = vpack.c.b16 %v3515, %v3512
    %v3543 = vpack.c.b16 %v3519, %v3516
    %v3544 = vpack.c.b16 %v3520, %v3517
    %v3545 = vpack.c.b16 %v3521, %v3518
    %3570 = vmatprep.subr.bf16.mxu0 %v3523
    %3571 = vmatpush1.bf16.msra.mxu0 %v3522
    %3572 = vmatprep.subr.bf16.mxu0 %v3526
    %3573 = vmatpush1.bf16.msra.mxu0 %v3525
    %3574 = vmatprep.subr.bf16.mxu0 %v3529
    %3575 = vmatpush1.bf16.msra.mxu0 %v3528
    %3576 = vmatprep.subr.bf16.mxu0 %v3532
    %3577 = vmatpush1.bf16.msra.mxu0 %v3531
    %3578 = vmatprep.subr.bf16.mxu0 %v3535
    %3579 = vmatpush1.bf16.msra.mxu0 %v3534
    %3580 = vmatprep.subr.bf16.mxu0 %v3538
    %3581 = vmatpush1.bf16.msra.mxu0 %v3537
    %3582 = vmatprep.subr.bf16.mxu0 %v3541
    %3583 = vmatpush1.bf16.msra.mxu0 %v3540
    %3584 = vmatprep.subr.bf16.mxu0 %v3544
    %3585 = vmatpush1.bf16.msra.mxu0 %v3543
    %3586 = vmatprep.subr.bf16.mxu0 0
    %3587 = vmatpush1.bf16.msra.mxu0 0
    %3588 = vmatprep.subr.bf16.mxu0 0
    %3589 = vmatpush1.bf16.msra.mxu0 0
    %3590 = vmatprep.subr.bf16.mxu0 0
    %3591 = vmatpush1.bf16.msra.mxu0 0
    %3592 = vmatprep.subr.bf16.mxu0 0
    %3593 = vmatpush1.bf16.msra.mxu0 0
    %3594 = vmatprep.subr.bf16.mxu0 0
    %3595 = vmatpush1.bf16.msra.mxu0 0
    %3596 = vmatprep.subr.bf16.mxu0 0
    %3597 = vmatpush1.bf16.msra.mxu0 0
    %3598 = vmatprep.subr.bf16.mxu0 0
    %3599 = vmatpush1.bf16.msra.mxu0 0
    %3600 = vmatprep.subr.bf16.mxu0 0
    %3601 = vmatpush1.bf16.msra.mxu0 0
    %3602 = vmatprep.mubr.bf16.mxu0 0
    %3603 = vmatmul.mubr.bf16.gmra.mrb[0].mxu0 %v3399
    %v3604 = vpop.f32.mrb[0].mxu0
    %v3605 = vadd.f32 0.0, %v3604
    %v3606 = vpop.f32.mrb[0].mxu0
    %v3607 = vadd.f32 0.0, %v3606
    %v3608 = vpop.f32.mrb[0].mxu0
    %v3609 = vadd.f32 0.0, %v3608
    %v3610 = vpop.f32.mrb[0].mxu0
    %v3611 = vadd.f32 0.0, %v3610
    %3612 = vdwg.mxu0
    %3613 = vmatprep.subr.bf16.mxu0 0
    %3614 = vmatpush1.bf16.msra.mxu0 %v3524
    %3615 = vmatprep.subr.bf16.mxu0 0
    %3616 = vmatpush1.bf16.msra.mxu0 %v3527
    %3617 = vmatprep.subr.bf16.mxu0 0
    %3618 = vmatpush1.bf16.msra.mxu0 %v3530
    %3619 = vmatprep.subr.bf16.mxu0 0
    %3620 = vmatpush1.bf16.msra.mxu0 %v3533
    %3621 = vmatprep.subr.bf16.mxu0 0
    %3622 = vmatpush1.bf16.msra.mxu0 %v3536
    %3623 = vmatprep.subr.bf16.mxu0 0
    %3624 = vmatpush1.bf16.msra.mxu0 %v3539
    %3625 = vmatprep.subr.bf16.mxu0 0
    %3626 = vmatpush1.bf16.msra.mxu0 %v3542
    %3627 = vmatprep.subr.bf16.mxu0 0
    %3628 = vmatpush1.bf16.msra.mxu0 %v3545
    %3629 = vmatprep.subr.bf16.mxu0 0
    %3630 = vmatpush1.bf16.msra.mxu0 0
    %3631 = vmatprep.subr.bf16.mxu0 0
    %3632 = vmatpush1.bf16.msra.mxu0 0
    %3633 = vmatprep.subr.bf16.mxu0 0
    %3634 = vmatpush1.bf16.msra.mxu0 0
    %3635 = vmatprep.subr.bf16.mxu0 0
    %3636 = vmatpush1.bf16.msra.mxu0 0
    %3637 = vmatprep.subr.bf16.mxu0 0
    %3638 = vmatpush1.bf16.msra.mxu0 0
    %3639 = vmatprep.subr.bf16.mxu0 0
    %3640 = vmatpush1.bf16.msra.mxu0 0
    %3641 = vmatprep.subr.bf16.mxu0 0
    %3642 = vmatpush1.bf16.msra.mxu0 0
    %3643 = vmatprep.subr.bf16.mxu0 0
    %3644 = vmatpush1.bf16.msra.mxu0 0
    %3645 = vmatprep.mubr.bf16.mxu0 0
    %3646 = vmatmul.mubr.bf16.gmra.mrb[0].mxu0 %v3399
    %v3647 = vpop.f32.mrb[0].mxu0
    %v3648 = vadd.f32 0.0, %v3647
    %v3649 = vpop.f32.mrb[0].mxu0
    %v3650 = vpop.f32.mrb[0].mxu0
    %v3651 = vadd.f32 0.0, %v3650
    %v3652 = vpop.f32.mrb[0].mxu0
    %3653 = vdwg.mxu0
    %v3654 = vadd.f32 %v499, %v3605
    %v3655 = vadd.f32 %v503, %v3609
    %v3656 = vxor.u32 %v3654, 2147483648
    %v3657 = vxor.u32 %v3655, 2147483648
    %v3658 = vmul.f32 %v3656, 1.442695
    %v3659 = vpow.pop %v3658
    %v3660 = vmul.f32 %v3657, 1.442695
    %v3661 = vpow.pop %v3660
    %v3662 = vadd.f32 %v3659, 1.0
    %v3663 = vadd.f32 %v3661, 1.0
    %v3664 = vrcp.pop %v3662
    %v3665 = vmul.f32 1.0, %v3664
    %v3666 = vrcp.pop %v3663
    %v3667 = vmul.f32 1.0, %v3666
    %v3668 = vadd.f32 %v501, %v3607
    %v3669 = vadd.f32 %v505, %v3611
    %v3670 = vxor.u32 %v3668, 2147483648
    %v3671 = vxor.u32 %v3669, 2147483648
    %v3672 = vmul.f32 %v3670, 1.442695
    %v3673 = vpow.pop %v3672
    %v3674 = vmul.f32 %v3671, 1.442695
    %v3675 = vpow.pop %v3674
    %v3676 = vadd.f32 %v3673, 1.0
    %v3677 = vadd.f32 %v3675, 1.0
    %v3678 = vrcp.pop %v3676
    %v3679 = vmul.f32 1.0, %v3678
    %v3680 = vrcp.pop %v3677
    %v3681 = vmul.f32 1.0, %v3680
    %v3682 = vadd.f32 %v3648, %v1008
    %v3683 = vadd.f32 %v3651, %v1008
    %v3684 = vmul.f32 %v3665, %v3682
    %v3685 = vmul.f32 %v3667, %v3683
    %v3686 = vadd.f32 %v674, %v3684
    %v3687 = vadd.f32 %v677, %v3685
    %v3688 = vtanh.pop %v3686
    %v3689 = vtanh.pop %v3687
    %v3690 = vsub.f32 %v3397, %v3688
    %v3691 = vsub.f32 %v3398, %v3689
    %v3692 = vmul.f32 %v3679, %v3690
    %v3693 = vmul.f32 %v3681, %v3691
    %v3694 = vadd.f32 %v3688, %v3692
    %v3695 = vadd.f32 %v3689, %v3693
    %v3696 = vpack.c.bf16 %v3695, %v3694
    %v3698 = vunpack.c.l.b16 %v3696
    %v3699 = vunpack.c.h.b16 %v3696
    %v3700 = vpack.c.b16 %v3698, %v3698
    %v3701 = vpack.c.b16 %v3699, %v3699
    %s3704 = scalar_lea.vmem [#allocation9], 72
    %3705 = vst [vmem:[%s3704] sm:$0xf] %v3700
    %3706 = vst [vmem:[%s3704 + $0x4] sm:$0xf] %v3701
    %v3707 = vld [vmem:[#allocation8] sm:$0xff]
    %v3708 = vld [vmem:[#allocation8 + $0x8] sm:$0xf]
    %v3709 = vld [vmem:[#allocation8 + $0xc] sm:$0xff]
    %v3710 = vld [vmem:[#allocation8 + $0x14] sm:$0xf]
    %v3711 = vld [vmem:[#allocation8 + $0x18] sm:$0xff]
    %v3712 = vld [vmem:[#allocation8 + $0x20] sm:$0xf]
    %v3713 = vld [vmem:[#allocation8 + $0x24] sm:$0xff]
    %v3714 = vld [vmem:[#allocation8 + $0x2c] sm:$0xf]
    %v3715 = vld [vmem:[#allocation8 + $0x30] sm:$0xff]
    %v3716 = vld [vmem:[#allocation8 + $0x38] sm:$0xf]
    %v3717 = vld [vmem:[#allocation8 + $0x3c] sm:$0xff]
    %v3718 = vld [vmem:[#allocation8 + $0x44] sm:$0xf]
    %v3719 = vld [vmem:[#allocation8 + $0x48] sm:$0xff]
    %v3720 = vld [vmem:[#allocation8 + $0x50] sm:$0xf]
    %v3721 = vld [vmem:[#allocation8 + $0x54] sm:$0xff]
    %v3722 = vld [vmem:[#allocation8 + $0x5c] sm:$0xf]
    %v3723 = vld [vmem:[#allocation8 + $0x60] sm:$0xff]
    %v3724 = vld [vmem:[#allocation8 + $0x68] sm:$0xf]
    %v3725 = vld [vmem:[#allocation8 + $0x6c] sm:$0xff]
    %v3726 = vld [vmem:[#allocation8 + $0x74] sm:$0xf]
    %v3727 = vld [vmem:[#allocation8 + $0x78] sm:$0xff]
    %v3728 = vld [vmem:[#allocation8 + $0x80] sm:$0xf]
    %v3729 = vld [vmem:[#allocation8 + $0x84] sm:$0xff]
    %v3730 = vld [vmem:[#allocation8 + $0x8c] sm:$0xf]
    %v3731 = vld [vmem:[#allocation8 + $0x90] sm:$0xff]
    %v3732 = vld [vmem:[#allocation8 + $0x98] sm:$0xf]
    %v3733 = vld [vmem:[#allocation8 + $0x9c] sm:$0xff]
    %v3734 = vld [vmem:[#allocation8 + $0xa4] sm:$0xf]
    %v3735 = vld [vmem:[#allocation8 + $0xa8] sm:$0xff]
    %v3736 = vld [vmem:[#allocation8 + $0xb0] sm:$0xf]
    %v3737 = vld [vmem:[#allocation8 + $0xb4] sm:$0xff]
    %v3738 = vld [vmem:[#allocation8 + $0xbc] sm:$0xf]
    %v3771 = vunpack.c.l.b16 %v3707
    %v3772 = vunpack.c.h.b16 %v3707
    %v3773 = vunpack.c.l.b16 %v3708
    %v3774 = vunpack.c.l.b16 %v3709
    %v3775 = vunpack.c.h.b16 %v3709
    %v3776 = vunpack.c.l.b16 %v3710
    %v3777 = vunpack.c.l.b16 %v3711
    %v3778 = vunpack.c.h.b16 %v3711
    %v3779 = vunpack.c.l.b16 %v3712
    %v3780 = vunpack.c.l.b16 %v3713
    %v3781 = vunpack.c.h.b16 %v3713
    %v3782 = vunpack.c.l.b16 %v3714
    %v3783 = vunpack.c.l.b16 %v3715
    %v3784 = vunpack.c.h.b16 %v3715
    %v3785 = vunpack.c.l.b16 %v3716
    %v3786 = vunpack.c.l.b16 %v3717
    %v3787 = vunpack.c.h.b16 %v3717
    %v3788 = vunpack.c.l.b16 %v3718
    %v3789 = vunpack.c.l.b16 %v3719
    %v3790 = vunpack.c.h.b16 %v3719
    %v3791 = vunpack.c.l.b16 %v3720
    %v3792 = vunpack.c.l.b16 %v3721
    %v3793 = vunpack.c.h.b16 %v3721
    %v3794 = vunpack.c.l.b16 %v3722
    %v3795 = vunpack.c.l.b16 %v3723
    %v3796 = vunpack.c.h.b16 %v3723
    %v3797 = vunpack.c.l.b16 %v3724
    %v3798 = vunpack.c.l.b16 %v3725
    %v3799 = vunpack.c.h.b16 %v3725
    %v3800 = vunpack.c.l.b16 %v3726
    %v3801 = vunpack.c.l.b16 %v3727
    %v3802 = vunpack.c.h.b16 %v3727
    %v3803 = vunpack.c.l.b16 %v3728
    %v3804 = vunpack.c.l.b16 %v3729
    %v3805 = vunpack.c.h.b16 %v3729
    %v3806 = vunpack.c.l.b16 %v3730
    %v3807 = vunpack.c.l.b16 %v3731
    %v3808 = vunpack.c.h.b16 %v3731
    %v3809 = vunpack.c.l.b16 %v3732
    %v3810 = vunpack.c.l.b16 %v3733
    %v3811 = vunpack.c.h.b16 %v3733
    %v3812 = vunpack.c.l.b16 %v3734
    %v3813 = vunpack.c.l.b16 %v3735
    %v3814 = vunpack.c.h.b16 %v3735
    %v3815 = vunpack.c.l.b16 %v3736
    %v3816 = vunpack.c.l.b16 %v3737
    %v3817 = vunpack.c.h.b16 %v3737
    %v3818 = vunpack.c.l.b16 %v3738
    %v3819 = vpack.c.b16 %v3774, %v3771
    %v3820 = vpack.c.b16 %v3775, %v3772
    %v3821 = vpack.c.b16 %v3776, %v3773
    %v3822 = vpack.c.b16 %v3780, %v3777
    %v3823 = vpack.c.b16 %v3781, %v3778
    %v3824 = vpack.c.b16 %v3782, %v3779
    %v3825 = vpack.c.b16 %v3786, %v3783
    %v3826 = vpack.c.b16 %v3787, %v3784
    %v3827 = vpack.c.b16 %v3788, %v3785
    %v3828 = vpack.c.b16 %v3792, %v3789
    %v3829 = vpack.c.b16 %v3793, %v3790
    %v3830 = vpack.c.b16 %v3794, %v3791
    %v3831 = vpack.c.b16 %v3798, %v3795
    %v3832 = vpack.c.b16 %v3799, %v3796
    %v3833 = vpack.c.b16 %v3800, %v3797
    %v3834 = vpack.c.b16 %v3804, %v3801
    %v3835 = vpack.c.b16 %v3805, %v3802
    %v3836 = vpack.c.b16 %v3806, %v3803
    %v3837 = vpack.c.b16 %v3810, %v3807
    %v3838 = vpack.c.b16 %v3811, %v3808
    %v3839 = vpack.c.b16 %v3812, %v3809
    %v3840 = vpack.c.b16 %v3816, %v3813
    %v3841 = vpack.c.b16 %v3817, %v3814
    %v3842 = vpack.c.b16 %v3818, %v3815
    %3867 = vmatprep.subr.bf16.mxu0 %v3820
    %3868 = vmatpush1.bf16.msra.mxu0 %v3819
    %3869 = vmatprep.subr.bf16.mxu0 %v3823
    %3870 = vmatpush1.bf16.msra.mxu0 %v3822
    %3871 = vmatprep.subr.bf16.mxu0 %v3826
    %3872 = vmatpush1.bf16.msra.mxu0 %v3825
    %3873 = vmatprep.subr.bf16.mxu0 %v3829
    %3874 = vmatpush1.bf16.msra.mxu0 %v3828
    %3875 = vmatprep.subr.bf16.mxu0 %v3832
    %3876 = vmatpush1.bf16.msra.mxu0 %v3831
    %3877 = vmatprep.subr.bf16.mxu0 %v3835
    %3878 = vmatpush1.bf16.msra.mxu0 %v3834
    %3879 = vmatprep.subr.bf16.mxu0 %v3838
    %3880 = vmatpush1.bf16.msra.mxu0 %v3837
    %3881 = vmatprep.subr.bf16.mxu0 %v3841
    %3882 = vmatpush1.bf16.msra.mxu0 %v3840
    %3883 = vmatprep.subr.bf16.mxu0 0
    %3884 = vmatpush1.bf16.msra.mxu0 0
    %3885 = vmatprep.subr.bf16.mxu0 0
    %3886 = vmatpush1.bf16.msra.mxu0 0
    %3887 = vmatprep.subr.bf16.mxu0 0
    %3888 = vmatpush1.bf16.msra.mxu0 0
    %3889 = vmatprep.subr.bf16.mxu0 0
    %3890 = vmatpush1.bf16.msra.mxu0 0
    %3891 = vmatprep.subr.bf16.mxu0 0
    %3892 = vmatpush1.bf16.msra.mxu0 0
    %3893 = vmatprep.subr.bf16.mxu0 0
    %3894 = vmatpush1.bf16.msra.mxu0 0
    %3895 = vmatprep.subr.bf16.mxu0 0
    %3896 = vmatpush1.bf16.msra.mxu0 0
    %3897 = vmatprep.subr.bf16.mxu0 0
    %3898 = vmatpush1.bf16.msra.mxu0 0
    %3899 = vmatprep.mubr.bf16.mxu0 0
    %3900 = vmatmul.mubr.bf16.gmra.mrb[0].mxu0 %v3696
    %v3901 = vpop.f32.mrb[0].mxu0
    %v3902 = vadd.f32 0.0, %v3901
    %v3903 = vpop.f32.mrb[0].mxu0
    %v3904 = vadd.f32 0.0, %v3903
    %v3905 = vpop.f32.mrb[0].mxu0
    %v3906 = vadd.f32 0.0, %v3905
    %v3907 = vpop.f32.mrb[0].mxu0
    %v3908 = vadd.f32 0.0, %v3907
    %3909 = vdwg.mxu0
    %3910 = vmatprep.subr.bf16.mxu0 0
    %3911 = vmatpush1.bf16.msra.mxu0 %v3821
    %3912 = vmatprep.subr.bf16.mxu0 0
    %3913 = vmatpush1.bf16.msra.mxu0 %v3824
    %3914 = vmatprep.subr.bf16.mxu0 0
    %3915 = vmatpush1.bf16.msra.mxu0 %v3827
    %3916 = vmatprep.subr.bf16.mxu0 0
    %3917 = vmatpush1.bf16.msra.mxu0 %v3830
    %3918 = vmatprep.subr.bf16.mxu0 0
    %3919 = vmatpush1.bf16.msra.mxu0 %v3833
    %3920 = vmatprep.subr.bf16.mxu0 0
    %3921 = vmatpush1.bf16.msra.mxu0 %v3836
    %3922 = vmatprep.subr.bf16.mxu0 0
    %3923 = vmatpush1.bf16.msra.mxu0 %v3839
    %3924 = vmatprep.subr.bf16.mxu0 0
    %3925 = vmatpush1.bf16.msra.mxu0 %v3842
    %3926 = vmatprep.subr.bf16.mxu0 0
    %3927 = vmatpush1.bf16.msra.mxu0 0
    %3928 = vmatprep.subr.bf16.mxu0 0
    %3929 = vmatpush1.bf16.msra.mxu0 0
    %3930 = vmatprep.subr.bf16.mxu0 0
    %3931 = vmatpush1.bf16.msra.mxu0 0
    %3932 = vmatprep.subr.bf16.mxu0 0
    %3933 = vmatpush1.bf16.msra.mxu0 0
    %3934 = vmatprep.subr.bf16.mxu0 0
    %3935 = vmatpush1.bf16.msra.mxu0 0
    %3936 = vmatprep.subr.bf16.mxu0 0
    %3937 = vmatpush1.bf16.msra.mxu0 0
    %3938 = vmatprep.subr.bf16.mxu0 0
    %3939 = vmatpush1.bf16.msra.mxu0 0
    %3940 = vmatprep.subr.bf16.mxu0 0
    %3941 = vmatpush1.bf16.msra.mxu0 0
    %3942 = vmatprep.mubr.bf16.mxu0 0
    %3943 = vmatmul.mubr.bf16.gmra.mrb[0].mxu0 %v3696
    %v3944 = vpop.f32.mrb[0].mxu0
    %v3945 = vadd.f32 0.0, %v3944
    %v3946 = vpop.f32.mrb[0].mxu0
    %v3947 = vpop.f32.mrb[0].mxu0
    %v3948 = vadd.f32 0.0, %v3947
    %v3949 = vpop.f32.mrb[0].mxu0
    %3950 = vdwg.mxu0
    %v3951 = vadd.f32 %v509, %v3902
    %v3952 = vadd.f32 %v513, %v3906
    %v3953 = vxor.u32 %v3951, 2147483648
    %v3954 = vxor.u32 %v3952, 2147483648
    %v3955 = vmul.f32 %v3953, 1.442695
    %v3956 = vpow.pop %v3955
    %v3957 = vmul.f32 %v3954, 1.442695
    %v3958 = vpow.pop %v3957
    %v3959 = vadd.f32 %v3956, 1.0
    %v3960 = vadd.f32 %v3958, 1.0
    %v3961 = vrcp.pop %v3959
    %v3962 = vmul.f32 1.0, %v3961
    %v3963 = vrcp.pop %v3960
    %v3964 = vmul.f32 1.0, %v3963
    %v3965 = vadd.f32 %v511, %v3904
    %v3966 = vadd.f32 %v515, %v3908
    %v3967 = vxor.u32 %v3965, 2147483648
    %v3968 = vxor.u32 %v3966, 2147483648
    %v3969 = vmul.f32 %v3967, 1.442695
    %v3970 = vpow.pop %v3969
    %v3971 = vmul.f32 %v3968, 1.442695
    %v3972 = vpow.pop %v3971
    %v3973 = vadd.f32 %v3970, 1.0
    %v3974 = vadd.f32 %v3972, 1.0
    %v3975 = vrcp.pop %v3973
    %v3976 = vmul.f32 1.0, %v3975
    %v3977 = vrcp.pop %v3974
    %v3978 = vmul.f32 1.0, %v3977
    %v3979 = vadd.f32 %v3945, %v1008
    %v3980 = vadd.f32 %v3948, %v1008
    %v3981 = vmul.f32 %v3962, %v3979
    %v3982 = vmul.f32 %v3964, %v3980
    %v3983 = vadd.f32 %v682, %v3981
    %v3984 = vadd.f32 %v685, %v3982
    %v3985 = vtanh.pop %v3983
    %v3986 = vtanh.pop %v3984
    %v3987 = vsub.f32 %v3694, %v3985
    %v3988 = vsub.f32 %v3695, %v3986
    %v3989 = vmul.f32 %v3976, %v3987
    %v3990 = vmul.f32 %v3978, %v3988
    %v3991 = vadd.f32 %v3985, %v3989
    %v3992 = vadd.f32 %v3986, %v3990
    %v3993 = vpack.c.bf16 %v3992, %v3991
    %v3995 = vunpack.c.l.b16 %v3993
    %v3996 = vunpack.c.h.b16 %v3993
    %v3997 = vpack.c.b16 %v3995, %v3995
    %v3998 = vpack.c.b16 %v3996, %v3996
    %s4001 = scalar_lea.vmem [#allocation9], 80
    %4002 = vst [vmem:[%s4001] sm:$0xf] %v3997
    %4003 = vst [vmem:[%s4001 + $0x4] sm:$0xf] %v3998
    %v4004 = vld [vmem:[#allocation8] sm:$0xff]
    %v4005 = vld [vmem:[#allocation8 + $0x8] sm:$0xf]
    %v4006 = vld [vmem:[#allocation8 + $0xc] sm:$0xff]
    %v4007 = vld [vmem:[#allocation8 + $0x14] sm:$0xf]
    %v4008 = vld [vmem:[#allocation8 + $0x18] sm:$0xff]
    %v4009 = vld [vmem:[#allocation8 + $0x20] sm:$0xf]
    %v4010 = vld [vmem:[#allocation8 + $0x24] sm:$0xff]
    %v4011 = vld [vmem:[#allocation8 + $0x2c] sm:$0xf]
    %v4012 = vld [vmem:[#allocation8 + $0x30] sm:$0xff]
    %v4013 = vld [vmem:[#allocation8 + $0x38] sm:$0xf]
    %v4014 = vld [vmem:[#allocation8 + $0x3c] sm:$0xff]
    %v4015 = vld [vmem:[#allocation8 + $0x44] sm:$0xf]
    %v4016 = vld [vmem:[#allocation8 + $0x48] sm:$0xff]
    %v4017 = vld [vmem:[#allocation8 + $0x50] sm:$0xf]
    %v4018 = vld [vmem:[#allocation8 + $0x54] sm:$0xff]
    %v4019 = vld [vmem:[#allocation8 + $0x5c] sm:$0xf]
    %v4020 = vld [vmem:[#allocation8 + $0x60] sm:$0xff]
    %v4021 = vld [vmem:[#allocation8 + $0x68] sm:$0xf]
    %v4022 = vld [vmem:[#allocation8 + $0x6c] sm:$0xff]
    %v4023 = vld [vmem:[#allocation8 + $0x74] sm:$0xf]
    %v4024 = vld [vmem:[#allocation8 + $0x78] sm:$0xff]
    %v4025 = vld [vmem:[#allocation8 + $0x80] sm:$0xf]
    %v4026 = vld [vmem:[#allocation8 + $0x84] sm:$0xff]
    %v4027 = vld [vmem:[#allocation8 + $0x8c] sm:$0xf]
    %v4028 = vld [vmem:[#allocation8 + $0x90] sm:$0xff]
    %v4029 = vld [vmem:[#allocation8 + $0x98] sm:$0xf]
    %v4030 = vld [vmem:[#allocation8 + $0x9c] sm:$0xff]
    %v4031 = vld [vmem:[#allocation8 + $0xa4] sm:$0xf]
    %v4032 = vld [vmem:[#allocation8 + $0xa8] sm:$0xff]
    %v4033 = vld [vmem:[#allocation8 + $0xb0] sm:$0xf]
    %v4034 = vld [vmem:[#allocation8 + $0xb4] sm:$0xff]
    %v4035 = vld [vmem:[#allocation8 + $0xbc] sm:$0xf]
    %v4068 = vunpack.c.l.b16 %v4004
    %v4069 = vunpack.c.h.b16 %v4004
    %v4070 = vunpack.c.l.b16 %v4005
    %v4071 = vunpack.c.l.b16 %v4006
    %v4072 = vunpack.c.h.b16 %v4006
    %v4073 = vunpack.c.l.b16 %v4007
    %v4074 = vunpack.c.l.b16 %v4008
    %v4075 = vunpack.c.h.b16 %v4008
    %v4076 = vunpack.c.l.b16 %v4009
    %v4077 = vunpack.c.l.b16 %v4010
    %v4078 = vunpack.c.h.b16 %v4010
    %v4079 = vunpack.c.l.b16 %v4011
    %v4080 = vunpack.c.l.b16 %v4012
    %v4081 = vunpack.c.h.b16 %v4012
    %v4082 = vunpack.c.l.b16 %v4013
    %v4083 = vunpack.c.l.b16 %v4014
    %v4084 = vunpack.c.h.b16 %v4014
    %v4085 = vunpack.c.l.b16 %v4015
    %v4086 = vunpack.c.l.b16 %v4016
    %v4087 = vunpack.c.h.b16 %v4016
    %v4088 = vunpack.c.l.b16 %v4017
    %v4089 = vunpack.c.l.b16 %v4018
    %v4090 = vunpack.c.h.b16 %v4018
    %v4091 = vunpack.c.l.b16 %v4019
    %v4092 = vunpack.c.l.b16 %v4020
    %v4093 = vunpack.c.h.b16 %v4020
    %v4094 = vunpack.c.l.b16 %v4021
    %v4095 = vunpack.c.l.b16 %v4022
    %v4096 = vunpack.c.h.b16 %v4022
    %v4097 = vunpack.c.l.b16 %v4023
    %v4098 = vunpack.c.l.b16 %v4024
    %v4099 = vunpack.c.h.b16 %v4024
    %v4100 = vunpack.c.l.b16 %v4025
    %v4101 = vunpack.c.l.b16 %v4026
    %v4102 = vunpack.c.h.b16 %v4026
    %v4103 = vunpack.c.l.b16 %v4027
    %v4104 = vunpack.c.l.b16 %v4028
    %v4105 = vunpack.c.h.b16 %v4028
    %v4106 = vunpack.c.l.b16 %v4029
    %v4107 = vunpack.c.l.b16 %v4030
    %v4108 = vunpack.c.h.b16 %v4030
    %v4109 = vunpack.c.l.b16 %v4031
    %v4110 = vunpack.c.l.b16 %v4032
    %v4111 = vunpack.c.h.b16 %v4032
    %v4112 = vunpack.c.l.b16 %v4033
    %v4113 = vunpack.c.l.b16 %v4034
    %v4114 = vunpack.c.h.b16 %v4034
    %v4115 = vunpack.c.l.b16 %v4035
    %v4116 = vpack.c.b16 %v4071, %v4068
    %v4117 = vpack.c.b16 %v4072, %v4069
    %v4118 = vpack.c.b16 %v4073, %v4070
    %v4119 = vpack.c.b16 %v4077, %v4074
    %v4120 = vpack.c.b16 %v4078, %v4075
    %v4121 = vpack.c.b16 %v4079, %v4076
    %v4122 = vpack.c.b16 %v4083, %v4080
    %v4123 = vpack.c.b16 %v4084, %v4081
    %v4124 = vpack.c.b16 %v4085, %v4082
    %v4125 = vpack.c.b16 %v4089, %v4086
    %v4126 = vpack.c.b16 %v4090, %v4087
    %v4127 = vpack.c.b16 %v4091, %v4088
    %v4128 = vpack.c.b16 %v4095, %v4092
    %v4129 = vpack.c.b16 %v4096, %v4093
    %v4130 = vpack.c.b16 %v4097, %v4094
    %v4131 = vpack.c.b16 %v4101, %v4098
    %v4132 = vpack.c.b16 %v4102, %v4099
    %v4133 = vpack.c.b16 %v4103, %v4100
    %v4134 = vpack.c.b16 %v4107, %v4104
    %v4135 = vpack.c.b16 %v4108, %v4105
    %v4136 = vpack.c.b16 %v4109, %v4106
    %v4137 = vpack.c.b16 %v4113, %v4110
    %v4138 = vpack.c.b16 %v4114, %v4111
    %v4139 = vpack.c.b16 %v4115, %v4112
    %4164 = vmatprep.subr.bf16.mxu0 %v4117
    %4165 = vmatpush1.bf16.msra.mxu0 %v4116
    %4166 = vmatprep.subr.bf16.mxu0 %v4120
    %4167 = vmatpush1.bf16.msra.mxu0 %v4119
    %4168 = vmatprep.subr.bf16.mxu0 %v4123
    %4169 = vmatpush1.bf16.msra.mxu0 %v4122
    %4170 = vmatprep.subr.bf16.mxu0 %v4126
    %4171 = vmatpush1.bf16.msra.mxu0 %v4125
    %4172 = vmatprep.subr.bf16.mxu0 %v4129
    %4173 = vmatpush1.bf16.msra.mxu0 %v4128
    %4174 = vmatprep.subr.bf16.mxu0 %v4132
    %4175 = vmatpush1.bf16.msra.mxu0 %v4131
    %4176 = vmatprep.subr.bf16.mxu0 %v4135
    %4177 = vmatpush1.bf16.msra.mxu0 %v4134
    %4178 = vmatprep.subr.bf16.mxu0 %v4138
    %4179 = vmatpush1.bf16.msra.mxu0 %v4137
    %4180 = vmatprep.subr.bf16.mxu0 0
    %4181 = vmatpush1.bf16.msra.mxu0 0
    %4182 = vmatprep.subr.bf16.mxu0 0
    %4183 = vmatpush1.bf16.msra.mxu0 0
    %4184 = vmatprep.subr.bf16.mxu0 0
    %4185 = vmatpush1.bf16.msra.mxu0 0
    %4186 = vmatprep.subr.bf16.mxu0 0
    %4187 = vmatpush1.bf16.msra.mxu0 0
    %4188 = vmatprep.subr.bf16.mxu0 0
    %4189 = vmatpush1.bf16.msra.mxu0 0
    %4190 = vmatprep.subr.bf16.mxu0 0
    %4191 = vmatpush1.bf16.msra.mxu0 0
    %4192 = vmatprep.subr.bf16.mxu0 0
    %4193 = vmatpush1.bf16.msra.mxu0 0
    %4194 = vmatprep.subr.bf16.mxu0 0
    %4195 = vmatpush1.bf16.msra.mxu0 0
    %4196 = vmatprep.mubr.bf16.mxu0 0
    %4197 = vmatmul.mubr.bf16.gmra.mrb[0].mxu0 %v3993
    %v4198 = vpop.f32.mrb[0].mxu0
    %v4199 = vadd.f32 0.0, %v4198
    %v4200 = vpop.f32.mrb[0].mxu0
    %v4201 = vadd.f32 0.0, %v4200
    %v4202 = vpop.f32.mrb[0].mxu0
    %v4203 = vadd.f32 0.0, %v4202
    %v4204 = vpop.f32.mrb[0].mxu0
    %v4205 = vadd.f32 0.0, %v4204
    %4206 = vdwg.mxu0
    %4207 = vmatprep.subr.bf16.mxu0 0
    %4208 = vmatpush1.bf16.msra.mxu0 %v4118
    %4209 = vmatprep.subr.bf16.mxu0 0
    %4210 = vmatpush1.bf16.msra.mxu0 %v4121
    %4211 = vmatprep.subr.bf16.mxu0 0
    %4212 = vmatpush1.bf16.msra.mxu0 %v4124
    %4213 = vmatprep.subr.bf16.mxu0 0
    %4214 = vmatpush1.bf16.msra.mxu0 %v4127
    %4215 = vmatprep.subr.bf16.mxu0 0
    %4216 = vmatpush1.bf16.msra.mxu0 %v4130
    %4217 = vmatprep.subr.bf16.mxu0 0
    %4218 = vmatpush1.bf16.msra.mxu0 %v4133
    %4219 = vmatprep.subr.bf16.mxu0 0
    %4220 = vmatpush1.bf16.msra.mxu0 %v4136
    %4221 = vmatprep.subr.bf16.mxu0 0
    %4222 = vmatpush1.bf16.msra.mxu0 %v4139
    %4223 = vmatprep.subr.bf16.mxu0 0
    %4224 = vmatpush1.bf16.msra.mxu0 0
    %4225 = vmatprep.subr.bf16.mxu0 0
    %4226 = vmatpush1.bf16.msra.mxu0 0
    %4227 = vmatprep.subr.bf16.mxu0 0
    %4228 = vmatpush1.bf16.msra.mxu0 0
    %4229 = vmatprep.subr.bf16.mxu0 0
    %4230 = vmatpush1.bf16.msra.mxu0 0
    %4231 = vmatprep.subr.bf16.mxu0 0
    %4232 = vmatpush1.bf16.msra.mxu0 0
    %4233 = vmatprep.subr.bf16.mxu0 0
    %4234 = vmatpush1.bf16.msra.mxu0 0
    %4235 = vmatprep.subr.bf16.mxu0 0
    %4236 = vmatpush1.bf16.msra.mxu0 0
    %4237 = vmatprep.subr.bf16.mxu0 0
    %4238 = vmatpush1.bf16.msra.mxu0 0
    %4239 = vmatprep.mubr.bf16.mxu0 0
    %4240 = vmatmul.mubr.bf16.gmra.mrb[0].mxu0 %v3993
    %v4241 = vpop.f32.mrb[0].mxu0
    %v4242 = vadd.f32 0.0, %v4241
    %v4243 = vpop.f32.mrb[0].mxu0
    %v4244 = vpop.f32.mrb[0].mxu0
    %v4245 = vadd.f32 0.0, %v4244
    %v4246 = vpop.f32.mrb[0].mxu0
    %4247 = vdwg.mxu0
    %v4248 = vadd.f32 %v519, %v4199
    %v4249 = vadd.f32 %v523, %v4203
    %v4250 = vxor.u32 %v4248, 2147483648
    %v4251 = vxor.u32 %v4249, 2147483648
    %v4252 = vmul.f32 %v4250, 1.442695
    %v4253 = vpow.pop %v4252
    %v4254 = vmul.f32 %v4251, 1.442695
    %v4255 = vpow.pop %v4254
    %v4256 = vadd.f32 %v4253, 1.0
    %v4257 = vadd.f32 %v4255, 1.0
    %v4258 = vrcp.pop %v4256
    %v4259 = vmul.f32 1.0, %v4258
    %v4260 = vrcp.pop %v4257
    %v4261 = vmul.f32 1.0, %v4260
    %v4262 = vadd.f32 %v521, %v4201
    %v4263 = vadd.f32 %v525, %v4205
    %v4264 = vxor.u32 %v4262, 2147483648
    %v4265 = vxor.u32 %v4263, 2147483648
    %v4266 = vmul.f32 %v4264, 1.442695
    %v4267 = vpow.pop %v4266
    %v4268 = vmul.f32 %v4265, 1.442695
    %v4269 = vpow.pop %v4268
    %v4270 = vadd.f32 %v4267, 1.0
    %v4271 = vadd.f32 %v4269, 1.0
    %v4272 = vrcp.pop %v4270
    %v4273 = vmul.f32 1.0, %v4272
    %v4274 = vrcp.pop %v4271
    %v4275 = vmul.f32 1.0, %v4274
    %v4276 = vadd.f32 %v4242, %v1008
    %v4277 = vadd.f32 %v4245, %v1008
    %v4278 = vmul.f32 %v4259, %v4276
    %v4279 = vmul.f32 %v4261, %v4277
    %v4280 = vadd.f32 %v690, %v4278
    %v4281 = vadd.f32 %v693, %v4279
    %v4282 = vtanh.pop %v4280
    %v4283 = vtanh.pop %v4281
    %v4284 = vsub.f32 %v3991, %v4282
    %v4285 = vsub.f32 %v3992, %v4283
    %v4286 = vmul.f32 %v4273, %v4284
    %v4287 = vmul.f32 %v4275, %v4285
    %v4288 = vadd.f32 %v4282, %v4286
    %v4289 = vadd.f32 %v4283, %v4287
    %v4290 = vpack.c.bf16 %v4289, %v4288
    %v4292 = vunpack.c.l.b16 %v4290
    %v4293 = vunpack.c.h.b16 %v4290
    %v4294 = vpack.c.b16 %v4292, %v4292
    %v4295 = vpack.c.b16 %v4293, %v4293
    %s4298 = scalar_lea.vmem [#allocation9], 88
    %4299 = vst [vmem:[%s4298] sm:$0xf] %v4294
    %4300 = vst [vmem:[%s4298 + $0x4] sm:$0xf] %v4295
    %v4301 = vld [vmem:[#allocation8] sm:$0xff]
    %v4302 = vld [vmem:[#allocation8 + $0x8] sm:$0xf]
    %v4303 = vld [vmem:[#allocation8 + $0xc] sm:$0xff]
    %v4304 = vld [vmem:[#allocation8 + $0x14] sm:$0xf]
    %v4305 = vld [vmem:[#allocation8 + $0x18] sm:$0xff]
    %v4306 = vld [vmem:[#allocation8 + $0x20] sm:$0xf]
    %v4307 = vld [vmem:[#allocation8 + $0x24] sm:$0xff]
    %v4308 = vld [vmem:[#allocation8 + $0x2c] sm:$0xf]
    %v4309 = vld [vmem:[#allocation8 + $0x30] sm:$0xff]
    %v4310 = vld [vmem:[#allocation8 + $0x38] sm:$0xf]
    %v4311 = vld [vmem:[#allocation8 + $0x3c] sm:$0xff]
    %v4312 = vld [vmem:[#allocation8 + $0x44] sm:$0xf]
    %v4313 = vld [vmem:[#allocation8 + $0x48] sm:$0xff]
    %v4314 = vld [vmem:[#allocation8 + $0x50] sm:$0xf]
    %v4315 = vld [vmem:[#allocation8 + $0x54] sm:$0xff]
    %v4316 = vld [vmem:[#allocation8 + $0x5c] sm:$0xf]
    %v4317 = vld [vmem:[#allocation8 + $0x60] sm:$0xff]
    %v4318 = vld [vmem:[#allocation8 + $0x68] sm:$0xf]
    %v4319 = vld [vmem:[#allocation8 + $0x6c] sm:$0xff]
    %v4320 = vld [vmem:[#allocation8 + $0x74] sm:$0xf]
    %v4321 = vld [vmem:[#allocation8 + $0x78] sm:$0xff]
    %v4322 = vld [vmem:[#allocation8 + $0x80] sm:$0xf]
    %v4323 = vld [vmem:[#allocation8 + $0x84] sm:$0xff]
    %v4324 = vld [vmem:[#allocation8 + $0x8c] sm:$0xf]
    %v4325 = vld [vmem:[#allocation8 + $0x90] sm:$0xff]
    %v4326 = vld [vmem:[#allocation8 + $0x98] sm:$0xf]
    %v4327 = vld [vmem:[#allocation8 + $0x9c] sm:$0xff]
    %v4328 = vld [vmem:[#allocation8 + $0xa4] sm:$0xf]
    %v4329 = vld [vmem:[#allocation8 + $0xa8] sm:$0xff]
    %v4330 = vld [vmem:[#allocation8 + $0xb0] sm:$0xf]
    %v4331 = vld [vmem:[#allocation8 + $0xb4] sm:$0xff]
    %v4332 = vld [vmem:[#allocation8 + $0xbc] sm:$0xf]
    %v4365 = vunpack.c.l.b16 %v4301
    %v4366 = vunpack.c.h.b16 %v4301
    %v4367 = vunpack.c.l.b16 %v4302
    %v4368 = vunpack.c.l.b16 %v4303
    %v4369 = vunpack.c.h.b16 %v4303
    %v4370 = vunpack.c.l.b16 %v4304
    %v4371 = vunpack.c.l.b16 %v4305
    %v4372 = vunpack.c.h.b16 %v4305
    %v4373 = vunpack.c.l.b16 %v4306
    %v4374 = vunpack.c.l.b16 %v4307
    %v4375 = vunpack.c.h.b16 %v4307
    %v4376 = vunpack.c.l.b16 %v4308
    %v4377 = vunpack.c.l.b16 %v4309
    %v4378 = vunpack.c.h.b16 %v4309
    %v4379 = vunpack.c.l.b16 %v4310
    %v4380 = vunpack.c.l.b16 %v4311
    %v4381 = vunpack.c.h.b16 %v4311
    %v4382 = vunpack.c.l.b16 %v4312
    %v4383 = vunpack.c.l.b16 %v4313
    %v4384 = vunpack.c.h.b16 %v4313
    %v4385 = vunpack.c.l.b16 %v4314
    %v4386 = vunpack.c.l.b16 %v4315
    %v4387 = vunpack.c.h.b16 %v4315
    %v4388 = vunpack.c.l.b16 %v4316
    %v4389 = vunpack.c.l.b16 %v4317
    %v4390 = vunpack.c.h.b16 %v4317
    %v4391 = vunpack.c.l.b16 %v4318
    %v4392 = vunpack.c.l.b16 %v4319
    %v4393 = vunpack.c.h.b16 %v4319
    %v4394 = vunpack.c.l.b16 %v4320
    %v4395 = vunpack.c.l.b16 %v4321
    %v4396 = vunpack.c.h.b16 %v4321
    %v4397 = vunpack.c.l.b16 %v4322
    %v4398 = vunpack.c.l.b16 %v4323
    %v4399 = vunpack.c.h.b16 %v4323
    %v4400 = vunpack.c.l.b16 %v4324
    %v4401 = vunpack.c.l.b16 %v4325
    %v4402 = vunpack.c.h.b16 %v4325
    %v4403 = vunpack.c.l.b16 %v4326
    %v4404 = vunpack.c.l.b16 %v4327
    %v4405 = vunpack.c.h.b16 %v4327
    %v4406 = vunpack.c.l.b16 %v4328
    %v4407 = vunpack.c.l.b16 %v4329
    %v4408 = vunpack.c.h.b16 %v4329
    %v4409 = vunpack.c.l.b16 %v4330
    %v4410 = vunpack.c.l.b16 %v4331
    %v4411 = vunpack.c.h.b16 %v4331
    %v4412 = vunpack.c.l.b16 %v4332
    %v4413 = vpack.c.b16 %v4368, %v4365
    %v4414 = vpack.c.b16 %v4369, %v4366
    %v4415 = vpack.c.b16 %v4370, %v4367
    %v4416 = vpack.c.b16 %v4374, %v4371
    %v4417 = vpack.c.b16 %v4375, %v4372
    %v4418 = vpack.c.b16 %v4376, %v4373
    %v4419 = vpack.c.b16 %v4380, %v4377
    %v4420 = vpack.c.b16 %v4381, %v4378
    %v4421 = vpack.c.b16 %v4382, %v4379
    %v4422 = vpack.c.b16 %v4386, %v4383
    %v4423 = vpack.c.b16 %v4387, %v4384
    %v4424 = vpack.c.b16 %v4388, %v4385
    %v4425 = vpack.c.b16 %v4392, %v4389
    %v4426 = vpack.c.b16 %v4393, %v4390
    %v4427 = vpack.c.b16 %v4394, %v4391
    %v4428 = vpack.c.b16 %v4398, %v4395
    %v4429 = vpack.c.b16 %v4399, %v4396
    %v4430 = vpack.c.b16 %v4400, %v4397
    %v4431 = vpack.c.b16 %v4404, %v4401
    %v4432 = vpack.c.b16 %v4405, %v4402
    %v4433 = vpack.c.b16 %v4406, %v4403
    %v4434 = vpack.c.b16 %v4410, %v4407
    %v4435 = vpack.c.b16 %v4411, %v4408
    %v4436 = vpack.c.b16 %v4412, %v4409
    %4461 = vmatprep.subr.bf16.mxu0 %v4414
    %4462 = vmatpush1.bf16.msra.mxu0 %v4413
    %4463 = vmatprep.subr.bf16.mxu0 %v4417
    %4464 = vmatpush1.bf16.msra.mxu0 %v4416
    %4465 = vmatprep.subr.bf16.mxu0 %v4420
    %4466 = vmatpush1.bf16.msra.mxu0 %v4419
    %4467 = vmatprep.subr.bf16.mxu0 %v4423
    %4468 = vmatpush1.bf16.msra.mxu0 %v4422
    %4469 = vmatprep.subr.bf16.mxu0 %v4426
    %4470 = vmatpush1.bf16.msra.mxu0 %v4425
    %4471 = vmatprep.subr.bf16.mxu0 %v4429
    %4472 = vmatpush1.bf16.msra.mxu0 %v4428
    %4473 = vmatprep.subr.bf16.mxu0 %v4432
    %4474 = vmatpush1.bf16.msra.mxu0 %v4431
    %4475 = vmatprep.subr.bf16.mxu0 %v4435
    %4476 = vmatpush1.bf16.msra.mxu0 %v4434
    %4477 = vmatprep.subr.bf16.mxu0 0
    %4478 = vmatpush1.bf16.msra.mxu0 0
    %4479 = vmatprep.subr.bf16.mxu0 0
    %4480 = vmatpush1.bf16.msra.mxu0 0
    %4481 = vmatprep.subr.bf16.mxu0 0
    %4482 = vmatpush1.bf16.msra.mxu0 0
    %4483 = vmatprep.subr.bf16.mxu0 0
    %4484 = vmatpush1.bf16.msra.mxu0 0
    %4485 = vmatprep.subr.bf16.mxu0 0
    %4486 = vmatpush1.bf16.msra.mxu0 0
    %4487 = vmatprep.subr.bf16.mxu0 0
    %4488 = vmatpush1.bf16.msra.mxu0 0
    %4489 = vmatprep.subr.bf16.mxu0 0
    %4490 = vmatpush1.bf16.msra.mxu0 0
    %4491 = vmatprep.subr.bf16.mxu0 0
    %4492 = vmatpush1.bf16.msra.mxu0 0
    %4493 = vmatprep.mubr.bf16.mxu0 0
    %4494 = vmatmul.mubr.bf16.gmra.mrb[0].mxu0 %v4290
    %v4495 = vpop.f32.mrb[0].mxu0
    %v4496 = vadd.f32 0.0, %v4495
    %v4497 = vpop.f32.mrb[0].mxu0
    %v4498 = vadd.f32 0.0, %v4497
    %v4499 = vpop.f32.mrb[0].mxu0
    %v4500 = vadd.f32 0.0, %v4499
    %v4501 = vpop.f32.mrb[0].mxu0
    %v4502 = vadd.f32 0.0, %v4501
    %4503 = vdwg.mxu0
    %4504 = vmatprep.subr.bf16.mxu0 0
    %4505 = vmatpush1.bf16.msra.mxu0 %v4415
    %4506 = vmatprep.subr.bf16.mxu0 0
    %4507 = vmatpush1.bf16.msra.mxu0 %v4418
    %4508 = vmatprep.subr.bf16.mxu0 0
    %4509 = vmatpush1.bf16.msra.mxu0 %v4421
    %4510 = vmatprep.subr.bf16.mxu0 0
    %4511 = vmatpush1.bf16.msra.mxu0 %v4424
    %4512 = vmatprep.subr.bf16.mxu0 0
    %4513 = vmatpush1.bf16.msra.mxu0 %v4427
    %4514 = vmatprep.subr.bf16.mxu0 0
    %4515 = vmatpush1.bf16.msra.mxu0 %v4430
    %4516 = vmatprep.subr.bf16.mxu0 0
    %4517 = vmatpush1.bf16.msra.mxu0 %v4433
    %4518 = vmatprep.subr.bf16.mxu0 0
    %4519 = vmatpush1.bf16.msra.mxu0 %v4436
    %4520 = vmatprep.subr.bf16.mxu0 0
    %4521 = vmatpush1.bf16.msra.mxu0 0
    %4522 = vmatprep.subr.bf16.mxu0 0
    %4523 = vmatpush1.bf16.msra.mxu0 0
    %4524 = vmatprep.subr.bf16.mxu0 0
    %4525 = vmatpush1.bf16.msra.mxu0 0
    %4526 = vmatprep.subr.bf16.mxu0 0
    %4527 = vmatpush1.bf16.msra.mxu0 0
    %4528 = vmatprep.subr.bf16.mxu0 0
    %4529 = vmatpush1.bf16.msra.mxu0 0
    %4530 = vmatprep.subr.bf16.mxu0 0
    %4531 = vmatpush1.bf16.msra.mxu0 0
    %4532 = vmatprep.subr.bf16.mxu0 0
    %4533 = vmatpush1.bf16.msra.mxu0 0
    %4534 = vmatprep.subr.bf16.mxu0 0
    %4535 = vmatpush1.bf16.msra.mxu0 0
    %4536 = vmatprep.mubr.bf16.mxu0 0
    %4537 = vmatmul.mubr.bf16.gmra.mrb[0].mxu0 %v4290
    %v4538 = vpop.f32.mrb[0].mxu0
    %v4539 = vadd.f32 0.0, %v4538
    %v4540 = vpop.f32.mrb[0].mxu0
    %v4541 = vpop.f32.mrb[0].mxu0
    %v4542 = vadd.f32 0.0, %v4541
    %v4543 = vpop.f32.mrb[0].mxu0
    %4544 = vdwg.mxu0
    %v4545 = vadd.f32 %v529, %v4496
    %v4546 = vadd.f32 %v533, %v4500
    %v4547 = vxor.u32 %v4545, 2147483648
    %v4548 = vxor.u32 %v4546, 2147483648
    %v4549 = vmul.f32 %v4547, 1.442695
    %v4550 = vpow.pop %v4549
    %v4551 = vmul.f32 %v4548, 1.442695
    %v4552 = vpow.pop %v4551
    %v4553 = vadd.f32 %v4550, 1.0
    %v4554 = vadd.f32 %v4552, 1.0
    %v4555 = vrcp.pop %v4553
    %v4556 = vmul.f32 1.0, %v4555
    %v4557 = vrcp.pop %v4554
    %v4558 = vmul.f32 1.0, %v4557
    %v4559 = vadd.f32 %v531, %v4498
    %v4560 = vadd.f32 %v535, %v4502
    %v4561 = vxor.u32 %v4559, 2147483648
    %v4562 = vxor.u32 %v4560, 2147483648
    %v4563 = vmul.f32 %v4561, 1.442695
    %v4564 = vpow.pop %v4563
    %v4565 = vmul.f32 %v4562, 1.442695
    %v4566 = vpow.pop %v4565
    %v4567 = vadd.f32 %v4564, 1.0
    %v4568 = vadd.f32 %v4566, 1.0
    %v4569 = vrcp.pop %v4567
    %v4570 = vmul.f32 1.0, %v4569
    %v4571 = vrcp.pop %v4568
    %v4572 = vmul.f32 1.0, %v4571
    %v4573 = vadd.f32 %v4539, %v1008
    %v4574 = vadd.f32 %v4542, %v1008
    %v4575 = vmul.f32 %v4556, %v4573
    %v4576 = vmul.f32 %v4558, %v4574
    %v4577 = vadd.f32 %v698, %v4575
    %v4578 = vadd.f32 %v701, %v4576
    %v4579 = vtanh.pop %v4577
    %v4580 = vtanh.pop %v4578
    %v4581 = vsub.f32 %v4288, %v4579
    %v4582 = vsub.f32 %v4289, %v4580
    %v4583 = vmul.f32 %v4570, %v4581
    %v4584 = vmul.f32 %v4572, %v4582
    %v4585 = vadd.f32 %v4579, %v4583
    %v4586 = vadd.f32 %v4580, %v4584
    %v4587 = vpack.c.bf16 %v4586, %v4585
    %v4589 = vunpack.c.l.b16 %v4587
    %v4590 = vunpack.c.h.b16 %v4587
    %v4591 = vpack.c.b16 %v4589, %v4589
    %v4592 = vpack.c.b16 %v4590, %v4590
    %s4595 = scalar_lea.vmem [#allocation9], 96
    %4596 = vst [vmem:[%s4595] sm:$0xf] %v4591
    %4597 = vst [vmem:[%s4595 + $0x4] sm:$0xf] %v4592
    %v4598 = vld [vmem:[#allocation8] sm:$0xff]
    %v4599 = vld [vmem:[#allocation8 + $0x8] sm:$0xf]
    %v4600 = vld [vmem:[#allocation8 + $0xc] sm:$0xff]
    %v4601 = vld [vmem:[#allocation8 + $0x14] sm:$0xf]
    %v4602 = vld [vmem:[#allocation8 + $0x18] sm:$0xff]
    %v4603 = vld [vmem:[#allocation8 + $0x20] sm:$0xf]
    %v4604 = vld [vmem:[#allocation8 + $0x24] sm:$0xff]
    %v4605 = vld [vmem:[#allocation8 + $0x2c] sm:$0xf]
    %v4606 = vld [vmem:[#allocation8 + $0x30] sm:$0xff]
    %v4607 = vld [vmem:[#allocation8 + $0x38] sm:$0xf]
    %v4608 = vld [vmem:[#allocation8 + $0x3c] sm:$0xff]
    %v4609 = vld [vmem:[#allocation8 + $0x44] sm:$0xf]
    %v4610 = vld [vmem:[#allocation8 + $0x48] sm:$0xff]
    %v4611 = vld [vmem:[#allocation8 + $0x50] sm:$0xf]
    %v4612 = vld [vmem:[#allocation8 + $0x54] sm:$0xff]
    %v4613 = vld [vmem:[#allocation8 + $0x5c] sm:$0xf]
    %v4614 = vld [vmem:[#allocation8 + $0x60] sm:$0xff]
    %v4615 = vld [vmem:[#allocation8 + $0x68] sm:$0xf]
    %v4616 = vld [vmem:[#allocation8 + $0x6c] sm:$0xff]
    %v4617 = vld [vmem:[#allocation8 + $0x74] sm:$0xf]
    %v4618 = vld [vmem:[#allocation8 + $0x78] sm:$0xff]
    %v4619 = vld [vmem:[#allocation8 + $0x80] sm:$0xf]
    %v4620 = vld [vmem:[#allocation8 + $0x84] sm:$0xff]
    %v4621 = vld [vmem:[#allocation8 + $0x8c] sm:$0xf]
    %v4622 = vld [vmem:[#allocation8 + $0x90] sm:$0xff]
    %v4623 = vld [vmem:[#allocation8 + $0x98] sm:$0xf]
    %v4624 = vld [vmem:[#allocation8 + $0x9c] sm:$0xff]
    %v4625 = vld [vmem:[#allocation8 + $0xa4] sm:$0xf]
    %v4626 = vld [vmem:[#allocation8 + $0xa8] sm:$0xff]
    %v4627 = vld [vmem:[#allocation8 + $0xb0] sm:$0xf]
    %v4628 = vld [vmem:[#allocation8 + $0xb4] sm:$0xff]
    %v4629 = vld [vmem:[#allocation8 + $0xbc] sm:$0xf]
    %v4662 = vunpack.c.l.b16 %v4598
    %v4663 = vunpack.c.h.b16 %v4598
    %v4664 = vunpack.c.l.b16 %v4599
    %v4665 = vunpack.c.l.b16 %v4600
    %v4666 = vunpack.c.h.b16 %v4600
    %v4667 = vunpack.c.l.b16 %v4601
    %v4668 = vunpack.c.l.b16 %v4602
    %v4669 = vunpack.c.h.b16 %v4602
    %v4670 = vunpack.c.l.b16 %v4603
    %v4671 = vunpack.c.l.b16 %v4604
    %v4672 = vunpack.c.h.b16 %v4604
    %v4673 = vunpack.c.l.b16 %v4605
    %v4674 = vunpack.c.l.b16 %v4606
    %v4675 = vunpack.c.h.b16 %v4606
    %v4676 = vunpack.c.l.b16 %v4607
    %v4677 = vunpack.c.l.b16 %v4608
    %v4678 = vunpack.c.h.b16 %v4608
    %v4679 = vunpack.c.l.b16 %v4609
    %v4680 = vunpack.c.l.b16 %v4610
    %v4681 = vunpack.c.h.b16 %v4610
    %v4682 = vunpack.c.l.b16 %v4611
    %v4683 = vunpack.c.l.b16 %v4612
    %v4684 = vunpack.c.h.b16 %v4612
    %v4685 = vunpack.c.l.b16 %v4613
    %v4686 = vunpack.c.l.b16 %v4614
    %v4687 = vunpack.c.h.b16 %v4614
    %v4688 = vunpack.c.l.b16 %v4615
    %v4689 = vunpack.c.l.b16 %v4616
    %v4690 = vunpack.c.h.b16 %v4616
    %v4691 = vunpack.c.l.b16 %v4617
    %v4692 = vunpack.c.l.b16 %v4618
    %v4693 = vunpack.c.h.b16 %v4618
    %v4694 = vunpack.c.l.b16 %v4619
    %v4695 = vunpack.c.l.b16 %v4620
    %v4696 = vunpack.c.h.b16 %v4620
    %v4697 = vunpack.c.l.b16 %v4621
    %v4698 = vunpack.c.l.b16 %v4622
    %v4699 = vunpack.c.h.b16 %v4622
    %v4700 = vunpack.c.l.b16 %v4623
    %v4701 = vunpack.c.l.b16 %v4624
    %v4702 = vunpack.c.h.b16 %v4624
    %v4703 = vunpack.c.l.b16 %v4625
    %v4704 = vunpack.c.l.b16 %v4626
    %v4705 = vunpack.c.h.b16 %v4626
    %v4706 = vunpack.c.l.b16 %v4627
    %v4707 = vunpack.c.l.b16 %v4628
    %v4708 = vunpack.c.h.b16 %v4628
    %v4709 = vunpack.c.l.b16 %v4629
    %v4710 = vpack.c.b16 %v4665, %v4662
    %v4711 = vpack.c.b16 %v4666, %v4663
    %v4712 = vpack.c.b16 %v4667, %v4664
    %v4713 = vpack.c.b16 %v4671, %v4668
    %v4714 = vpack.c.b16 %v4672, %v4669
    %v4715 = vpack.c.b16 %v4673, %v4670
    %v4716 = vpack.c.b16 %v4677, %v4674
    %v4717 = vpack.c.b16 %v4678, %v4675
    %v4718 = vpack.c.b16 %v4679, %v4676
    %v4719 = vpack.c.b16 %v4683, %v4680
    %v4720 = vpack.c.b16 %v4684, %v4681
    %v4721 = vpack.c.b16 %v4685, %v4682
    %v4722 = vpack.c.b16 %v4689, %v4686
    %v4723 = vpack.c.b16 %v4690, %v4687
    %v4724 = vpack.c.b16 %v4691, %v4688
    %v4725 = vpack.c.b16 %v4695, %v4692
    %v4726 = vpack.c.b16 %v4696, %v4693
    %v4727 = vpack.c.b16 %v4697, %v4694
    %v4728 = vpack.c.b16 %v4701, %v4698
    %v4729 = vpack.c.b16 %v4702, %v4699
    %v4730 = vpack.c.b16 %v4703, %v4700
    %v4731 = vpack.c.b16 %v4707, %v4704
    %v4732 = vpack.c.b16 %v4708, %v4705
    %v4733 = vpack.c.b16 %v4709, %v4706
    %4758 = vmatprep.subr.bf16.mxu0 %v4711
    %4759 = vmatpush1.bf16.msra.mxu0 %v4710
    %4760 = vmatprep.subr.bf16.mxu0 %v4714
    %4761 = vmatpush1.bf16.msra.mxu0 %v4713
    %4762 = vmatprep.subr.bf16.mxu0 %v4717
    %4763 = vmatpush1.bf16.msra.mxu0 %v4716
    %4764 = vmatprep.subr.bf16.mxu0 %v4720
    %4765 = vmatpush1.bf16.msra.mxu0 %v4719
    %4766 = vmatprep.subr.bf16.mxu0 %v4723
    %4767 = vmatpush1.bf16.msra.mxu0 %v4722
    %4768 = vmatprep.subr.bf16.mxu0 %v4726
    %4769 = vmatpush1.bf16.msra.mxu0 %v4725
    %4770 = vmatprep.subr.bf16.mxu0 %v4729
    %4771 = vmatpush1.bf16.msra.mxu0 %v4728
    %4772 = vmatprep.subr.bf16.mxu0 %v4732
    %4773 = vmatpush1.bf16.msra.mxu0 %v4731
    %4774 = vmatprep.subr.bf16.mxu0 0
    %4775 = vmatpush1.bf16.msra.mxu0 0
    %4776 = vmatprep.subr.bf16.mxu0 0
    %4777 = vmatpush1.bf16.msra.mxu0 0
    %4778 = vmatprep.subr.bf16.mxu0 0
    %4779 = vmatpush1.bf16.msra.mxu0 0
    %4780 = vmatprep.subr.bf16.mxu0 0
    %4781 = vmatpush1.bf16.msra.mxu0 0
    %4782 = vmatprep.subr.bf16.mxu0 0
    %4783 = vmatpush1.bf16.msra.mxu0 0
    %4784 = vmatprep.subr.bf16.mxu0 0
    %4785 = vmatpush1.bf16.msra.mxu0 0
    %4786 = vmatprep.subr.bf16.mxu0 0
    %4787 = vmatpush1.bf16.msra.mxu0 0
    %4788 = vmatprep.subr.bf16.mxu0 0
    %4789 = vmatpush1.bf16.msra.mxu0 0
    %4790 = vmatprep.mubr.bf16.mxu0 0
    %4791 = vmatmul.mubr.bf16.gmra.mrb[0].mxu0 %v4587
    %v4792 = vpop.f32.mrb[0].mxu0
    %v4793 = vadd.f32 0.0, %v4792
    %v4794 = vpop.f32.mrb[0].mxu0
    %v4795 = vadd.f32 0.0, %v4794
    %v4796 = vpop.f32.mrb[0].mxu0
    %v4797 = vadd.f32 0.0, %v4796
    %v4798 = vpop.f32.mrb[0].mxu0
    %v4799 = vadd.f32 0.0, %v4798
    %4800 = vdwg.mxu0
    %4801 = vmatprep.subr.bf16.mxu0 0
    %4802 = vmatpush1.bf16.msra.mxu0 %v4712
    %4803 = vmatprep.subr.bf16.mxu0 0
    %4804 = vmatpush1.bf16.msra.mxu0 %v4715
    %4805 = vmatprep.subr.bf16.mxu0 0
    %4806 = vmatpush1.bf16.msra.mxu0 %v4718
    %4807 = vmatprep.subr.bf16.mxu0 0
    %4808 = vmatpush1.bf16.msra.mxu0 %v4721
    %4809 = vmatprep.subr.bf16.mxu0 0
    %4810 = vmatpush1.bf16.msra.mxu0 %v4724
    %4811 = vmatprep.subr.bf16.mxu0 0
    %4812 = vmatpush1.bf16.msra.mxu0 %v4727
    %4813 = vmatprep.subr.bf16.mxu0 0
    %4814 = vmatpush1.bf16.msra.mxu0 %v4730
    %4815 = vmatprep.subr.bf16.mxu0 0
    %4816 = vmatpush1.bf16.msra.mxu0 %v4733
    %4817 = vmatprep.subr.bf16.mxu0 0
    %4818 = vmatpush1.bf16.msra.mxu0 0
    %4819 = vmatprep.subr.bf16.mxu0 0
    %4820 = vmatpush1.bf16.msra.mxu0 0
    %4821 = vmatprep.subr.bf16.mxu0 0
    %4822 = vmatpush1.bf16.msra.mxu0 0
    %4823 = vmatprep.subr.bf16.mxu0 0
    %4824 = vmatpush1.bf16.msra.mxu0 0
    %4825 = vmatprep.subr.bf16.mxu0 0
    %4826 = vmatpush1.bf16.msra.mxu0 0
    %4827 = vmatprep.subr.bf16.mxu0 0
    %4828 = vmatpush1.bf16.msra.mxu0 0
    %4829 = vmatprep.subr.bf16.mxu0 0
    %4830 = vmatpush1.bf16.msra.mxu0 0
    %4831 = vmatprep.subr.bf16.mxu0 0
    %4832 = vmatpush1.bf16.msra.mxu0 0
    %4833 = vmatprep.mubr.bf16.mxu0 0
    %4834 = vmatmul.mubr.bf16.gmra.mrb[0].mxu0 %v4587
    %v4835 = vpop.f32.mrb[0].mxu0
    %v4836 = vadd.f32 0.0, %v4835
    %v4837 = vpop.f32.mrb[0].mxu0
    %v4838 = vpop.f32.mrb[0].mxu0
    %v4839 = vadd.f32 0.0, %v4838
    %v4840 = vpop.f32.mrb[0].mxu0
    %4841 = vdwg.mxu0
    %v4842 = vadd.f32 %v539, %v4793
    %v4843 = vadd.f32 %v543, %v4797
    %v4844 = vxor.u32 %v4842, 2147483648
    %v4845 = vxor.u32 %v4843, 2147483648
    %v4846 = vmul.f32 %v4844, 1.442695
    %v4847 = vpow.pop %v4846
    %v4848 = vmul.f32 %v4845, 1.442695
    %v4849 = vpow.pop %v4848
    %v4850 = vadd.f32 %v4847, 1.0
    %v4851 = vadd.f32 %v4849, 1.0
    %v4852 = vrcp.pop %v4850
    %v4853 = vmul.f32 1.0, %v4852
    %v4854 = vrcp.pop %v4851
    %v4855 = vmul.f32 1.0, %v4854
    %v4856 = vadd.f32 %v541, %v4795
    %v4857 = vadd.f32 %v545, %v4799
    %v4858 = vxor.u32 %v4856, 2147483648
    %v4859 = vxor.u32 %v4857, 2147483648
    %v4860 = vmul.f32 %v4858, 1.442695
    %v4861 = vpow.pop %v4860
    %v4862 = vmul.f32 %v4859, 1.442695
    %v4863 = vpow.pop %v4862
    %v4864 = vadd.f32 %v4861, 1.0
    %v4865 = vadd.f32 %v4863, 1.0
    %v4866 = vrcp.pop %v4864
    %v4867 = vmul.f32 1.0, %v4866
    %v4868 = vrcp.pop %v4865
    %v4869 = vmul.f32 1.0, %v4868
    %v4870 = vadd.f32 %v4836, %v1008
    %v4871 = vadd.f32 %v4839, %v1008
    %v4872 = vmul.f32 %v4853, %v4870
    %v4873 = vmul.f32 %v4855, %v4871
    %v4874 = vadd.f32 %v706, %v4872
    %v4875 = vadd.f32 %v709, %v4873
    %v4876 = vtanh.pop %v4874
    %v4877 = vtanh.pop %v4875
    %v4878 = vsub.f32 %v4585, %v4876
    %v4879 = vsub.f32 %v4586, %v4877
    %v4880 = vmul.f32 %v4867, %v4878
    %v4881 = vmul.f32 %v4869, %v4879
    %v4882 = vadd.f32 %v4876, %v4880
    %v4883 = vadd.f32 %v4877, %v4881
    %v4884 = vpack.c.bf16 %v4883, %v4882
    %v4886 = vunpack.c.l.b16 %v4884
    %v4887 = vunpack.c.h.b16 %v4884
    %v4888 = vpack.c.b16 %v4886, %v4886
    %v4889 = vpack.c.b16 %v4887, %v4887
    %s4892 = scalar_lea.vmem [#allocation9], 104
    %4893 = vst [vmem:[%s4892] sm:$0xf] %v4888
    %4894 = vst [vmem:[%s4892 + $0x4] sm:$0xf] %v4889
    %v4895 = vld [vmem:[#allocation8] sm:$0xff]
    %v4896 = vld [vmem:[#allocation8 + $0x8] sm:$0xf]
    %v4897 = vld [vmem:[#allocation8 + $0xc] sm:$0xff]
    %v4898 = vld [vmem:[#allocation8 + $0x14] sm:$0xf]
    %v4899 = vld [vmem:[#allocation8 + $0x18] sm:$0xff]
    %v4900 = vld [vmem:[#allocation8 + $0x20] sm:$0xf]
    %v4901 = vld [vmem:[#allocation8 + $0x24] sm:$0xff]
    %v4902 = vld [vmem:[#allocation8 + $0x2c] sm:$0xf]
    %v4903 = vld [vmem:[#allocation8 + $0x30] sm:$0xff]
    %v4904 = vld [vmem:[#allocation8 + $0x38] sm:$0xf]
    %v4905 = vld [vmem:[#allocation8 + $0x3c] sm:$0xff]
    %v4906 = vld [vmem:[#allocation8 + $0x44] sm:$0xf]
    %v4907 = vld [vmem:[#allocation8 + $0x48] sm:$0xff]
    %v4908 = vld [vmem:[#allocation8 + $0x50] sm:$0xf]
    %v4909 = vld [vmem:[#allocation8 + $0x54] sm:$0xff]
    %v4910 = vld [vmem:[#allocation8 + $0x5c] sm:$0xf]
    %v4911 = vld [vmem:[#allocation8 + $0x60] sm:$0xff]
    %v4912 = vld [vmem:[#allocation8 + $0x68] sm:$0xf]
    %v4913 = vld [vmem:[#allocation8 + $0x6c] sm:$0xff]
    %v4914 = vld [vmem:[#allocation8 + $0x74] sm:$0xf]
    %v4915 = vld [vmem:[#allocation8 + $0x78] sm:$0xff]
    %v4916 = vld [vmem:[#allocation8 + $0x80] sm:$0xf]
    %v4917 = vld [vmem:[#allocation8 + $0x84] sm:$0xff]
    %v4918 = vld [vmem:[#allocation8 + $0x8c] sm:$0xf]
    %v4919 = vld [vmem:[#allocation8 + $0x90] sm:$0xff]
    %v4920 = vld [vmem:[#allocation8 + $0x98] sm:$0xf]
    %v4921 = vld [vmem:[#allocation8 + $0x9c] sm:$0xff]
    %v4922 = vld [vmem:[#allocation8 + $0xa4] sm:$0xf]
    %v4923 = vld [vmem:[#allocation8 + $0xa8] sm:$0xff]
    %v4924 = vld [vmem:[#allocation8 + $0xb0] sm:$0xf]
    %v4925 = vld [vmem:[#allocation8 + $0xb4] sm:$0xff]
    %v4926 = vld [vmem:[#allocation8 + $0xbc] sm:$0xf]
    %v4959 = vunpack.c.l.b16 %v4895
    %v4960 = vunpack.c.h.b16 %v4895
    %v4961 = vunpack.c.l.b16 %v4896
    %v4962 = vunpack.c.l.b16 %v4897
    %v4963 = vunpack.c.h.b16 %v4897
    %v4964 = vunpack.c.l.b16 %v4898
    %v4965 = vunpack.c.l.b16 %v4899
    %v4966 = vunpack.c.h.b16 %v4899
    %v4967 = vunpack.c.l.b16 %v4900
    %v4968 = vunpack.c.l.b16 %v4901
    %v4969 = vunpack.c.h.b16 %v4901
    %v4970 = vunpack.c.l.b16 %v4902
    %v4971 = vunpack.c.l.b16 %v4903
    %v4972 = vunpack.c.h.b16 %v4903
    %v4973 = vunpack.c.l.b16 %v4904
    %v4974 = vunpack.c.l.b16 %v4905
    %v4975 = vunpack.c.h.b16 %v4905
    %v4976 = vunpack.c.l.b16 %v4906
    %v4977 = vunpack.c.l.b16 %v4907
    %v4978 = vunpack.c.h.b16 %v4907
    %v4979 = vunpack.c.l.b16 %v4908
    %v4980 = vunpack.c.l.b16 %v4909
    %v4981 = vunpack.c.h.b16 %v4909
    %v4982 = vunpack.c.l.b16 %v4910
    %v4983 = vunpack.c.l.b16 %v4911
    %v4984 = vunpack.c.h.b16 %v4911
    %v4985 = vunpack.c.l.b16 %v4912
    %v4986 = vunpack.c.l.b16 %v4913
    %v4987 = vunpack.c.h.b16 %v4913
    %v4988 = vunpack.c.l.b16 %v4914
    %v4989 = vunpack.c.l.b16 %v4915
    %v4990 = vunpack.c.h.b16 %v4915
    %v4991 = vunpack.c.l.b16 %v4916
    %v4992 = vunpack.c.l.b16 %v4917
    %v4993 = vunpack.c.h.b16 %v4917
    %v4994 = vunpack.c.l.b16 %v4918
    %v4995 = vunpack.c.l.b16 %v4919
    %v4996 = vunpack.c.h.b16 %v4919
    %v4997 = vunpack.c.l.b16 %v4920
    %v4998 = vunpack.c.l.b16 %v4921
    %v4999 = vunpack.c.h.b16 %v4921
    %v5000 = vunpack.c.l.b16 %v4922
    %v5001 = vunpack.c.l.b16 %v4923
    %v5002 = vunpack.c.h.b16 %v4923
    %v5003 = vunpack.c.l.b16 %v4924
    %v5004 = vunpack.c.l.b16 %v4925
    %v5005 = vunpack.c.h.b16 %v4925
    %v5006 = vunpack.c.l.b16 %v4926
    %v5007 = vpack.c.b16 %v4962, %v4959
    %v5008 = vpack.c.b16 %v4963, %v4960
    %v5009 = vpack.c.b16 %v4964, %v4961
    %v5010 = vpack.c.b16 %v4968, %v4965
    %v5011 = vpack.c.b16 %v4969, %v4966
    %v5012 = vpack.c.b16 %v4970, %v4967
    %v5013 = vpack.c.b16 %v4974, %v4971
    %v5014 = vpack.c.b16 %v4975, %v4972
    %v5015 = vpack.c.b16 %v4976, %v4973
    %v5016 = vpack.c.b16 %v4980, %v4977
    %v5017 = vpack.c.b16 %v4981, %v4978
    %v5018 = vpack.c.b16 %v4982, %v4979
    %v5019 = vpack.c.b16 %v4986, %v4983
    %v5020 = vpack.c.b16 %v4987, %v4984
    %v5021 = vpack.c.b16 %v4988, %v4985
    %v5022 = vpack.c.b16 %v4992, %v4989
    %v5023 = vpack.c.b16 %v4993, %v4990
    %v5024 = vpack.c.b16 %v4994, %v4991
    %v5025 = vpack.c.b16 %v4998, %v4995
    %v5026 = vpack.c.b16 %v4999, %v4996
    %v5027 = vpack.c.b16 %v5000, %v4997
    %v5028 = vpack.c.b16 %v5004, %v5001
    %v5029 = vpack.c.b16 %v5005, %v5002
    %v5030 = vpack.c.b16 %v5006, %v5003
    %5055 = vmatprep.subr.bf16.mxu0 %v5008
    %5056 = vmatpush1.bf16.msra.mxu0 %v5007
    %5057 = vmatprep.subr.bf16.mxu0 %v5011
    %5058 = vmatpush1.bf16.msra.mxu0 %v5010
    %5059 = vmatprep.subr.bf16.mxu0 %v5014
    %5060 = vmatpush1.bf16.msra.mxu0 %v5013
    %5061 = vmatprep.subr.bf16.mxu0 %v5017
    %5062 = vmatpush1.bf16.msra.mxu0 %v5016
    %5063 = vmatprep.subr.bf16.mxu0 %v5020
    %5064 = vmatpush1.bf16.msra.mxu0 %v5019
    %5065 = vmatprep.subr.bf16.mxu0 %v5023
    %5066 = vmatpush1.bf16.msra.mxu0 %v5022
    %5067 = vmatprep.subr.bf16.mxu0 %v5026
    %5068 = vmatpush1.bf16.msra.mxu0 %v5025
    %5069 = vmatprep.subr.bf16.mxu0 %v5029
    %5070 = vmatpush1.bf16.msra.mxu0 %v5028
    %5071 = vmatprep.subr.bf16.mxu0 0
    %5072 = vmatpush1.bf16.msra.mxu0 0
    %5073 = vmatprep.subr.bf16.mxu0 0
    %5074 = vmatpush1.bf16.msra.mxu0 0
    %5075 = vmatprep.subr.bf16.mxu0 0
    %5076 = vmatpush1.bf16.msra.mxu0 0
    %5077 = vmatprep.subr.bf16.mxu0 0
    %5078 = vmatpush1.bf16.msra.mxu0 0
    %5079 = vmatprep.subr.bf16.mxu0 0
    %5080 = vmatpush1.bf16.msra.mxu0 0
    %5081 = vmatprep.subr.bf16.mxu0 0
    %5082 = vmatpush1.bf16.msra.mxu0 0
    %5083 = vmatprep.subr.bf16.mxu0 0
    %5084 = vmatpush1.bf16.msra.mxu0 0
    %5085 = vmatprep.subr.bf16.mxu0 0
    %5086 = vmatpush1.bf16.msra.mxu0 0
    %5087 = vmatprep.mubr.bf16.mxu0 0
    %5088 = vmatmul.mubr.bf16.gmra.mrb[0].mxu0 %v4884
    %v5089 = vpop.f32.mrb[0].mxu0
    %v5090 = vadd.f32 0.0, %v5089
    %v5091 = vpop.f32.mrb[0].mxu0
    %v5092 = vadd.f32 0.0, %v5091
    %v5093 = vpop.f32.mrb[0].mxu0
    %v5094 = vadd.f32 0.0, %v5093
    %v5095 = vpop.f32.mrb[0].mxu0
    %v5096 = vadd.f32 0.0, %v5095
    %5097 = vdwg.mxu0
    %5098 = vmatprep.subr.bf16.mxu0 0
    %5099 = vmatpush1.bf16.msra.mxu0 %v5009
    %5100 = vmatprep.subr.bf16.mxu0 0
    %5101 = vmatpush1.bf16.msra.mxu0 %v5012
    %5102 = vmatprep.subr.bf16.mxu0 0
    %5103 = vmatpush1.bf16.msra.mxu0 %v5015
    %5104 = vmatprep.subr.bf16.mxu0 0
    %5105 = vmatpush1.bf16.msra.mxu0 %v5018
    %5106 = vmatprep.subr.bf16.mxu0 0
    %5107 = vmatpush1.bf16.msra.mxu0 %v5021
    %5108 = vmatprep.subr.bf16.mxu0 0
    %5109 = vmatpush1.bf16.msra.mxu0 %v5024
    %5110 = vmatprep.subr.bf16.mxu0 0
    %5111 = vmatpush1.bf16.msra.mxu0 %v5027
    %5112 = vmatprep.subr.bf16.mxu0 0
    %5113 = vmatpush1.bf16.msra.mxu0 %v5030
    %5114 = vmatprep.subr.bf16.mxu0 0
    %5115 = vmatpush1.bf16.msra.mxu0 0
    %5116 = vmatprep.subr.bf16.mxu0 0
    %5117 = vmatpush1.bf16.msra.mxu0 0
    %5118 = vmatprep.subr.bf16.mxu0 0
    %5119 = vmatpush1.bf16.msra.mxu0 0
    %5120 = vmatprep.subr.bf16.mxu0 0
    %5121 = vmatpush1.bf16.msra.mxu0 0
    %5122 = vmatprep.subr.bf16.mxu0 0
    %5123 = vmatpush1.bf16.msra.mxu0 0
    %5124 = vmatprep.subr.bf16.mxu0 0
    %5125 = vmatpush1.bf16.msra.mxu0 0
    %5126 = vmatprep.subr.bf16.mxu0 0
    %5127 = vmatpush1.bf16.msra.mxu0 0
    %5128 = vmatprep.subr.bf16.mxu0 0
    %5129 = vmatpush1.bf16.msra.mxu0 0
    %5130 = vmatprep.mubr.bf16.mxu0 0
    %5131 = vmatmul.mubr.bf16.gmra.mrb[0].mxu0 %v4884
    %v5132 = vpop.f32.mrb[0].mxu0
    %v5133 = vadd.f32 0.0, %v5132
    %v5134 = vpop.f32.mrb[0].mxu0
    %v5135 = vpop.f32.mrb[0].mxu0
    %v5136 = vadd.f32 0.0, %v5135
    %v5137 = vpop.f32.mrb[0].mxu0
    %5138 = vdwg.mxu0
    %v5139 = vadd.f32 %v549, %v5090
    %v5140 = vadd.f32 %v553, %v5094
    %v5141 = vxor.u32 %v5139, 2147483648
    %v5142 = vxor.u32 %v5140, 2147483648
    %v5143 = vmul.f32 %v5141, 1.442695
    %v5144 = vpow.pop %v5143
    %v5145 = vmul.f32 %v5142, 1.442695
    %v5146 = vpow.pop %v5145
    %v5147 = vadd.f32 %v5144, 1.0
    %v5148 = vadd.f32 %v5146, 1.0
    %v5149 = vrcp.pop %v5147
    %v5150 = vmul.f32 1.0, %v5149
    %v5151 = vrcp.pop %v5148
    %v5152 = vmul.f32 1.0, %v5151
    %v5153 = vadd.f32 %v551, %v5092
    %v5154 = vadd.f32 %v555, %v5096
    %v5155 = vxor.u32 %v5153, 2147483648
    %v5156 = vxor.u32 %v5154, 2147483648
    %v5157 = vmul.f32 %v5155, 1.442695
    %v5158 = vpow.pop %v5157
    %v5159 = vmul.f32 %v5156, 1.442695
    %v5160 = vpow.pop %v5159
    %v5161 = vadd.f32 %v5158, 1.0
    %v5162 = vadd.f32 %v5160, 1.0
    %v5163 = vrcp.pop %v5161
    %v5164 = vmul.f32 1.0, %v5163
    %v5165 = vrcp.pop %v5162
    %v5166 = vmul.f32 1.0, %v5165
    %v5167 = vadd.f32 %v5133, %v1008
    %v5168 = vadd.f32 %v5136, %v1008
    %v5169 = vmul.f32 %v5150, %v5167
    %v5170 = vmul.f32 %v5152, %v5168
    %v5171 = vadd.f32 %v714, %v5169
    %v5172 = vadd.f32 %v717, %v5170
    %v5173 = vtanh.pop %v5171
    %v5174 = vtanh.pop %v5172
    %v5175 = vsub.f32 %v4882, %v5173
    %v5176 = vsub.f32 %v4883, %v5174
    %v5177 = vmul.f32 %v5164, %v5175
    %v5178 = vmul.f32 %v5166, %v5176
    %v5179 = vadd.f32 %v5173, %v5177
    %v5180 = vadd.f32 %v5174, %v5178
    %v5181 = vpack.c.bf16 %v5180, %v5179
    %v5183 = vunpack.c.l.b16 %v5181
    %v5184 = vunpack.c.h.b16 %v5181
    %v5185 = vpack.c.b16 %v5183, %v5183
    %v5186 = vpack.c.b16 %v5184, %v5184
    %s5189 = scalar_lea.vmem [#allocation9], 112
    %5190 = vst [vmem:[%s5189] sm:$0xf] %v5185
    %5191 = vst [vmem:[%s5189 + $0x4] sm:$0xf] %v5186
    %v5192 = vld [vmem:[#allocation8] sm:$0xff]
    %v5193 = vld [vmem:[#allocation8 + $0x8] sm:$0xf]
    %v5194 = vld [vmem:[#allocation8 + $0xc] sm:$0xff]
    %v5195 = vld [vmem:[#allocation8 + $0x14] sm:$0xf]
    %v5196 = vld [vmem:[#allocation8 + $0x18] sm:$0xff]
    %v5197 = vld [vmem:[#allocation8 + $0x20] sm:$0xf]
    %v5198 = vld [vmem:[#allocation8 + $0x24] sm:$0xff]
    %v5199 = vld [vmem:[#allocation8 + $0x2c] sm:$0xf]
    %v5200 = vld [vmem:[#allocation8 + $0x30] sm:$0xff]
    %v5201 = vld [vmem:[#allocation8 + $0x38] sm:$0xf]
    %v5202 = vld [vmem:[#allocation8 + $0x3c] sm:$0xff]
    %v5203 = vld [vmem:[#allocation8 + $0x44] sm:$0xf]
    %v5204 = vld [vmem:[#allocation8 + $0x48] sm:$0xff]
    %v5205 = vld [vmem:[#allocation8 + $0x50] sm:$0xf]
    %v5206 = vld [vmem:[#allocation8 + $0x54] sm:$0xff]
    %v5207 = vld [vmem:[#allocation8 + $0x5c] sm:$0xf]
    %v5208 = vld [vmem:[#allocation8 + $0x60] sm:$0xff]
    %v5209 = vld [vmem:[#allocation8 + $0x68] sm:$0xf]
    %v5210 = vld [vmem:[#allocation8 + $0x6c] sm:$0xff]
    %v5211 = vld [vmem:[#allocation8 + $0x74] sm:$0xf]
    %v5212 = vld [vmem:[#allocation8 + $0x78] sm:$0xff]
    %v5213 = vld [vmem:[#allocation8 + $0x80] sm:$0xf]
    %v5214 = vld [vmem:[#allocation8 + $0x84] sm:$0xff]
    %v5215 = vld [vmem:[#allocation8 + $0x8c] sm:$0xf]
    %v5216 = vld [vmem:[#allocation8 + $0x90] sm:$0xff]
    %v5217 = vld [vmem:[#allocation8 + $0x98] sm:$0xf]
    %v5218 = vld [vmem:[#allocation8 + $0x9c] sm:$0xff]
    %v5219 = vld [vmem:[#allocation8 + $0xa4] sm:$0xf]
    %v5220 = vld [vmem:[#allocation8 + $0xa8] sm:$0xff]
    %v5221 = vld [vmem:[#allocation8 + $0xb0] sm:$0xf]
    %v5222 = vld [vmem:[#allocation8 + $0xb4] sm:$0xff]
    %v5223 = vld [vmem:[#allocation8 + $0xbc] sm:$0xf]
    %v5256 = vunpack.c.l.b16 %v5192
    %v5257 = vunpack.c.h.b16 %v5192
    %v5258 = vunpack.c.l.b16 %v5193
    %v5259 = vunpack.c.l.b16 %v5194
    %v5260 = vunpack.c.h.b16 %v5194
    %v5261 = vunpack.c.l.b16 %v5195
    %v5262 = vunpack.c.l.b16 %v5196
    %v5263 = vunpack.c.h.b16 %v5196
    %v5264 = vunpack.c.l.b16 %v5197
    %v5265 = vunpack.c.l.b16 %v5198
    %v5266 = vunpack.c.h.b16 %v5198
    %v5267 = vunpack.c.l.b16 %v5199
    %v5268 = vunpack.c.l.b16 %v5200
    %v5269 = vunpack.c.h.b16 %v5200
    %v5270 = vunpack.c.l.b16 %v5201
    %v5271 = vunpack.c.l.b16 %v5202
    %v5272 = vunpack.c.h.b16 %v5202
    %v5273 = vunpack.c.l.b16 %v5203
    %v5274 = vunpack.c.l.b16 %v5204
    %v5275 = vunpack.c.h.b16 %v5204
    %v5276 = vunpack.c.l.b16 %v5205
    %v5277 = vunpack.c.l.b16 %v5206
    %v5278 = vunpack.c.h.b16 %v5206
    %v5279 = vunpack.c.l.b16 %v5207
    %v5280 = vunpack.c.l.b16 %v5208
    %v5281 = vunpack.c.h.b16 %v5208
    %v5282 = vunpack.c.l.b16 %v5209
    %v5283 = vunpack.c.l.b16 %v5210
    %v5284 = vunpack.c.h.b16 %v5210
    %v5285 = vunpack.c.l.b16 %v5211
    %v5286 = vunpack.c.l.b16 %v5212
    %v5287 = vunpack.c.h.b16 %v5212
    %v5288 = vunpack.c.l.b16 %v5213
    %v5289 = vunpack.c.l.b16 %v5214
    %v5290 = vunpack.c.h.b16 %v5214
    %v5291 = vunpack.c.l.b16 %v5215
    %v5292 = vunpack.c.l.b16 %v5216
    %v5293 = vunpack.c.h.b16 %v5216
    %v5294 = vunpack.c.l.b16 %v5217
    %v5295 = vunpack.c.l.b16 %v5218
    %v5296 = vunpack.c.h.b16 %v5218
    %v5297 = vunpack.c.l.b16 %v5219
    %v5298 = vunpack.c.l.b16 %v5220
    %v5299 = vunpack.c.h.b16 %v5220
    %v5300 = vunpack.c.l.b16 %v5221
    %v5301 = vunpack.c.l.b16 %v5222
    %v5302 = vunpack.c.h.b16 %v5222
    %v5303 = vunpack.c.l.b16 %v5223
    %v5304 = vpack.c.b16 %v5259, %v5256
    %v5305 = vpack.c.b16 %v5260, %v5257
    %v5306 = vpack.c.b16 %v5261, %v5258
    %v5307 = vpack.c.b16 %v5265, %v5262
    %v5308 = vpack.c.b16 %v5266, %v5263
    %v5309 = vpack.c.b16 %v5267, %v5264
    %v5310 = vpack.c.b16 %v5271, %v5268
    %v5311 = vpack.c.b16 %v5272, %v5269
    %v5312 = vpack.c.b16 %v5273, %v5270
    %v5313 = vpack.c.b16 %v5277, %v5274
    %v5314 = vpack.c.b16 %v5278, %v5275
    %v5315 = vpack.c.b16 %v5279, %v5276
    %v5316 = vpack.c.b16 %v5283, %v5280
    %v5317 = vpack.c.b16 %v5284, %v5281
    %v5318 = vpack.c.b16 %v5285, %v5282
    %v5319 = vpack.c.b16 %v5289, %v5286
    %v5320 = vpack.c.b16 %v5290, %v5287
    %v5321 = vpack.c.b16 %v5291, %v5288
    %v5322 = vpack.c.b16 %v5295, %v5292
    %v5323 = vpack.c.b16 %v5296, %v5293
    %v5324 = vpack.c.b16 %v5297, %v5294
    %v5325 = vpack.c.b16 %v5301, %v5298
    %v5326 = vpack.c.b16 %v5302, %v5299
    %v5327 = vpack.c.b16 %v5303, %v5300
    %5352 = vmatprep.subr.bf16.mxu0 %v5305
    %5353 = vmatpush1.bf16.msra.mxu0 %v5304
    %5354 = vmatprep.subr.bf16.mxu0 %v5308
    %5355 = vmatpush1.bf16.msra.mxu0 %v5307
    %5356 = vmatprep.subr.bf16.mxu0 %v5311
    %5357 = vmatpush1.bf16.msra.mxu0 %v5310
    %5358 = vmatprep.subr.bf16.mxu0 %v5314
    %5359 = vmatpush1.bf16.msra.mxu0 %v5313
    %5360 = vmatprep.subr.bf16.mxu0 %v5317
    %5361 = vmatpush1.bf16.msra.mxu0 %v5316
    %5362 = vmatprep.subr.bf16.mxu0 %v5320
    %5363 = vmatpush1.bf16.msra.mxu0 %v5319
    %5364 = vmatprep.subr.bf16.mxu0 %v5323
    %5365 = vmatpush1.bf16.msra.mxu0 %v5322
    %5366 = vmatprep.subr.bf16.mxu0 %v5326
    %5367 = vmatpush1.bf16.msra.mxu0 %v5325
    %5368 = vmatprep.subr.bf16.mxu0 0
    %5369 = vmatpush1.bf16.msra.mxu0 0
    %5370 = vmatprep.subr.bf16.mxu0 0
    %5371 = vmatpush1.bf16.msra.mxu0 0
    %5372 = vmatprep.subr.bf16.mxu0 0
    %5373 = vmatpush1.bf16.msra.mxu0 0
    %5374 = vmatprep.subr.bf16.mxu0 0
    %5375 = vmatpush1.bf16.msra.mxu0 0
    %5376 = vmatprep.subr.bf16.mxu0 0
    %5377 = vmatpush1.bf16.msra.mxu0 0
    %5378 = vmatprep.subr.bf16.mxu0 0
    %5379 = vmatpush1.bf16.msra.mxu0 0
    %5380 = vmatprep.subr.bf16.mxu0 0
    %5381 = vmatpush1.bf16.msra.mxu0 0
    %5382 = vmatprep.subr.bf16.mxu0 0
    %5383 = vmatpush1.bf16.msra.mxu0 0
    %5384 = vmatprep.mubr.bf16.mxu0 0
    %5385 = vmatmul.mubr.bf16.gmra.mrb[0].mxu0 %v5181
    %v5386 = vpop.f32.mrb[0].mxu0
    %v5387 = vadd.f32 0.0, %v5386
    %v5388 = vpop.f32.mrb[0].mxu0
    %v5389 = vadd.f32 0.0, %v5388
    %v5390 = vpop.f32.mrb[0].mxu0
    %v5391 = vadd.f32 0.0, %v5390
    %v5392 = vpop.f32.mrb[0].mxu0
    %v5393 = vadd.f32 0.0, %v5392
    %5394 = vdwg.mxu0
    %5395 = vmatprep.subr.bf16.mxu0 0
    %5396 = vmatpush1.bf16.msra.mxu0 %v5306
    %5397 = vmatprep.subr.bf16.mxu0 0
    %5398 = vmatpush1.bf16.msra.mxu0 %v5309
    %5399 = vmatprep.subr.bf16.mxu0 0
    %5400 = vmatpush1.bf16.msra.mxu0 %v5312
    %5401 = vmatprep.subr.bf16.mxu0 0
    %5402 = vmatpush1.bf16.msra.mxu0 %v5315
    %5403 = vmatprep.subr.bf16.mxu0 0
    %5404 = vmatpush1.bf16.msra.mxu0 %v5318
    %5405 = vmatprep.subr.bf16.mxu0 0
    %5406 = vmatpush1.bf16.msra.mxu0 %v5321
    %5407 = vmatprep.subr.bf16.mxu0 0
    %5408 = vmatpush1.bf16.msra.mxu0 %v5324
    %5409 = vmatprep.subr.bf16.mxu0 0
    %5410 = vmatpush1.bf16.msra.mxu0 %v5327
    %5411 = vmatprep.subr.bf16.mxu0 0
    %5412 = vmatpush1.bf16.msra.mxu0 0
    %5413 = vmatprep.subr.bf16.mxu0 0
    %5414 = vmatpush1.bf16.msra.mxu0 0
    %5415 = vmatprep.subr.bf16.mxu0 0
    %5416 = vmatpush1.bf16.msra.mxu0 0
    %5417 = vmatprep.subr.bf16.mxu0 0
    %5418 = vmatpush1.bf16.msra.mxu0 0
    %5419 = vmatprep.subr.bf16.mxu0 0
    %5420 = vmatpush1.bf16.msra.mxu0 0
    %5421 = vmatprep.subr.bf16.mxu0 0
    %5422 = vmatpush1.bf16.msra.mxu0 0
    %5423 = vmatprep.subr.bf16.mxu0 0
    %5424 = vmatpush1.bf16.msra.mxu0 0
    %5425 = vmatprep.subr.bf16.mxu0 0
    %5426 = vmatpush1.bf16.msra.mxu0 0
    %5427 = vmatprep.mubr.bf16.mxu0 0
    %5428 = vmatmul.mubr.bf16.gmra.mrb[0].mxu0 %v5181
    %v5429 = vpop.f32.mrb[0].mxu0
    %v5430 = vadd.f32 0.0, %v5429
    %v5431 = vpop.f32.mrb[0].mxu0
    %v5432 = vpop.f32.mrb[0].mxu0
    %v5433 = vadd.f32 0.0, %v5432
    %v5434 = vpop.f32.mrb[0].mxu0
    %5435 = vdwg.mxu0
    %v5436 = vadd.f32 %v559, %v5387
    %v5437 = vadd.f32 %v563, %v5391
    %v5438 = vxor.u32 %v5436, 2147483648
    %v5439 = vxor.u32 %v5437, 2147483648
    %v5440 = vmul.f32 %v5438, 1.442695
    %v5441 = vpow.pop %v5440
    %v5442 = vmul.f32 %v5439, 1.442695
    %v5443 = vpow.pop %v5442
    %v5444 = vadd.f32 %v5441, 1.0
    %v5445 = vadd.f32 %v5443, 1.0
    %v5446 = vrcp.pop %v5444
    %v5447 = vmul.f32 1.0, %v5446
    %v5448 = vrcp.pop %v5445
    %v5449 = vmul.f32 1.0, %v5448
    %v5450 = vadd.f32 %v561, %v5389
    %v5451 = vadd.f32 %v565, %v5393
    %v5452 = vxor.u32 %v5450, 2147483648
    %v5453 = vxor.u32 %v5451, 2147483648
    %v5454 = vmul.f32 %v5452, 1.442695
    %v5455 = vpow.pop %v5454
    %v5456 = vmul.f32 %v5453, 1.442695
    %v5457 = vpow.pop %v5456
    %v5458 = vadd.f32 %v5455, 1.0
    %v5459 = vadd.f32 %v5457, 1.0
    %v5460 = vrcp.pop %v5458
    %v5461 = vmul.f32 1.0, %v5460
    %v5462 = vrcp.pop %v5459
    %v5463 = vmul.f32 1.0, %v5462
    %v5464 = vadd.f32 %v5430, %v1008
    %v5465 = vadd.f32 %v5433, %v1008
    %v5466 = vmul.f32 %v5447, %v5464
    %v5467 = vmul.f32 %v5449, %v5465
    %v5468 = vadd.f32 %v722, %v5466
    %v5469 = vadd.f32 %v725, %v5467
    %v5470 = vtanh.pop %v5468
    %v5471 = vtanh.pop %v5469
    %v5472 = vsub.f32 %v5179, %v5470
    %v5473 = vsub.f32 %v5180, %v5471
    %v5474 = vmul.f32 %v5461, %v5472
    %v5475 = vmul.f32 %v5463, %v5473
    %v5476 = vadd.f32 %v5470, %v5474
    %v5477 = vadd.f32 %v5471, %v5475
    %v5478 = vpack.c.bf16 %v5477, %v5476
    %v5480 = vunpack.c.l.b16 %v5478
    %v5481 = vunpack.c.h.b16 %v5478
    %v5482 = vpack.c.b16 %v5480, %v5480
    %v5483 = vpack.c.b16 %v5481, %v5481
    %s5486 = scalar_lea.vmem [#allocation9], 120
    %5487 = vst [vmem:[%s5486] sm:$0xf] %v5482
    %5488 = vst [vmem:[%s5486 + $0x4] sm:$0xf] %v5483
    %5489 = vst [vmem:[#allocation2] sm:$0xff] %v5476
    %5490 = vst [vmem:[#allocation2 + $0x8] sm:$0xff] %v5477
    // Predicated region
    $region38: #{tpu_custom_call.1} parent=1 // pred_check
      _
    $region39: #{tpu_custom_call.1} parent=1 // pred_check_branch
      %5492 = sbr.rel (0) target = $region41
    $region40: #{tpu_custom_call.1} parent=1 // pred_region
      %s5494 = ssub.s32 2048, 2048
      %5495 = vsyncadd [#allocation5], %s5494
      %s5496 = sshll.u32 [#allocation9], 4
      %s5497 = int_to_ptr.vmem [resolvable:$true] %s5496
      %5502 = dma.vmem_to_hbm [thread:$0]  %s5497, 2048, %s5, [#allocation5], 64, 64, 4
    $region41: #{tpu_custom_call.1} parent=1 // pred_fallthru
      _
    // Predicated region
    $region42: #{tpu_custom_call.1} parent=1 // pred_check
      _
    $region43: #{tpu_custom_call.1} parent=1 // pred_check_branch
      %5504 = sbr.rel (0) target = $region45
    $region44: #{tpu_custom_call.1} parent=1 // pred_region
      %5505 = dma.done [#allocation5], 2048
    $region45: #{tpu_custom_call.1} parent=1 // pred_fallthru
      _
    %5506 = vsyncpa [#allocation4], 1
    %5507 = vsyncpa [#allocation7], 1
    %5508 = vsyncpa [#allocation5], 1

</llo_original>
